<compile_context>
chip_gen: v7x
topology: tpu7x:2x2x1
jax: 0.10.0
libtpu: 0.0.40
codegen_flags: <defaults>
</compile_context>

<pallas_src>
import functools

import jax
import jax.numpy as jnp
from jax import lax
from jax.experimental import pallas as pl
from jax.experimental.pallas import tpu as pltpu


# TODO(synk): ConvBlock is not included in the reference file; implemented as the
# UNIVERSE conditioner block (PReLU -> dilated conv (k=3, 'same') -> residual,
# dilations 1/2/4); only its first return value is used.
_DILATIONS = (1, 2, 4)
_HALO = 1 + sum(_DILATIONS)          # receptive-field radius of conv0 + conv_block


def _round_up(x, m):
    return ((x + m - 1) // m) * m


# ----------------------------- kernel helpers -------------------------------

def _shift_time(x, s):
    """z[:, t] = x[:, t + s] along the lane (time) axis, zero outside; s static."""
    if s == 0:
        return x
    rows, n = x.shape
    pad = jnp.zeros((rows, abs(s)), x.dtype)
    if s > 0:
        return jnp.concatenate([x[:, s:], pad], axis=1)
    return jnp.concatenate([pad, x[:, :n + s]], axis=1)


def _conv3(xb, ones_row, w, dilation):
    """3-tap 'same' conv along time as ONE matmul, bias folded via the ones row.

    xb:       (Cin, T) bf16 (already masked / cast -- data movement only in bf16).
    ones_row: (1, T)   bf16.
    w:        (Cout, 3*Cin + 1) bf16; tap-k weights in column block k, bias last.
    Returns   (Cout, T) f32.
    """
    stacked = jnp.concatenate(
        [_shift_time(xb, -dilation), xb, _shift_time(xb, dilation), ones_row],
        axis=0)
    return jnp.dot(w, stacked, preferred_element_type=jnp.float32)


def _frames_from_signal(sig_ref, col0, width, ov):
    """STFT frames (n_fft, width) bf16 from the (1, ds, ncol) strided signal view."""
    ct = sig_ref[0, :, pl.ds(col0, width + ov - 1)].astype(jnp.bfloat16)
    return jnp.concatenate([ct[:, i:i + width] for i in range(ov)], axis=0)


# --------------------------- energy pre-pass kernel ---------------------------

def _mel_energy_kernel(sig_ref, wdft_ref, fb_ref, energy_ref, *,
                       F_valid, TF, halo, ov):
    """Pass 1 of the two-pass norm: per-batch sum over (mels, frames) of mel^2."""
    f = pl.program_id(1)
    nfp = wdft_ref.shape[0] // 2

    @pl.when(f == 0)
    def _():
        energy_ref[...] = jnp.zeros_like(energy_ref)

    col0 = f * TF + halo
    if TF % 8 == 0 and halo % 8 == 0:
        col0 = pl.multiple_of(col0, 8)
    ft = _frames_from_signal(sig_ref, col0, TF, ov)                     # (n_fft, TF)
    spec = jnp.dot(wdft_ref[...], ft, preferred_element_type=jnp.float32)
    re, im = spec[:nfp], spec[nfp:]
    power = re * re + im * im                                           # f32
    mel = jnp.dot(fb_ref[...], power, preferred_element_type=jnp.float32)
    gidx = f * TF + lax.broadcasted_iota(jnp.int32, (1, TF), 1)
    mel = jnp.where(gidx < F_valid, mel, 0.0)        # drop tile frames beyond F
    energy_ref[...] += jnp.sum(mel * mel)


# --------------------------------- main kernel --------------------------------

def _mel_adapter_kernel(inv_ref, sig_ref, wdft_ref, fb_ref, w0_ref, wblk_ref,
                        alpha_ref, out_ref, *, F_valid, halo, ov, fused_norm):
    f = pl.program_id(1)
    C, TF = out_ref.shape[1], out_ref.shape[2]
    nfp = wdft_ref.shape[0] // 2
    TW = TF + 2 * halo

    # ---- frames for this tile (+ conv halo), sample-offset-major ------------
    col0 = f * TF
    if TF % 128 == 0:
        col0 = pl.multiple_of(col0, 128)
    ft = _frames_from_signal(sig_ref, col0, TW, ov)                     # (n_fft, TW) bf16

    # ---- windowed real DFT: one fused matmul with rows [cos*w ; sin*w] ------
    spec = jnp.dot(wdft_ref[...], ft, preferred_element_type=jnp.float32)
    re, im = spec[:nfp], spec[nfp:]
    power = re * re + im * im                                           # f32 (VPU)

    # ---- mel filterbank kept in f32 (|X|^2 dynamic range; tiny matmul) ------
    mel = jnp.dot(fb_ref[...], power, preferred_element_type=jnp.float32)  # (Mp, TW)

    # ---- zero frames outside [0, F) so the halo matches global zero padding -
    valid = None
    if halo > 0:
        gidx = f * TF - halo + lax.broadcasted_iota(jnp.int32, (1, TW), 1)
        valid = jnp.logical_and(gidx >= 0, gidx < F_valid)
        mel = jnp.where(valid, mel, 0.0)

    # ---- normalization:  x / clamp(sqrt(mean_F(sum_mels(x^2))), 1e-5) -------
    if fused_norm:
        energy = jnp.sum(mel * mel)
        inv = 1.0 / jnp.maximum(jnp.sqrt(energy * (1.0 / F_valid)), 1e-5)
    else:
        inv = inv_ref[0]                             # (1, 1) precomputed 1/norm
    mel_b = (mel * inv).astype(jnp.bfloat16)         # cast once, before stacking

    ones_row = jnp.ones((1, TW), jnp.bfloat16)       # bias row for the fused convs

    # ---- Conv1d(n_mels -> C, k=3, 'same'): one fused matmul, bias folded ----
    y = _conv3(mel_b, ones_row, w0_ref[...], 1)                         # (C, TW) f32

    # ---- ConvBlock: PReLU -> dilated conv -> residual (dilations 1/2/4) -----
    for i, d in enumerate(_DILATIONS):
        a = alpha_ref[i]                                                # (C, 1)
        h = jnp.where(y >= 0.0, y, a * y)                               # PReLU (f32)
        if valid is not None:
            h = jnp.where(valid, h, 0.0)            # keep zero padding at edges
        y = y + _conv3(h.astype(jnp.bfloat16), ones_row, wblk_ref[i], d)

    out_ref[0] = y[:, halo:halo + TF].astype(out_ref.dtype)


# ------------------------------ glue / wrapper -------------------------------

def _mel_filterbank(n_freqs, n_mels, sample_rate, f_min=0.0, f_max=None):
    """torchaudio melscale_fbanks (HTK scale, norm=None) -> (n_freqs, n_mels)."""
    if f_max is None:
        f_max = sample_rate / 2.0

    def hz_to_mel(f):
        return 2595.0 * jnp.log10(1.0 + f / 700.0)

    def mel_to_hz(m):
        return 700.0 * (10.0 ** (m / 2595.0) - 1.0)

    all_freqs = jnp.linspace(0.0, sample_rate / 2.0, n_freqs)
    m_pts = jnp.linspace(hz_to_mel(jnp.float32(f_min)),
                         hz_to_mel(jnp.float32(f_max)), n_mels + 2)
    f_pts = mel_to_hz(m_pts)
    f_diff = f_pts[1:] - f_pts[:-1]
    slopes = f_pts[None, :] - all_freqs[:, None]
    down = (-slopes[:, :-2]) / f_diff[:-1]
    up = slopes[:, 2:] / f_diff[1:]
    return jnp.maximum(0.0, jnp.minimum(down, up)).astype(jnp.float32)


class MelAdapterPallas:
    def __init__(self, n_mels, output_channels, ds_factor, oversample=2,
                 sample_rate=24000, out_dtype=jnp.float32,
                 frame_tile=1024, max_fused_frames=4096, key=None):
        self.n_mels = n_mels
        self.C = output_channels
        self.ds = ds_factor
        self.ov = oversample
        self.n_fft = oversample * ds_factor
        self.n_freq = self.n_fft // 2 + 1
        self.n_freq_p = _round_up(self.n_freq, 8)       # aligned re/im split
        self.n_mels_p = _round_up(n_mels, 8)            # aligned conv stacking
        self.out_dtype = jax.dtypes.canonicalize_dtype(out_dtype)
        self.frame_tile = max(128, _round_up(frame_tile, 128))   # lane-dense tiles
        self.max_fused_frames = max_fused_frames
        pad_tot = self.n_fft - ds_factor
        self.pad_left, self.pad_right = pad_tot // 2, pad_tot - pad_tot // 2
        self._single_buffer = True    # pl.Buffered(1) on grid-invariant operands

        # ---- fixed transforms: fused hann*[cos;sin] DFT (bf16), mel fb (f32) --
        n = jnp.arange(self.n_fft, dtype=jnp.float32)
        win = 0.5 - 0.5 * jnp.cos(2.0 * jnp.pi * n / self.n_fft)   # periodic hann
        k = jnp.arange(self.n_freq, dtype=jnp.float32)
        ang = 2.0 * jnp.pi * n[:, None] * k[None, :] / self.n_fft  # (n_fft, n_freq)
        cosw = (jnp.cos(ang) * win[:, None]).T                     # (n_freq, n_fft)
        sinw = (jnp.sin(ang) * win[:, None]).T
        wdft = jnp.zeros((2 * self.n_freq_p, self.n_fft), jnp.float32)
        wdft = wdft.at[:self.n_freq].set(cosw)
        wdft = wdft.at[self.n_freq_p:self.n_freq_p + self.n_freq].set(sinw)
        self.wdft = wdft.astype(jnp.bfloat16)

        fb = _mel_filterbank(self.n_freq, n_mels, sample_rate)     # (n_freq, M)
        fbT = jnp.zeros((self.n_mels_p, self.n_freq_p), jnp.float32)
        fbT = fbT.at[:n_mels, :self.n_freq].set(fb.T)
        self.fbT = fbT                                             # f32 on purpose

        # ---- learned params, deterministic synthetic init, taps+bias pre-fused
        key = jax.random.PRNGKey(0) if key is None else key
        k0, k1, k2, k3 = jax.random.split(key, 4)
        C, M, Mp = output_channels, n_mels, self.n_mels_p

        w0 = 0.1 * jax.random.normal(k0, (C, M, 3), jnp.float32)   # Conv1d(M->C,k=3)
        b0 = 0.01 * jax.random.normal(k1, (C,), jnp.float32)
        w0f = jnp.zeros((C, 3 * Mp + 1), jnp.float32)
        for t in range(3):
            w0f = w0f.at[:, t * Mp:t * Mp + M].set(w0[:, :, t])
        w0f = w0f.at[:, 3 * Mp].set(b0)                            # bias column
        self.w0 = w0f.astype(jnp.bfloat16)

        wb = 0.1 * jax.random.normal(k2, (3, C, C, 3), jnp.float32)  # dilated convs
        bb = 0.01 * jax.random.normal(k3, (3, C), jnp.float32)
        wbf = jnp.zeros((3, C, 3 * C + 1), jnp.float32)
        for t in range(3):
            wbf = wbf.at[:, :, t * C:(t + 1) * C].set(wb[:, :, :, t])
        wbf = wbf.at[:, :, 3 * C].set(bb)                          # bias column
        self.wblk = wbf.astype(jnp.bfloat16)
        self.alpha = jnp.full((3, C, 1), 0.25, jnp.float32)        # PReLU init

    # -------------------------------------------------------------------------

    def _prep_signal(self, x):
        # (B, 1, T) -> strided (B, ds, ncol) view of the padded signal; column c
        # holds samples [c*ds, (c+1)*ds), frame f = columns f .. f+ov-1 (assembled
        # in VMEM inside the kernel -- no framing gather, 1x HBM traffic).
        # Padding matches the reference (center=False, explicit pad_left/right +
        # tail pad to a whole hop); tail frames stay in the norm, as in PyTorch.
        # TODO(synk): the pad+reshape+transpose is wrapper-side layout prep; in a
        # full model the upstream producer of x should emit this layout directly.
        x = jnp.squeeze(x, axis=1).astype(jnp.float32)
        B, T = x.shape
        tail = (self.ds - T % self.ds) % self.ds
        F = (T + tail) // self.ds
        if F <= self.max_fused_frames:
            nft, TF, halo = 1, F, 0                 # single tile, norm fused in-kernel
        else:
            TF = self.frame_tile
            nft = -(-F // TF)
            halo = _HALO                            # conv receptive-field halo
        ncol = nft * TF + 2 * halo + self.ov - 1
        left = self.pad_left + halo * self.ds
        right = ncol * self.ds - left - T
        xp = jnp.pad(x, ((0, 0), (left, right)))
        sig = xp.reshape(B, ncol, self.ds).transpose(0, 2, 1)       # (B, ds, ncol)
        return sig, F, TF, nft, halo

    @staticmethod
    def _vmem_limit_bytes():
        cap = 128 << 20
        try:
            cap = int(pltpu.get_tpu_info().vmem_capacity_bytes)     # 64 MiB on v7x
        except Exception:
            pass
        # ~25% headroom for Mosaic internal scratch / pipeline buffers
        return max(32 << 20, (cap * 3) // 4)

    # -------------------------------------------------------------------------

    def __call__(self, x):
        try:
            return self._forward(x, self._single_buffer)
        except Exception:
            if not self._single_buffer:
                raise
            # fallback if single-buffered (pl.Buffered(1)) specs are rejected
            self._single_buffer = False
            return self._forward(x, False)

    @functools.partial(jax.jit, static_argnums=(0, 2))
    def _forward(self, x, single_buffer):
        sig, F, TF, nft, halo = self._prep_signal(x)
        fused = (halo == 0)
        B, _, ncol = sig.shape
        C, ds, ov, nfft = self.C, self.ds, self.ov, self.n_fft
        nfp, Mp = self.n_freq_p, self.n_mels_p
        vmem_limit = self._vmem_limit_bytes()

        def const_spec(shape):
            # grid-invariant operand: single-buffer it (halves its VMEM footprint)
            if single_buffer:
                return pl.BlockSpec(shape, lambda *_: (0,) * len(shape),
                                    pipeline_mode=pl.Buffered(1))
            return pl.BlockSpec(shape, lambda *_: (0,) * len(shape))

        sig_spec = pl.BlockSpec((1, ds, ncol), lambda b, f: (b, 0, 0))

        if fused:
            inv = jnp.zeros((B, 1, 1), jnp.float32)   # unused; norm fused in-kernel
        else:
            # ---- pass 1: per-batch energy (two-pass norm for the tiled F axis)
            energy = pl.pallas_call(
                functools.partial(_mel_energy_kernel, F_valid=F, TF=TF,
                                  halo=halo, ov=ov),
                out_shape=jax.ShapeDtypeStruct((B, 1, 1), jnp.float32),
                grid_spec=pltpu.PrefetchScalarGridSpec(
                    num_scalar_prefetch=0,
                    grid=(B, nft),
                    in_specs=[sig_spec,
                              const_spec((2 * nfp, nfft)),
                              const_spec((Mp, nfp))],
                    out_specs=pl.BlockSpec((1, 1, 1), lambda b, f: (b, 0, 0)),
                ),
                compiler_params=pltpu.CompilerParams(
                    dimension_semantics=("parallel", "arbitrary"),
                    vmem_limit_bytes=vmem_limit),
            )(sig, self.wdft, self.fbT)
            norm = jnp.sqrt(energy * (1.0 / F))
            inv = 1.0 / jnp.maximum(norm, 1e-5)                      # (B, 1, 1)

        TW = TF + 2 * halo
        F_out = nft * TF
        mm_flops = 2 * TW * ((2 * nfp) * nfft + Mp * nfp
                             + C * (3 * Mp + 1) + 3 * C * (3 * C + 1))
        cost = pl.CostEstimate(
            flops=int(B * nft * mm_flops),
            transcendentals=int(B),
            bytes_accessed=int(sig.size * 4
                               + B * C * F_out * self.out_dtype.itemsize
                               + self.wdft.size * 2 + self.fbT.size * 4
                               + self.w0.size * 2 + self.wblk.size * 2
                               + self.alpha.size * 4))

        out = pl.pallas_call(
            functools.partial(_mel_adapter_kernel, F_valid=F, halo=halo, ov=ov,
                              fused_norm=fused),
            out_shape=jax.ShapeDtypeStruct((B, C, F_out), self.out_dtype),
            grid_spec=pltpu.PrefetchScalarGridSpec(
                num_scalar_prefetch=0,
                grid=(B, nft),
                in_specs=[
                    pl.BlockSpec((1, 1, 1), lambda b, f: (b, 0, 0)),   # 1/norm
                    sig_spec,                                          # signal view
                    const_spec((2 * nfp, nfft)),                       # win*DFT (bf16)
                    const_spec((Mp, nfp)),                             # mel fb (f32)
                    const_spec((C, 3 * Mp + 1)),                       # conv0 w+b
                    const_spec((3, C, 3 * C + 1)),                     # block w+b
                    const_spec((3, C, 1)),                             # PReLU alpha
                ],
                out_specs=pl.BlockSpec((1, C, TF), lambda b, f: (b, 0, f)),
            ),
            compiler_params=pltpu.CompilerParams(
                dimension_semantics=("parallel", "parallel"),
                vmem_limit_bytes=vmem_limit),
            cost_estimate=cost,
        )(inv, sig, self.wdft, self.fbT, self.w0, self.wblk, self.alpha)

        if F_out != F:
            # TODO(synk): ragged last frame tile is cropped wrapper-side; use Pallas
            # partial edge blocks to avoid this extra output copy.
            out = out[:, :, :F]
        return out   # (B, C, F) == PyTorch Conv1d NCL layout


# --------------------------------- main --------------------------------------

if __name__ == "__main__":
    B, T = 2, 2048
    n_mels, output_channels, ds_factor = 10, 32, 8

    key = jax.random.PRNGKey(0)
    x = jax.random.normal(key, (B, 1, T), jnp.float32)      # (batch, 1, samples)

    # default config -> single-tile path (energy norm fused in-kernel)
    adapter = MelAdapterPallas(n_mels, output_channels, ds_factor, oversample=2)
    y = jax.block_until_ready(adapter(x))

    # same weights, tiny frame tiles -> exercises the F-tiled two-pass-norm path
    adapter_tiled = MelAdapterPallas(n_mels, output_channels, ds_factor,
                                     oversample=2, frame_tile=128,
                                     max_fused_frames=128)
    y_tiled = jax.block_until_ready(adapter_tiled(x))

    F = T // ds_factor
    assert y.shape == (B, output_channels, F), y.shape
    assert y_tiled.shape == (B, output_channels, F), y_tiled.shape
    assert bool(jnp.all(jnp.isfinite(y)))
    assert bool(jnp.all(jnp.isfinite(y_tiled)))
    assert bool(jnp.allclose(y, y_tiled, rtol=1e-2, atol=1e-2)), (
        float(jnp.max(jnp.abs(y - y_tiled))))
    print("KERNEL_OK")
</pallas_src>

<mosaic_0001>
module attributes {stable_mosaic.version = 11 : i64} {
  func.func @_mel_adapter_kernel(%arg0: i32, %arg1: i32, %arg2: memref<1x1x1xf32, #tpu.memory_space<vmem>>, %arg3: memref<1x8x257xf32, #tpu.memory_space<vmem>>, %arg4: memref<32x16xbf16, #tpu.memory_space<vmem>>, %arg5: memref<16x16xf32, #tpu.memory_space<vmem>>, %arg6: memref<32x49xbf16, #tpu.memory_space<vmem>>, %arg7: memref<3x32x97xbf16, #tpu.memory_space<vmem>>, %arg8: memref<3x32x1xf32, #tpu.memory_space<vmem>>, %arg9: memref<1x32x256xf32, #tpu.memory_space<vmem>>) attributes {dimension_semantics = [#tpu.dimension_semantics<parallel>, #tpu.dimension_semantics<parallel>], iteration_bounds = array<i64: 2, 1>, scalar_prefetch = 0 : i64, scratch_operands = 0 : i64, tpu.core_type = #tpu.core_type<tc>, window_params = [{transform_indices = @transform_0, window_bounds = array<i64: 1, 1, 1>}, {transform_indices = @transform_1, window_bounds = array<i64: 1, 8, 257>}, {pipeline_mode = #tpu.pipeline_mode<synchronous>, transform_indices = @transform_2, window_bounds = array<i64: 32, 16>}, {pipeline_mode = #tpu.pipeline_mode<synchronous>, transform_indices = @transform_3, window_bounds = array<i64: 16, 16>}, {pipeline_mode = #tpu.pipeline_mode<synchronous>, transform_indices = @transform_4, window_bounds = array<i64: 32, 49>}, {pipeline_mode = #tpu.pipeline_mode<synchronous>, transform_indices = @transform_5, window_bounds = array<i64: 3, 32, 97>}, {pipeline_mode = #tpu.pipeline_mode<synchronous>, transform_indices = @transform_6, window_bounds = array<i64: 3, 32, 1>}, {transform_indices = @transform_7, window_bounds = array<i64: 1, 32, 256>}]} {
    %c256_i32 = arith.constant 256 : i32
    %0 = arith.muli %arg1, %c256_i32 : i32
    %1 = tpu.assume_multiple %0, 128 : i32
    %c0 = arith.constant 0 : index
    %c0_0 = arith.constant 0 : index
    %2 = arith.index_cast %1 : i32 to index
    %3 = vector.load %arg3[%c0, %c0_0, %2] : memref<1x8x257xf32, #tpu.memory_space<vmem>>, vector<1x8x257xf32>
    %4 = vector.shape_cast %3 : vector<1x8x257xf32> to vector<8x257xf32>
    %5 = arith.truncf %4 : vector<8x257xf32> to vector<8x257xbf16>
    %6 = vector.extract_strided_slice %5 {offsets = [0, 0], sizes = [8, 256], strides = [1, 1]} : vector<8x257xbf16> to vector<8x256xbf16>
    %7 = vector.extract_strided_slice %5 {offsets = [0, 1], sizes = [8, 256], strides = [1, 1]} : vector<8x257xbf16> to vector<8x256xbf16>
    %8 = tpu.concatenate %6, %7 in 0 : vector<8x256xbf16>, vector<8x256xbf16> -> vector<16x256xbf16>
    %c0_1 = arith.constant 0 : index
    %c0_2 = arith.constant 0 : index
    %9 = vector.load %arg4[%c0_1, %c0_2] : memref<32x16xbf16, #tpu.memory_space<vmem>>, vector<32x16xbf16>
    %cst = arith.constant dense<0.000000e+00> : vector<32x256xf32>
    %10 = tpu.matmul %9, %8, %cst {dimension_numbers = #tpu.dot_dimension_numbers<[1], [0], [0], [1], [0, 0, 1, 1], [], []>} : vector<32x16xbf16>, vector<16x256xbf16>, vector<32x256xf32> -> vector<32x256xf32>
    %11 = vector.extract_strided_slice %10 {offsets = [0, 0], sizes = [16, 256], strides = [1, 1]} : vector<32x256xf32> to vector<16x256xf32>
    %12 = vector.extract_strided_slice %10 {offsets = [16, 0], sizes = [16, 256], strides = [1, 1]} : vector<32x256xf32> to vector<16x256xf32>
    %13 = arith.mulf %11, %11 : vector<16x256xf32>
    %14 = arith.mulf %12, %12 : vector<16x256xf32>
    %15 = arith.addf %13, %14 : vector<16x256xf32>
    %c0_3 = arith.constant 0 : index
    %c0_4 = arith.constant 0 : index
    %16 = vector.load %arg5[%c0_3, %c0_4] : memref<16x16xf32, #tpu.memory_space<vmem>>, vector<16x16xf32>
    %cst_5 = arith.constant dense<0.000000e+00> : vector<16x256xf32>
    %17 = tpu.matmul %16, %15, %cst_5 {dimension_numbers = #tpu.dot_dimension_numbers<[1], [0], [0], [1], [0, 0, 1, 1], [], []>} : vector<16x16xf32>, vector<16x256xf32>, vector<16x256xf32> -> vector<16x256xf32>
    %18 = arith.mulf %17, %17 : vector<16x256xf32>
    %19 = vector.shape_cast %18 : vector<16x256xf32> to vector<1x16x256xf32>
    %cst_6 = arith.constant dense<0.000000e+00> : vector<1xf32>
    %20 = vector.multi_reduction <add>, %19, %cst_6 [1, 2] : vector<1x16x256xf32> to vector<1xf32>
    %21 = vector.shape_cast %20 : vector<1xf32> to vector<1x1x1xf32>
    %22 = vector.extract %21[0, 0, 0] : f32 from vector<1x1x1xf32>
    %cst_7 = arith.constant 3.906250e-03 : f32
    %23 = arith.mulf %22, %cst_7 : f32
    %24 = math.sqrt %23 : f32
    %cst_8 = arith.constant 9.99999974E-6 : f32
    %25 = arith.maximumf %24, %cst_8 : f32
    %cst_9 = arith.constant 1.000000e+00 : f32
    %26 = arith.divf %cst_9, %25 : f32
    %27 = vector.broadcast %26 : f32 to vector<16x256xf32>
    %28 = arith.mulf %17, %27 : vector<16x256xf32>
    %29 = arith.truncf %28 : vector<16x256xf32> to vector<16x256xbf16>
    %cst_10 = arith.constant 1.000000e+00 : bf16
    %30 = vector.broadcast %cst_10 : bf16 to vector<1x256xbf16>
    %c0_11 = arith.constant 0 : index
    %c0_12 = arith.constant 0 : index
    %31 = vector.load %arg6[%c0_11, %c0_12] : memref<32x49xbf16, #tpu.memory_space<vmem>>, vector<32x49xbf16>
    %cst_13 = arith.constant 0.000000e+00 : bf16
    %32 = vector.broadcast %cst_13 : bf16 to vector<16x1xbf16>
    %33 = vector.extract_strided_slice %29 {offsets = [0, 0], sizes = [16, 255], strides = [1, 1]} : vector<16x256xbf16> to vector<16x255xbf16>
    %34 = tpu.concatenate %32, %33 in 1 : vector<16x1xbf16>, vector<16x255xbf16> -> vector<16x256xbf16>
    %cst_14 = arith.constant 0.000000e+00 : bf16
    %35 = vector.broadcast %cst_14 : bf16 to vector<16x1xbf16>
    %36 = vector.extract_strided_slice %29 {offsets = [0, 1], sizes = [16, 255], strides = [1, 1]} : vector<16x256xbf16> to vector<16x255xbf16>
    %37 = tpu.concatenate %36, %35 in 1 : vector<16x255xbf16>, vector<16x1xbf16> -> vector<16x256xbf16>
    %38 = tpu.concatenate %34, %29, %37, %30 in 0 : vector<16x256xbf16>, vector<16x256xbf16>, vector<16x256xbf16>, vector<1x256xbf16> -> vector<49x256xbf16>
    %cst_15 = arith.constant dense<0.000000e+00> : vector<32x256xf32>
    %39 = tpu.matmul %31, %38, %cst_15 {dimension_numbers = #tpu.dot_dimension_numbers<[1], [0], [0], [1], [0, 0, 1, 1], [], []>} : vector<32x49xbf16>, vector<49x256xbf16>, vector<32x256xf32> -> vector<32x256xf32>
    %c0_16 = arith.constant 0 : index
    %c0_17 = arith.constant 0 : index
    %c0_18 = arith.constant 0 : index
    %40 = vector.load %arg8[%c0_16, %c0_17, %c0_18] : memref<3x32x1xf32, #tpu.memory_space<vmem>>, vector<1x32x1xf32>
    %41 = vector.shape_cast %40 : vector<1x32x1xf32> to vector<32x1xf32>
    %cst_19 = arith.constant 0.000000e+00 : f32
    %42 = vector.broadcast %cst_19 : f32 to vector<32x256xf32>
    %43 = arith.cmpf oge, %39, %42 : vector<32x256xf32>
    %44 = vector.broadcast %41 : vector<32x1xf32> to vector<32x256xf32>
    %45 = arith.mulf %44, %39 : vector<32x256xf32>
    %46 = arith.select %43, %39, %45 : vector<32x256xi1>, vector<32x256xf32>
    %47 = arith.truncf %46 : vector<32x256xf32> to vector<32x256xbf16>
    %c0_20 = arith.constant 0 : index
    %c0_21 = arith.constant 0 : index
    %c0_22 = arith.constant 0 : index
    %48 = vector.load %arg7[%c0_20, %c0_21, %c0_22] : memref<3x32x97xbf16, #tpu.memory_space<vmem>>, vector<1x32x97xbf16>
    %49 = vector.shape_cast %48 : vector<1x32x97xbf16> to vector<32x97xbf16>
    %cst_23 = arith.constant 0.000000e+00 : bf16
    %50 = vector.broadcast %cst_23 : bf16 to vector<32x1xbf16>
    %51 = vector.extract_strided_slice %47 {offsets = [0, 0], sizes = [32, 255], strides = [1, 1]} : vector<32x256xbf16> to vector<32x255xbf16>
    %52 = tpu.concatenate %50, %51 in 1 : vector<32x1xbf16>, vector<32x255xbf16> -> vector<32x256xbf16>
    %cst_24 = arith.constant 0.000000e+00 : bf16
    %53 = vector.broadcast %cst_24 : bf16 to vector<32x1xbf16>
    %54 = vector.extract_strided_slice %47 {offsets = [0, 1], sizes = [32, 255], strides = [1, 1]} : vector<32x256xbf16> to vector<32x255xbf16>
    %55 = tpu.concatenate %54, %53 in 1 : vector<32x255xbf16>, vector<32x1xbf16> -> vector<32x256xbf16>
    %56 = tpu.concatenate %52, %47, %55, %30 in 0 : vector<32x256xbf16>, vector<32x256xbf16>, vector<32x256xbf16>, vector<1x256xbf16> -> vector<97x256xbf16>
    %cst_25 = arith.constant dense<0.000000e+00> : vector<32x256xf32>
    %57 = tpu.matmul %49, %56, %cst_25 {dimension_numbers = #tpu.dot_dimension_numbers<[1], [0], [0], [1], [0, 0, 1, 1], [], []>} : vector<32x97xbf16>, vector<97x256xbf16>, vector<32x256xf32> -> vector<32x256xf32>
    %58 = arith.addf %39, %57 : vector<32x256xf32>
    %c1 = arith.constant 1 : index
    %c0_26 = arith.constant 0 : index
    %c0_27 = arith.constant 0 : index
    %59 = vector.load %arg8[%c1, %c0_26, %c0_27] : memref<3x32x1xf32, #tpu.memory_space<vmem>>, vector<1x32x1xf32>
    %60 = vector.shape_cast %59 : vector<1x32x1xf32> to vector<32x1xf32>
    %cst_28 = arith.constant 0.000000e+00 : f32
    %61 = vector.broadcast %cst_28 : f32 to vector<32x256xf32>
    %62 = arith.cmpf oge, %58, %61 : vector<32x256xf32>
    %63 = vector.broadcast %60 : vector<32x1xf32> to vector<32x256xf32>
    %64 = arith.mulf %63, %58 : vector<32x256xf32>
    %65 = arith.select %62, %58, %64 : vector<32x256xi1>, vector<32x256xf32>
    %66 = arith.truncf %65 : vector<32x256xf32> to vector<32x256xbf16>
    %c1_29 = arith.constant 1 : index
    %c0_30 = arith.constant 0 : index
    %c0_31 = arith.constant 0 : index
    %67 = vector.load %arg7[%c1_29, %c0_30, %c0_31] : memref<3x32x97xbf16, #tpu.memory_space<vmem>>, vector<1x32x97xbf16>
    %68 = vector.shape_cast %67 : vector<1x32x97xbf16> to vector<32x97xbf16>
    %cst_32 = arith.constant 0.000000e+00 : bf16
    %69 = vector.broadcast %cst_32 : bf16 to vector<32x2xbf16>
    %70 = vector.extract_strided_slice %66 {offsets = [0, 0], sizes = [32, 254], strides = [1, 1]} : vector<32x256xbf16> to vector<32x254xbf16>
    %71 = tpu.concatenate %69, %70 in 1 : vector<32x2xbf16>, vector<32x254xbf16> -> vector<32x256xbf16>
    %cst_33 = arith.constant 0.000000e+00 : bf16
    %72 = vector.broadcast %cst_33 : bf16 to vector<32x2xbf16>
    %73 = vector.extract_strided_slice %66 {offsets = [0, 2], sizes = [32, 254], strides = [1, 1]} : vector<32x256xbf16> to vector<32x254xbf16>
    %74 = tpu.concatenate %73, %72 in 1 : vector<32x254xbf16>, vector<32x2xbf16> -> vector<32x256xbf16>
    %75 = tpu.concatenate %71, %66, %74, %30 in 0 : vector<32x256xbf16>, vector<32x256xbf16>, vector<32x256xbf16>, vector<1x256xbf16> -> vector<97x256xbf16>
    %cst_34 = arith.constant dense<0.000000e+00> : vector<32x256xf32>
    %76 = tpu.matmul %68, %75, %cst_34 {dimension_numbers = #tpu.dot_dimension_numbers<[1], [0], [0], [1], [0, 0, 1, 1], [], []>} : vector<32x97xbf16>, vector<97x256xbf16>, vector<32x256xf32> -> vector<32x256xf32>
    %77 = arith.addf %58, %76 : vector<32x256xf32>
    %c2 = arith.constant 2 : index
    %c0_35 = arith.constant 0 : index
    %c0_36 = arith.constant 0 : index
    %78 = vector.load %arg8[%c2, %c0_35, %c0_36] : memref<3x32x1xf32, #tpu.memory_space<vmem>>, vector<1x32x1xf32>
    %79 = vector.shape_cast %78 : vector<1x32x1xf32> to vector<32x1xf32>
    %cst_37 = arith.constant 0.000000e+00 : f32
    %80 = vector.broadcast %cst_37 : f32 to vector<32x256xf32>
    %81 = arith.cmpf oge, %77, %80 : vector<32x256xf32>
    %82 = vector.broadcast %79 : vector<32x1xf32> to vector<32x256xf32>
    %83 = arith.mulf %82, %77 : vector<32x256xf32>
    %84 = arith.select %81, %77, %83 : vector<32x256xi1>, vector<32x256xf32>
    %85 = arith.truncf %84 : vector<32x256xf32> to vector<32x256xbf16>
    %c2_38 = arith.constant 2 : index
    %c0_39 = arith.constant 0 : index
    %c0_40 = arith.constant 0 : index
    %86 = vector.load %arg7[%c2_38, %c0_39, %c0_40] : memref<3x32x97xbf16, #tpu.memory_space<vmem>>, vector<1x32x97xbf16>
    %87 = vector.shape_cast %86 : vector<1x32x97xbf16> to vector<32x97xbf16>
    %cst_41 = arith.constant 0.000000e+00 : bf16
    %88 = vector.broadcast %cst_41 : bf16 to vector<32x4xbf16>
    %89 = vector.extract_strided_slice %85 {offsets = [0, 0], sizes = [32, 252], strides = [1, 1]} : vector<32x256xbf16> to vector<32x252xbf16>
    %90 = tpu.concatenate %88, %89 in 1 : vector<32x4xbf16>, vector<32x252xbf16> -> vector<32x256xbf16>
    %cst_42 = arith.constant 0.000000e+00 : bf16
    %91 = vector.broadcast %cst_42 : bf16 to vector<32x4xbf16>
    %92 = vector.extract_strided_slice %85 {offsets = [0, 4], sizes = [32, 252], strides = [1, 1]} : vector<32x256xbf16> to vector<32x252xbf16>
    %93 = tpu.concatenate %92, %91 in 1 : vector<32x252xbf16>, vector<32x4xbf16> -> vector<32x256xbf16>
    %94 = tpu.concatenate %90, %85, %93, %30 in 0 : vector<32x256xbf16>, vector<32x256xbf16>, vector<32x256xbf16>, vector<1x256xbf16> -> vector<97x256xbf16>
    %cst_43 = arith.constant dense<0.000000e+00> : vector<32x256xf32>
    %95 = tpu.matmul %87, %94, %cst_43 {dimension_numbers = #tpu.dot_dimension_numbers<[1], [0], [0], [1], [0, 0, 1, 1], [], []>} : vector<32x97xbf16>, vector<97x256xbf16>, vector<32x256xf32> -> vector<32x256xf32>
    %96 = arith.addf %77, %95 : vector<32x256xf32>
    %c0_44 = arith.constant 0 : index
    %c0_45 = arith.constant 0 : index
    %c0_46 = arith.constant 0 : index
    %97 = vector.load %arg9[%c0_44, %c0_45, %c0_46] : memref<1x32x256xf32, #tpu.memory_space<vmem>>, vector<1x32x256xf32>
    %98 = vector.shape_cast %97 : vector<1x32x256xf32> to vector<32x256xf32>
    %99 = vector.shape_cast %96 : vector<32x256xf32> to vector<1x32x256xf32>
    tpu.vector_store %arg9[%c0_44, %c0_45, %c0_46], %99 {strides = array<i32>} : memref<1x32x256xf32, #tpu.memory_space<vmem>>, vector<1x32x256xf32>,
    return
  }
  func.func @transform_0(%arg0: i32, %arg1: i32) -> (i32, i32, i32) {
    %c0_i32 = arith.constant 0 : i32
    %c0_i32_0 = arith.constant 0 : i32
    %c0_i32_1 = arith.constant 0 : i32
    return %arg0, %c0_i32, %c0_i32_0 : i32, i32, i32
  }
  func.func @transform_1(%arg0: i32, %arg1: i32) -> (i32, i32, i32) {
    %c0_i32 = arith.constant 0 : i32
    %c0_i32_0 = arith.constant 0 : i32
    %c0_i32_1 = arith.constant 0 : i32
    return %arg0, %c0_i32, %c0_i32_0 : i32, i32, i32
  }
  func.func @transform_2(%arg0: i32, %arg1: i32) -> (i32, i32) {
    %c0_i32 = arith.constant 0 : i32
    %c0_i32_0 = arith.constant 0 : i32
    %c0_i32_1 = arith.constant 0 : i32
    return %c0_i32, %c0_i32_0 : i32, i32
  }
  func.func @transform_3(%arg0: i32, %arg1: i32) -> (i32, i32) {
    %c0_i32 = arith.constant 0 : i32
    %c0_i32_0 = arith.constant 0 : i32
    %c0_i32_1 = arith.constant 0 : i32
    return %c0_i32, %c0_i32_0 : i32, i32
  }
  func.func @transform_4(%arg0: i32, %arg1: i32) -> (i32, i32) {
    %c0_i32 = arith.constant 0 : i32
    %c0_i32_0 = arith.constant 0 : i32
    %c0_i32_1 = arith.constant 0 : i32
    return %c0_i32, %c0_i32_0 : i32, i32
  }
  func.func @transform_5(%arg0: i32, %arg1: i32) -> (i32, i32, i32) {
    %c0_i32 = arith.constant 0 : i32
    %c0_i32_0 = arith.constant 0 : i32
    %c0_i32_1 = arith.constant 0 : i32
    %c0_i32_2 = arith.constant 0 : i32
    return %c0_i32, %c0_i32_0, %c0_i32_1 : i32, i32, i32
  }
  func.func @transform_6(%arg0: i32, %arg1: i32) -> (i32, i32, i32) {
    %c0_i32 = arith.constant 0 : i32
    %c0_i32_0 = arith.constant 0 : i32
    %c0_i32_1 = arith.constant 0 : i32
    %c0_i32_2 = arith.constant 0 : i32
    return %c0_i32, %c0_i32_0, %c0_i32_1 : i32, i32, i32
  }
  func.func @transform_7(%arg0: i32, %arg1: i32) -> (i32, i32, i32) {
    %c0_i32 = arith.constant 0 : i32
    %c0_i32_0 = arith.constant 0 : i32
    return %arg0, %c0_i32, %arg1 : i32, i32, i32
  }
}

module attributes {stable_mosaic.version = 11 : i64} {
  func.func @_mel_adapter_kernel(%arg0: i32, %arg1: i32, %arg2: memref<1x1x1xf32, #tpu.memory_space<vmem>>, %arg3: memref<1x8x257xf32, #tpu.memory_space<vmem>>, %arg4: memref<32x16xbf16, #tpu.memory_space<vmem>>, %arg5: memref<16x16xf32, #tpu.memory_space<vmem>>, %arg6: memref<32x49xbf16, #tpu.memory_space<vmem>>, %arg7: memref<3x32x97xbf16, #tpu.memory_space<vmem>>, %arg8: memref<3x32x1xf32, #tpu.memory_space<vmem>>, %arg9: memref<1x32x256xf32, #tpu.memory_space<vmem>>) attributes {dimension_semantics = [#tpu.dimension_semantics<parallel>, #tpu.dimension_semantics<parallel>], iteration_bounds = array<i64: 2, 1>, scalar_prefetch = 0 : i64, scratch_operands = 0 : i64, tpu.core_type = #tpu.core_type<tc>, window_params = [{transform_indices = @transform_0, window_bounds = array<i64: 1, 1, 1>}, {transform_indices = @transform_1, window_bounds = array<i64: 1, 8, 257>}, {pipeline_mode = #tpu.pipeline_mode<synchronous>, transform_indices = @transform_2, window_bounds = array<i64: 32, 16>}, {pipeline_mode = #tpu.pipeline_mode<synchronous>, transform_indices = @transform_3, window_bounds = array<i64: 16, 16>}, {pipeline_mode = #tpu.pipeline_mode<synchronous>, transform_indices = @transform_4, window_bounds = array<i64: 32, 49>}, {pipeline_mode = #tpu.pipeline_mode<synchronous>, transform_indices = @transform_5, window_bounds = array<i64: 3, 32, 97>}, {pipeline_mode = #tpu.pipeline_mode<synchronous>, transform_indices = @transform_6, window_bounds = array<i64: 3, 32, 1>}, {transform_indices = @transform_7, window_bounds = array<i64: 1, 32, 256>}]} {
    %c256_i32 = arith.constant 256 : i32
    %0 = arith.muli %arg1, %c256_i32 : i32
    %1 = tpu.assume_multiple %0, 128 : i32
    %c0 = arith.constant 0 : index
    %c0_0 = arith.constant 0 : index
    %2 = arith.index_cast %1 : i32 to index
    %3 = vector.load %arg3[%c0, %c0_0, %2] : memref<1x8x257xf32, #tpu.memory_space<vmem>>, vector<1x8x257xf32>
    %4 = vector.shape_cast %3 : vector<1x8x257xf32> to vector<8x257xf32>
    %5 = arith.truncf %4 : vector<8x257xf32> to vector<8x257xbf16>
    %6 = vector.extract_strided_slice %5 {offsets = [0, 0], sizes = [8, 256], strides = [1, 1]} : vector<8x257xbf16> to vector<8x256xbf16>
    %7 = vector.extract_strided_slice %5 {offsets = [0, 1], sizes = [8, 256], strides = [1, 1]} : vector<8x257xbf16> to vector<8x256xbf16>
    %8 = tpu.concatenate %6, %7 in 0 : vector<8x256xbf16>, vector<8x256xbf16> -> vector<16x256xbf16>
    %c0_1 = arith.constant 0 : index
    %c0_2 = arith.constant 0 : index
    %9 = vector.load %arg4[%c0_1, %c0_2] : memref<32x16xbf16, #tpu.memory_space<vmem>>, vector<32x16xbf16>
    %cst = arith.constant dense<0.000000e+00> : vector<32x256xf32>
    %10 = tpu.matmul %9, %8, %cst {dimension_numbers = #tpu.dot_dimension_numbers<[1], [0], [0], [1], [0, 0, 1, 1], [], []>} : vector<32x16xbf16>, vector<16x256xbf16>, vector<32x256xf32> -> vector<32x256xf32>
    %11 = vector.extract_strided_slice %10 {offsets = [0, 0], sizes = [16, 256], strides = [1, 1]} : vector<32x256xf32> to vector<16x256xf32>
    %12 = vector.extract_strided_slice %10 {offsets = [16, 0], sizes = [16, 256], strides = [1, 1]} : vector<32x256xf32> to vector<16x256xf32>
    %13 = arith.mulf %11, %11 : vector<16x256xf32>
    %14 = arith.mulf %12, %12 : vector<16x256xf32>
    %15 = arith.addf %13, %14 : vector<16x256xf32>
    %c0_3 = arith.constant 0 : index
    %c0_4 = arith.constant 0 : index
    %16 = vector.load %arg5[%c0_3, %c0_4] : memref<16x16xf32, #tpu.memory_space<vmem>>, vector<16x16xf32>
    %cst_5 = arith.constant dense<0.000000e+00> : vector<16x256xf32>
    %17 = tpu.matmul %16, %15, %cst_5 {dimension_numbers = #tpu.dot_dimension_numbers<[1], [0], [0], [1], [0, 0, 1, 1], [], []>} : vector<16x16xf32>, vector<16x256xf32>, vector<16x256xf32> -> vector<16x256xf32>
    %18 = arith.mulf %17, %17 : vector<16x256xf32>
    %19 = vector.shape_cast %18 : vector<16x256xf32> to vector<1x16x256xf32>
    %cst_6 = arith.constant dense<0.000000e+00> : vector<1xf32>
    %20 = vector.multi_reduction <add>, %19, %cst_6 [1, 2] : vector<1x16x256xf32> to vector<1xf32>
    %21 = vector.shape_cast %20 : vector<1xf32> to vector<1x1x1xf32>
    %22 = vector.extract %21[0, 0, 0] : f32 from vector<1x1x1xf32>
    %cst_7 = arith.constant 3.906250e-03 : f32
    %23 = arith.mulf %22, %cst_7 : f32
    %24 = math.sqrt %23 : f32
    %cst_8 = arith.constant 9.99999974E-6 : f32
    %25 = arith.maximumf %24, %cst_8 : f32
    %cst_9 = arith.constant 1.000000e+00 : f32
    %26 = arith.divf %cst_9, %25 : f32
    %27 = vector.broadcast %26 : f32 to vector<16x256xf32>
    %28 = arith.mulf %17, %27 : vector<16x256xf32>
    %29 = arith.truncf %28 : vector<16x256xf32> to vector<16x256xbf16>
    %cst_10 = arith.constant 1.000000e+00 : bf16
    %30 = vector.broadcast %cst_10 : bf16 to vector<1x256xbf16>
    %c0_11 = arith.constant 0 : index
    %c0_12 = arith.constant 0 : index
    %31 = vector.load %arg6[%c0_11, %c0_12] : memref<32x49xbf16, #tpu.memory_space<vmem>>, vector<32x49xbf16>
    %cst_13 = arith.constant 0.000000e+00 : bf16
    %32 = vector.broadcast %cst_13 : bf16 to vector<16x1xbf16>
    %33 = vector.extract_strided_slice %29 {offsets = [0, 0], sizes = [16, 255], strides = [1, 1]} : vector<16x256xbf16> to vector<16x255xbf16>
    %34 = tpu.concatenate %32, %33 in 1 : vector<16x1xbf16>, vector<16x255xbf16> -> vector<16x256xbf16>
    %cst_14 = arith.constant 0.000000e+00 : bf16
    %35 = vector.broadcast %cst_14 : bf16 to vector<16x1xbf16>
    %36 = vector.extract_strided_slice %29 {offsets = [0, 1], sizes = [16, 255], strides = [1, 1]} : vector<16x256xbf16> to vector<16x255xbf16>
    %37 = tpu.concatenate %36, %35 in 1 : vector<16x255xbf16>, vector<16x1xbf16> -> vector<16x256xbf16>
    %38 = tpu.concatenate %34, %29, %37, %30 in 0 : vector<16x256xbf16>, vector<16x256xbf16>, vector<16x256xbf16>, vector<1x256xbf16> -> vector<49x256xbf16>
    %cst_15 = arith.constant dense<0.000000e+00> : vector<32x256xf32>
    %39 = tpu.matmul %31, %38, %cst_15 {dimension_numbers = #tpu.dot_dimension_numbers<[1], [0], [0], [1], [0, 0, 1, 1], [], []>} : vector<32x49xbf16>, vector<49x256xbf16>, vector<32x256xf32> -> vector<32x256xf32>
    %c0_16 = arith.constant 0 : index
    %c0_17 = arith.constant 0 : index
    %c0_18 = arith.constant 0 : index
    %40 = vector.load %arg8[%c0_16, %c0_17, %c0_18] : memref<3x32x1xf32, #tpu.memory_space<vmem>>, vector<1x32x1xf32>
    %41 = vector.shape_cast %40 : vector<1x32x1xf32> to vector<32x1xf32>
    %cst_19 = arith.constant 0.000000e+00 : f32
    %42 = vector.broadcast %cst_19 : f32 to vector<32x256xf32>
    %43 = arith.cmpf oge, %39, %42 : vector<32x256xf32>
    %44 = vector.broadcast %41 : vector<32x1xf32> to vector<32x256xf32>
    %45 = arith.mulf %44, %39 : vector<32x256xf32>
    %46 = arith.select %43, %39, %45 : vector<32x256xi1>, vector<32x256xf32>
    %47 = arith.truncf %46 : vector<32x256xf32> to vector<32x256xbf16>
    %c0_20 = arith.constant 0 : index
    %c0_21 = arith.constant 0 : index
    %c0_22 = arith.constant 0 : index
    %48 = vector.load %arg7[%c0_20, %c0_21, %c0_22] : memref<3x32x97xbf16, #tpu.memory_space<vmem>>, vector<1x32x97xbf16>
    %49 = vector.shape_cast %48 : vector<1x32x97xbf16> to vector<32x97xbf16>
    %cst_23 = arith.constant 0.000000e+00 : bf16
    %50 = vector.broadcast %cst_23 : bf16 to vector<32x1xbf16>
    %51 = vector.extract_strided_slice %47 {offsets = [0, 0], sizes = [32, 255], strides = [1, 1]} : vector<32x256xbf16> to vector<32x255xbf16>
    %52 = tpu.concatenate %50, %51 in 1 : vector<32x1xbf16>, vector<32x255xbf16> -> vector<32x256xbf16>
    %cst_24 = arith.constant 0.000000e+00 : bf16
    %53 = vector.broadcast %cst_24 : bf16 to vector<32x1xbf16>
    %54 = vector.extract_strided_slice %47 {offsets = [0, 1], sizes = [32, 255], strides = [1, 1]} : vector<32x256xbf16> to vector<32x255xbf16>
    %55 = tpu.concatenate %54, %53 in 1 : vector<32x255xbf16>, vector<32x1xbf16> -> vector<32x256xbf16>
    %56 = tpu.concatenate %52, %47, %55, %30 in 0 : vector<32x256xbf16>, vector<32x256xbf16>, vector<32x256xbf16>, vector<1x256xbf16> -> vector<97x256xbf16>
    %cst_25 = arith.constant dense<0.000000e+00> : vector<32x256xf32>
    %57 = tpu.matmul %49, %56, %cst_25 {dimension_numbers = #tpu.dot_dimension_numbers<[1], [0], [0], [1], [0, 0, 1, 1], [], []>} : vector<32x97xbf16>, vector<97x256xbf16>, vector<32x256xf32> -> vector<32x256xf32>
    %58 = arith.addf %39, %57 : vector<32x256xf32>
    %c1 = arith.constant 1 : index
    %c0_26 = arith.constant 0 : index
    %c0_27 = arith.constant 0 : index
    %59 = vector.load %arg8[%c1, %c0_26, %c0_27] : memref<3x32x1xf32, #tpu.memory_space<vmem>>, vector<1x32x1xf32>
    %60 = vector.shape_cast %59 : vector<1x32x1xf32> to vector<32x1xf32>
    %cst_28 = arith.constant 0.000000e+00 : f32
    %61 = vector.broadcast %cst_28 : f32 to vector<32x256xf32>
    %62 = arith.cmpf oge, %58, %61 : vector<32x256xf32>
    %63 = vector.broadcast %60 : vector<32x1xf32> to vector<32x256xf32>
    %64 = arith.mulf %63, %58 : vector<32x256xf32>
    %65 = arith.select %62, %58, %64 : vector<32x256xi1>, vector<32x256xf32>
    %66 = arith.truncf %65 : vector<32x256xf32> to vector<32x256xbf16>
    %c1_29 = arith.constant 1 : index
    %c0_30 = arith.constant 0 : index
    %c0_31 = arith.constant 0 : index
    %67 = vector.load %arg7[%c1_29, %c0_30, %c0_31] : memref<3x32x97xbf16, #tpu.memory_space<vmem>>, vector<1x32x97xbf16>
    %68 = vector.shape_cast %67 : vector<1x32x97xbf16> to vector<32x97xbf16>
    %cst_32 = arith.constant 0.000000e+00 : bf16
    %69 = vector.broadcast %cst_32 : bf16 to vector<32x2xbf16>
    %70 = vector.extract_strided_slice %66 {offsets = [0, 0], sizes = [32, 254], strides = [1, 1]} : vector<32x256xbf16> to vector<32x254xbf16>
    %71 = tpu.concatenate %69, %70 in 1 : vector<32x2xbf16>, vector<32x254xbf16> -> vector<32x256xbf16>
    %cst_33 = arith.constant 0.000000e+00 : bf16
    %72 = vector.broadcast %cst_33 : bf16 to vector<32x2xbf16>
    %73 = vector.extract_strided_slice %66 {offsets = [0, 2], sizes = [32, 254], strides = [1, 1]} : vector<32x256xbf16> to vector<32x254xbf16>
    %74 = tpu.concatenate %73, %72 in 1 : vector<32x254xbf16>, vector<32x2xbf16> -> vector<32x256xbf16>
    %75 = tpu.concatenate %71, %66, %74, %30 in 0 : vector<32x256xbf16>, vector<32x256xbf16>, vector<32x256xbf16>, vector<1x256xbf16> -> vector<97x256xbf16>
    %cst_34 = arith.constant dense<0.000000e+00> : vector<32x256xf32>
    %76 = tpu.matmul %68, %75, %cst_34 {dimension_numbers = #tpu.dot_dimension_numbers<[1], [0], [0], [1], [0, 0, 1, 1], [], []>} : vector<32x97xbf16>, vector<97x256xbf16>, vector<32x256xf32> -> vector<32x256xf32>
    %77 = arith.addf %58, %76 : vector<32x256xf32>
    %c2 = arith.constant 2 : index
    %c0_35 = arith.constant 0 : index
    %c0_36 = arith.constant 0 : index
    %78 = vector.load %arg8[%c2, %c0_35, %c0_36] : memref<3x32x1xf32, #tpu.memory_space<vmem>>, vector<1x32x1xf32>
    %79 = vector.shape_cast %78 : vector<1x32x1xf32> to vector<32x1xf32>
    %cst_37 = arith.constant 0.000000e+00 : f32
    %80 = vector.broadcast %cst_37 : f32 to vector<32x256xf32>
    %81 = arith.cmpf oge, %77, %80 : vector<32x256xf32>
    %82 = vector.broadcast %79 : vector<32x1xf32> to vector<32x256xf32>
    %83 = arith.mulf %82, %77 : vector<32x256xf32>
    %84 = arith.select %81, %77, %83 : vector<32x256xi1>, vector<32x256xf32>
    %85 = arith.truncf %84 : vector<32x256xf32> to vector<32x256xbf16>
    %c2_38 = arith.constant 2 : index
    %c0_39 = arith.constant 0 : index
    %c0_40 = arith.constant 0 : index
    %86 = vector.load %arg7[%c2_38, %c0_39, %c0_40] : memref<3x32x97xbf16, #tpu.memory_space<vmem>>, vector<1x32x97xbf16>
    %87 = vector.shape_cast %86 : vector<1x32x97xbf16> to vector<32x97xbf16>
    %cst_41 = arith.constant 0.000000e+00 : bf16
    %88 = vector.broadcast %cst_41 : bf16 to vector<32x4xbf16>
    %89 = vector.extract_strided_slice %85 {offsets = [0, 0], sizes = [32, 252], strides = [1, 1]} : vector<32x256xbf16> to vector<32x252xbf16>
    %90 = tpu.concatenate %88, %89 in 1 : vector<32x4xbf16>, vector<32x252xbf16> -> vector<32x256xbf16>
    %cst_42 = arith.constant 0.000000e+00 : bf16
    %91 = vector.broadcast %cst_42 : bf16 to vector<32x4xbf16>
    %92 = vector.extract_strided_slice %85 {offsets = [0, 4], sizes = [32, 252], strides = [1, 1]} : vector<32x256xbf16> to vector<32x252xbf16>
    %93 = tpu.concatenate %92, %91 in 1 : vector<32x252xbf16>, vector<32x4xbf16> -> vector<32x256xbf16>
    %94 = tpu.concatenate %90, %85, %93, %30 in 0 : vector<32x256xbf16>, vector<32x256xbf16>, vector<32x256xbf16>, vector<1x256xbf16> -> vector<97x256xbf16>
    %cst_43 = arith.constant dense<0.000000e+00> : vector<32x256xf32>
    %95 = tpu.matmul %87, %94, %cst_43 {dimension_numbers = #tpu.dot_dimension_numbers<[1], [0], [0], [1], [0, 0, 1, 1], [], []>} : vector<32x97xbf16>, vector<97x256xbf16>, vector<32x256xf32> -> vector<32x256xf32>
    %96 = arith.addf %77, %95 : vector<32x256xf32>
    %c0_44 = arith.constant 0 : index
    %c0_45 = arith.constant 0 : index
    %c0_46 = arith.constant 0 : index
    %97 = vector.load %arg9[%c0_44, %c0_45, %c0_46] : memref<1x32x256xf32, #tpu.memory_space<vmem>>, vector<1x32x256xf32>
    %98 = vector.shape_cast %97 : vector<1x32x256xf32> to vector<32x256xf32>
    %99 = vector.shape_cast %96 : vector<32x256xf32> to vector<1x32x256xf32>
    tpu.vector_store %arg9[%c0_44, %c0_45, %c0_46], %99 {strides = array<i32>} : memref<1x32x256xf32, #tpu.memory_space<vmem>>, vector<1x32x256xf32>,
    return
  }
  func.func @transform_0(%arg0: i32, %arg1: i32) -> (i32, i32, i32) {
    %c0_i32 = arith.constant 0 : i32
    %c0_i32_0 = arith.constant 0 : i32
    %c0_i32_1 = arith.constant 0 : i32
    return %arg0, %c0_i32, %c0_i32_0 : i32, i32, i32
  }
  func.func @transform_1(%arg0: i32, %arg1: i32) -> (i32, i32, i32) {
    %c0_i32 = arith.constant 0 : i32
    %c0_i32_0 = arith.constant 0 : i32
    %c0_i32_1 = arith.constant 0 : i32
    return %arg0, %c0_i32, %c0_i32_0 : i32, i32, i32
  }
  func.func @transform_2(%arg0: i32, %arg1: i32) -> (i32, i32) {
    %c0_i32 = arith.constant 0 : i32
    %c0_i32_0 = arith.constant 0 : i32
    %c0_i32_1 = arith.constant 0 : i32
    return %c0_i32, %c0_i32_0 : i32, i32
  }
  func.func @transform_3(%arg0: i32, %arg1: i32) -> (i32, i32) {
    %c0_i32 = arith.constant 0 : i32
    %c0_i32_0 = arith.constant 0 : i32
    %c0_i32_1 = arith.constant 0 : i32
    return %c0_i32, %c0_i32_0 : i32, i32
  }
  func.func @transform_4(%arg0: i32, %arg1: i32) -> (i32, i32) {
    %c0_i32 = arith.constant 0 : i32
    %c0_i32_0 = arith.constant 0 : i32
    %c0_i32_1 = arith.constant 0 : i32
    return %c0_i32, %c0_i32_0 : i32, i32
  }
  func.func @transform_5(%arg0: i32, %arg1: i32) -> (i32, i32, i32) {
    %c0_i32 = arith.constant 0 : i32
    %c0_i32_0 = arith.constant 0 : i32
    %c0_i32_1 = arith.constant 0 : i32
    %c0_i32_2 = arith.constant 0 : i32
    return %c0_i32, %c0_i32_0, %c0_i32_1 : i32, i32, i32
  }
  func.func @transform_6(%arg0: i32, %arg1: i32) -> (i32, i32, i32) {
    %c0_i32 = arith.constant 0 : i32
    %c0_i32_0 = arith.constant 0 : i32
    %c0_i32_1 = arith.constant 0 : i32
    %c0_i32_2 = arith.constant 0 : i32
    return %c0_i32, %c0_i32_0, %c0_i32_1 : i32, i32, i32
  }
  func.func @transform_7(%arg0: i32, %arg1: i32) -> (i32, i32, i32) {
    %c0_i32 = arith.constant 0 : i32
    %c0_i32_0 = arith.constant 0 : i32
    return %arg0, %c0_i32, %arg1 : i32, i32, i32
  }
}

</mosaic_0001>

<llo_original>
// kernel: _forward.1
$region0: #{_forward.1}
  #allocation0 [shape = 'u32[]', space=smem, size = 0x4, offset = 0x4, fixed_abs, tag = 'smem constant byte address 0x4 - core index']
  #allocation1 [shape = 'u32[144,128]{1,0:T(1,128)}', space=vmem, size = 0x12000, scoped, tag = 'internal scratch']
  %s0 = inlined_call_operand.hbm [shape: f32[2,1,1], index: 0, kind: input, shape index: {}]
  %s1 = inlined_call_operand.hbm [shape: f32[2,8,257], index: 1, kind: input, shape index: {}]
  %s2 = inlined_call_operand.hbm [shape: bf16[32,16], index: 2, kind: input, shape index: {}]
  %s3 = inlined_call_operand.hbm [shape: f32[16,16], index: 3, kind: input, shape index: {}]
  %s4 = inlined_call_operand.hbm [shape: bf16[32,49], index: 4, kind: input, shape index: {}]
  %s5 = inlined_call_operand.hbm [shape: bf16[3,32,97], index: 5, kind: input, shape index: {}]
  %s6 = inlined_call_operand.hbm [shape: f32[3,32,1], index: 6, kind: input, shape index: {}]
  %s7 = inlined_call_operand.hbm [shape: f32[2,32,256], index: 7, kind: output, shape index: {}]
  %s8 = sld [smem:[#allocation0]]
  $region89: #{_forward.1} parent=0
    _
  %s10 = ssub.s32 1, %s8
  %s11 = scalar_select 0, %s10, %s8
  $region1: #{_forward.1} parent=0
    #allocation2 [shape = 'u8[1024]{0}', space=vmem, size = 0x400, scoped, tag = 'input window, operand 0']
    #allocation3 [shape = 's32[2]{0}', space=sflag, size = 0x8, scoped, tag = 'scoped memory for _forward.1']
    #allocation4 [shape = 's32[2]{0}', space=sflag, size = 0x8, scoped, tag = 'scoped memory for _forward.1']
    #allocation5 [shape = 'u8[24576]{0}', space=vmem, size = 0x6000, scoped, tag = 'input window, operand 1']
    #allocation6 [shape = 's32[2]{0}', space=sflag, size = 0x8, scoped, tag = 'scoped memory for _forward.1']
    #allocation7 [shape = 'u8[8192]{0}', space=vmem, size = 0x2000, scoped, tag = 'input window, operand 2, single buffered']
    #allocation8 [shape = 'u8[8192]{0}', space=vmem, size = 0x2000, scoped, tag = 'input window, operand 3, single buffered']
    #allocation9 [shape = 's32[1]{0}', space=sflag, size = 0x4, scoped, tag = 'scoped memory for _forward.1']
    #allocation10 [shape = 'u8[8192]{0}', space=vmem, size = 0x2000, scoped, tag = 'input window, operand 4, single buffered']
    #allocation11 [shape = 'u8[24576]{0}', space=vmem, size = 0x6000, scoped, tag = 'input window, operand 5, single buffered']
    #allocation12 [shape = 's32[1]{0}', space=sflag, size = 0x4, scoped, tag = 'scoped memory for _forward.1']
    #allocation13 [shape = 'u8[49152]{0}', space=vmem, size = 0xc000, scoped, tag = 'input window, operand 6, single buffered']
    #allocation14 [shape = 'u8[65536]{0}', space=vmem, size = 0x10000, scoped, tag = 'output window, operand 0']
    %12 = vsyncpa [#allocation3], 0
    %s13 = scalar_lea.sflag [#allocation3], 1
    %14 = vsyncpa %s13, 0
    %15 = vsyncpa [#allocation6], 0
    %s16 = scalar_lea.sflag [#allocation6], 1
    %17 = vsyncpa %s16, 0
    %18 = vsyncpa [#allocation9], 0
    %19 = vsyncpa [#allocation12], 0
    %20 = vsyncpa [#allocation4], 0
    %s21 = scalar_lea.sflag [#allocation4], 1
    %22 = vsyncpa %s21, 0
    loop: start=0, step=1, limit=4
    $region2: #{_forward.1} parent=1 // loop_pre_header
      _
    $region3: #{_forward.1} parent=1 // loop_header
      %s24 = sphi 0, %s28
      %p25 = scmp.ge.s32.totalorder %s24, 4
      %s31 = sphi 0, %s43
      %s32 = sphi 0, %s39
      %s33 = sphi 0, %s31
      %s34 = sphi 0, %s32
      %s35 = sphi 0, %s33
      %s36 = sphi 0, %s34
      %s46 = sphi 0, %s48
      %s49 = sphi 0, %s46
      %s50 = sphi 0, %s49
      %s66 = sphi 0, %s50
      %s72 = sphi 0, %s74
      %s75 = sphi 0, %s72
      %s76 = sphi 0, %s75
      %s92 = sphi 0, %s76
      %s96 = sphi 0, %s96
      %s98 = sphi 0, %s96
      %s99 = sphi 0, %s98
      %s113 = sphi 0, %s99
      %s117 = sphi 0, %s117
      %s119 = sphi 0, %s117
      %s120 = sphi 0, %s119
      %s134 = sphi 0, %s120
      %s138 = sphi 0, %s138
      %s140 = sphi 0, %s138
      %s141 = sphi 0, %s140
      %s155 = sphi 0, %s141
      %s159 = sphi 0, %s159
      %s161 = sphi 0, %s159
      %s162 = sphi 0, %s161
      %s176 = sphi 0, %s162
      %s180 = sphi 0, %s180
      %s182 = sphi 0, %s180
      %s183 = sphi 0, %s182
      %s197 = sphi 0, %s183
      %s205 = sphi 0, %s207
      %s208 = sphi 0, %s205
      %s209 = sphi 0, %s208
      %s225 = sphi 0, %s209
    $region4: #{_forward.1} parent=1 // loop_header_branch
      %27 = sbr.rel (%p25) target = $region8
    $region5: #{_forward.1} parent=1 // loop_body
      %s29 = ssub.s32 %s24, 1
      %s30 = ssub.s32 %s24, 2
      %s37 = sadd.s32 1, %s32
      %p38 = scmp.ge.s32.totalorder %s37, 1
      %s39 = scalar_select %p38, 0, %s37
      %s40 = sadd.s32 1, %s31
      %s41 = scalar_select %p38, %s40, %s31
      %p42 = scmp.ge.s32.totalorder %s41, 2
      %s43 = scalar_select %p42, 0, %s41
      %s44 = ssub.s32 %s31, %s43
      %p45 = scmp.eq.s32.totalorder %s44, 0
      %s47 = sadd.s32 %s46, 1
      %s48 = scalar_select %p45, %s46, %s47
      %p51 = pneg %p45
      %p52 = scmp.eq.s32.totalorder %s24, 1
      %p53 = por %p51, %p52
      %p54 = scmp.ne.s32.totalorder %s46, %s49
      %p55 = scmp.eq.s32.totalorder %s24, 0
      %p56 = por %p54, %p55
      %p57 = scmp.ne.s32.totalorder %s46, %s49
      %p58 = scmp.eq.s32.totalorder %s29, 1
      %p59 = por %p57, %p58
      %p60 = scmp.ne.s32.totalorder %s49, %s50
      %p61 = scmp.eq.s32.totalorder %s29, 0
      %p62 = por %p60, %p61
      %p63 = scmp.ne.s32.totalorder %s49, %s50
      %p64 = scmp.eq.s32.totalorder %s30, 1
      %p65 = por %p63, %p64
      %p67 = scmp.ne.s32.totalorder %s50, %s66
      %p68 = scmp.eq.s32.totalorder %s30, 0
      %p69 = por %p67, %p68
      %s70 = ssub.s32 %s31, %s43
      %p71 = scmp.eq.s32.totalorder %s70, 0
      %s73 = sadd.s32 %s72, 1
      %s74 = scalar_select %p71, %s72, %s73
      %p77 = pneg %p71
      %p78 = scmp.eq.s32.totalorder %s24, 1
      %p79 = por %p77, %p78
      %p80 = scmp.ne.s32.totalorder %s72, %s75
      %p81 = scmp.eq.s32.totalorder %s24, 0
      %p82 = por %p80, %p81
      %p83 = scmp.ne.s32.totalorder %s72, %s75
      %p84 = scmp.eq.s32.totalorder %s29, 1
      %p85 = por %p83, %p84
      %p86 = scmp.ne.s32.totalorder %s75, %s76
      %p87 = scmp.eq.s32.totalorder %s29, 0
      %p88 = por %p86, %p87
      %p89 = scmp.ne.s32.totalorder %s75, %s76
      %p90 = scmp.eq.s32.totalorder %s30, 1
      %p91 = por %p89, %p90
      %p93 = scmp.ne.s32.totalorder %s76, %s92
      %p94 = scmp.eq.s32.totalorder %s30, 0
      %p95 = por %p93, %p94
      %s97 = sadd.s32 %s96, 1
      %p100 = scmp.eq.s32.totalorder %s24, 1
      %p101 = scmp.ne.s32.totalorder %s96, %s98
      %p102 = scmp.eq.s32.totalorder %s24, 0
      %p103 = por %p101, %p102
      %p104 = scmp.ne.s32.totalorder %s96, %s98
      %p105 = scmp.eq.s32.totalorder %s29, 1
      %p106 = por %p104, %p105
      %p107 = scmp.ne.s32.totalorder %s98, %s99
      %p108 = scmp.eq.s32.totalorder %s29, 0
      %p109 = por %p107, %p108
      %p110 = scmp.ne.s32.totalorder %s98, %s99
      %p111 = scmp.eq.s32.totalorder %s30, 1
      %p112 = por %p110, %p111
      %p114 = scmp.ne.s32.totalorder %s99, %s113
      %p115 = scmp.eq.s32.totalorder %s30, 0
      %p116 = por %p114, %p115
      %s118 = sadd.s32 %s117, 1
      %p121 = scmp.eq.s32.totalorder %s24, 1
      %p122 = scmp.ne.s32.totalorder %s117, %s119
      %p123 = scmp.eq.s32.totalorder %s24, 0
      %p124 = por %p122, %p123
      %p125 = scmp.ne.s32.totalorder %s117, %s119
      %p126 = scmp.eq.s32.totalorder %s29, 1
      %p127 = por %p125, %p126
      %p128 = scmp.ne.s32.totalorder %s119, %s120
      %p129 = scmp.eq.s32.totalorder %s29, 0
      %p130 = por %p128, %p129
      %p131 = scmp.ne.s32.totalorder %s119, %s120
      %p132 = scmp.eq.s32.totalorder %s30, 1
      %p133 = por %p131, %p132
      %p135 = scmp.ne.s32.totalorder %s120, %s134
      %p136 = scmp.eq.s32.totalorder %s30, 0
      %p137 = por %p135, %p136
      %s139 = sadd.s32 %s138, 1
      %p142 = scmp.eq.s32.totalorder %s24, 1
      %p143 = scmp.ne.s32.totalorder %s138, %s140
      %p144 = scmp.eq.s32.totalorder %s24, 0
      %p145 = por %p143, %p144
      %p146 = scmp.ne.s32.totalorder %s138, %s140
      %p147 = scmp.eq.s32.totalorder %s29, 1
      %p148 = por %p146, %p147
      %p149 = scmp.ne.s32.totalorder %s140, %s141
      %p150 = scmp.eq.s32.totalorder %s29, 0
      %p151 = por %p149, %p150
      %p152 = scmp.ne.s32.totalorder %s140, %s141
      %p153 = scmp.eq.s32.totalorder %s30, 1
      %p154 = por %p152, %p153
      %p156 = scmp.ne.s32.totalorder %s141, %s155
      %p157 = scmp.eq.s32.totalorder %s30, 0
      %p158 = por %p156, %p157
      %s160 = sadd.s32 %s159, 1
      %p163 = scmp.eq.s32.totalorder %s24, 1
      %p164 = scmp.ne.s32.totalorder %s159, %s161
      %p165 = scmp.eq.s32.totalorder %s24, 0
      %p166 = por %p164, %p165
      %p167 = scmp.ne.s32.totalorder %s159, %s161
      %p168 = scmp.eq.s32.totalorder %s29, 1
      %p169 = por %p167, %p168
      %p170 = scmp.ne.s32.totalorder %s161, %s162
      %p171 = scmp.eq.s32.totalorder %s29, 0
      %p172 = por %p170, %p171
      %p173 = scmp.ne.s32.totalorder %s161, %s162
      %p174 = scmp.eq.s32.totalorder %s30, 1
      %p175 = por %p173, %p174
      %p177 = scmp.ne.s32.totalorder %s162, %s176
      %p178 = scmp.eq.s32.totalorder %s30, 0
      %p179 = por %p177, %p178
      %s181 = sadd.s32 %s180, 1
      %p184 = scmp.eq.s32.totalorder %s24, 1
      %p185 = scmp.ne.s32.totalorder %s180, %s182
      %p186 = scmp.eq.s32.totalorder %s24, 0
      %p187 = por %p185, %p186
      %p188 = scmp.ne.s32.totalorder %s180, %s182
      %p189 = scmp.eq.s32.totalorder %s29, 1
      %p190 = por %p188, %p189
      %p191 = scmp.ne.s32.totalorder %s182, %s183
      %p192 = scmp.eq.s32.totalorder %s29, 0
      %p193 = por %p191, %p192
      %p194 = scmp.ne.s32.totalorder %s182, %s183
      %p195 = scmp.eq.s32.totalorder %s30, 1
      %p196 = por %p194, %p195
      %p198 = scmp.ne.s32.totalorder %s183, %s197
      %p199 = scmp.eq.s32.totalorder %s30, 0
      %p200 = por %p198, %p199
      %s201 = ssub.s32 %s31, %s43
      %s202 = ssub.s32 %s32, %s39
      %s203 = sor.u32 %s201, %s202
      %p204 = scmp.eq.s32.totalorder %s203, 0
      %s206 = sadd.s32 %s205, 1
      %s207 = scalar_select %p204, %s205, %s206
      %p210 = pneg %p204
      %p211 = scmp.eq.s32.totalorder %s24, 1
      %p212 = por %p210, %p211
      %p213 = scmp.ne.s32.totalorder %s205, %s208
      %p214 = scmp.eq.s32.totalorder %s24, 0
      %p215 = por %p213, %p214
      %p216 = scmp.ne.s32.totalorder %s205, %s208
      %p217 = scmp.eq.s32.totalorder %s29, 1
      %p218 = por %p216, %p217
      %p219 = scmp.ne.s32.totalorder %s208, %s209
      %p220 = scmp.eq.s32.totalorder %s29, 0
      %p221 = por %p219, %p220
      %p222 = scmp.ne.s32.totalorder %s208, %s209
      %p223 = scmp.eq.s32.totalorder %s30, 1
      %p224 = por %p222, %p223
      %p226 = scmp.ne.s32.totalorder %s209, %s225
      %p227 = scmp.eq.s32.totalorder %s30, 0
      %p228 = por %p226, %p227
      %p229 = scmp.le.s32.totalorder 1, %s24
      %p230 = scmp.lt.s32.totalorder %s24, 3
      %p231 = pnand %p229, %p230
      %p232 = pneg %p231
      // Predicated region
      $region9: #{_forward.1} parent=5 // pred_check
        _
      $region10: #{_forward.1} parent=5 // pred_check_branch
        %234 = sbr.rel (%p231) target = $region12
      $region11: #{_forward.1} parent=5 // pred_region
        %s235 = ssub.s32 %s24, 1
        // Predicated region
        $region13: #{_forward.1} parent=11 // pred_check
          %p236 = pneg %p109
        $region14: #{_forward.1} parent=11 // pred_check_branch
          %238 = sbr.rel (%p236) target = $region16
        $region15: #{_forward.1} parent=11 // pred_region
          %s240 = ssub.s32 256, 256
          %241 = vsyncadd [#allocation6], %s240
          %s242 = sshll.u32 [#allocation7], 4
          %s243 = int_to_ptr.vmem [resolvable:$true] %s242
          %248 = dma.hbm_to_vmem [thread:$0]  %s2, 256, %s243, [#allocation6], 64, 64, 4
        $region16: #{_forward.1} parent=11 // pred_fallthru
          _
        // Predicated region
        $region17: #{_forward.1} parent=11 // pred_check
          %p249 = pneg %p130
        $region18: #{_forward.1} parent=11 // pred_check_branch
          %251 = sbr.rel (%p249) target = $region20
        $region19: #{_forward.1} parent=11 // pred_region
          %s253 = ssub.s32 256, 256
          %254 = vsyncadd [#allocation9], %s253
          %s255 = sshll.u32 [#allocation8], 4
          %s256 = int_to_ptr.vmem [resolvable:$true] %s255
          %261 = dma.hbm_to_vmem [thread:$0]  %s3, 256, %s256, [#allocation9], 128, 128, 8
        $region20: #{_forward.1} parent=11 // pred_fallthru
          _
        // Predicated region
        $region21: #{_forward.1} parent=11 // pred_check
          %p262 = pneg %p151
        $region22: #{_forward.1} parent=11 // pred_check_branch
          %264 = sbr.rel (%p262) target = $region24
        $region23: #{_forward.1} parent=11 // pred_region
          %s266 = ssub.s32 256, 256
          %267 = vsyncadd [#allocation9], %s266
          %s268 = sshll.u32 [#allocation10], 4
          %s269 = int_to_ptr.vmem [resolvable:$true] %s268
          %274 = dma.hbm_to_vmem [thread:$0]  %s4, 256, %s269, [#allocation9], 64, 64, 4
        $region24: #{_forward.1} parent=11 // pred_fallthru
          _
        // Predicated region
        $region25: #{_forward.1} parent=11 // pred_check
          %p275 = pneg %p172
        $region26: #{_forward.1} parent=11 // pred_check_branch
          %277 = sbr.rel (%p275) target = $region28
        $region27: #{_forward.1} parent=11 // pred_region
          %s279 = ssub.s32 768, 768
          %280 = vsyncadd [#allocation12], %s279
          %s281 = sshll.u32 [#allocation11], 4
          %s282 = int_to_ptr.vmem [resolvable:$true] %s281
          %287 = dma.hbm_to_vmem [thread:$0]  %s5, 768, %s282, [#allocation12], 64, 64, 4
        $region28: #{_forward.1} parent=11 // pred_fallthru
          _
        // Predicated region
        $region29: #{_forward.1} parent=11 // pred_check
          %p288 = pneg %p193
        $region30: #{_forward.1} parent=11 // pred_check_branch
          %290 = sbr.rel (%p288) target = $region32
        $region31: #{_forward.1} parent=11 // pred_region
          %s292 = ssub.s32 1536, 1536
          %293 = vsyncadd [#allocation12], %s292
          %s294 = sshll.u32 [#allocation13], 4
          %s295 = int_to_ptr.vmem [resolvable:$true] %s294
          %300 = dma.hbm_to_vmem [thread:$0]  %s6, 1536, %s295, [#allocation12], 128, 128, 8
        $region32: #{_forward.1} parent=11 // pred_fallthru
          _
      $region12: #{_forward.1} parent=5 // pred_fallthru
        _
      %p301 = scmp.lt.s32.totalorder %s24, 2
      // Predicated region
      $region33: #{_forward.1} parent=5 // pred_check
        %p302 = pneg %p301
      $region34: #{_forward.1} parent=5 // pred_check_branch
        %304 = sbr.rel (%p302) target = $region36
      $region35: #{_forward.1} parent=5 // pred_region
        // Predicated region
        $region37: #{_forward.1} parent=35 // pred_check
          %p305 = pneg %p56
        $region38: #{_forward.1} parent=35 // pred_check_branch
          %307 = sbr.rel (%p305) target = $region40
        $region39: #{_forward.1} parent=35 // pred_region
          %s308 = sand.u32 %s46, 1
          %s309 = scalar_lea.sflag [#allocation3], %s308
          %s310 = sand.u32 %s46, 1
          %s311 = scalar_lea.vmem [#allocation2], %s310
          %s313 = ssub.s32 16, 16
          %314 = vsyncadd %s309, %s313
          %s315 = smul.addr %s31, 16
          %s316 = scalar_lea.hbm %s0, %s315
          %s318 = sshll.u32 %s311, 4
          %s319 = int_to_ptr.vmem [resolvable:$true] %s318
          %321 = dma.hbm_to_vmem [thread:$0]  %s316, 16, %s319, %s309
        $region40: #{_forward.1} parent=35 // pred_fallthru
          _
        // Predicated region
        $region41: #{_forward.1} parent=35 // pred_check
          %p322 = pneg %p82
        $region42: #{_forward.1} parent=35 // pred_check_branch
          %324 = sbr.rel (%p322) target = $region44
        $region43: #{_forward.1} parent=35 // pred_region
          %s325 = sand.u32 %s24, 1
          %s326 = scalar_lea.sflag [#allocation6], %s325
          %s327 = sand.u32 %s72, 1
          %s328 = smul.addr %s327, 24
          %s329 = scalar_lea.vmem [#allocation5], %s328
          %s331 = ssub.s32 384, 384
          %332 = vsyncadd %s326, %s331
          %s333 = smul.addr %s31, 3
          %s334 = smul.addr %s333, 128
          %s335 = scalar_lea.hbm %s1, %s334
          %s337 = sshll.u32 %s329, 4
          %s338 = int_to_ptr.vmem [resolvable:$true] %s337
          %340 = dma.hbm_to_vmem [thread:$0]  %s335, 384, %s338, %s326
        $region44: #{_forward.1} parent=35 // pred_fallthru
          _
      $region36: #{_forward.1} parent=5 // pred_fallthru
        _
      %p341 = scmp.le.s32.totalorder 1, %s24
      %p342 = scmp.lt.s32.totalorder %s24, 3
      %p343 = pnand %p341, %p342
      %p344 = pneg %p343
      // Predicated region
      $region45: #{_forward.1} parent=5 // pred_check
        _
      $region46: #{_forward.1} parent=5 // pred_check_branch
        %346 = sbr.rel (%p343) target = $region48
      $region47: #{_forward.1} parent=5 // pred_region
        %s347 = ssub.s32 %s24, 1
        %s348 = sand.u32 %s49, 1
        %s349 = scalar_lea.sflag [#allocation3], %s348
        %s350 = sand.u32 %s49, 1
        %s351 = scalar_lea.vmem [#allocation2], %s350
        // Predicated region
        $region49: #{_forward.1} parent=47 // pred_check
          %p352 = pneg %p62
        $region50: #{_forward.1} parent=47 // pred_check_branch
          %354 = sbr.rel (%p352) target = $region52
        $region51: #{_forward.1} parent=47 // pred_region
          %355 = dma.done %s349, 16
        $region52: #{_forward.1} parent=47 // pred_fallthru
          _
        %s356 = sand.u32 %s29, 1
        %s357 = scalar_lea.sflag [#allocation6], %s356
        %s358 = sand.u32 %s75, 1
        %s359 = smul.addr %s358, 24
        %s360 = scalar_lea.vmem [#allocation5], %s359
        // Predicated region
        $region53: #{_forward.1} parent=47 // pred_check
          %p361 = pneg %p88
        $region54: #{_forward.1} parent=47 // pred_check_branch
          %363 = sbr.rel (%p361) target = $region56
        $region55: #{_forward.1} parent=47 // pred_region
          %364 = dma.done %s357, 384
        $region56: #{_forward.1} parent=47 // pred_fallthru
          _
        // Predicated region
        $region57: #{_forward.1} parent=47 // pred_check
          %p365 = pneg %p109
        $region58: #{_forward.1} parent=47 // pred_check_branch
          %367 = sbr.rel (%p365) target = $region60
        $region59: #{_forward.1} parent=47 // pred_region
          %368 = dma.done [#allocation6], 256
        $region60: #{_forward.1} parent=47 // pred_fallthru
          _
        // Predicated region
        $region61: #{_forward.1} parent=47 // pred_check
          %p369 = pneg %p130
        $region62: #{_forward.1} parent=47 // pred_check_branch
          %371 = sbr.rel (%p369) target = $region64
        $region63: #{_forward.1} parent=47 // pred_region
          %372 = dma.done [#allocation9], 256
        $region64: #{_forward.1} parent=47 // pred_fallthru
          _
        // Predicated region
        $region65: #{_forward.1} parent=47 // pred_check
          %p373 = pneg %p151
        $region66: #{_forward.1} parent=47 // pred_check_branch
          %375 = sbr.rel (%p373) target = $region68
        $region67: #{_forward.1} parent=47 // pred_region
          %376 = dma.done [#allocation9], 256
        $region68: #{_forward.1} parent=47 // pred_fallthru
          _
        // Predicated region
        $region69: #{_forward.1} parent=47 // pred_check
          %p377 = pneg %p172
        $region70: #{_forward.1} parent=47 // pred_check_branch
          %379 = sbr.rel (%p377) target = $region72
        $region71: #{_forward.1} parent=47 // pred_region
          %380 = dma.done [#allocation12], 768
        $region72: #{_forward.1} parent=47 // pred_fallthru
          _
        // Predicated region
        $region73: #{_forward.1} parent=47 // pred_check
          %p381 = pneg %p193
        $region74: #{_forward.1} parent=47 // pred_check_branch
          %383 = sbr.rel (%p381) target = $region76
        $region75: #{_forward.1} parent=47 // pred_region
          %384 = dma.done [#allocation12], 1536
        $region76: #{_forward.1} parent=47 // pred_fallthru
          _
        %s385 = sand.u32 %s49, 1
        %s386 = scalar_lea.sflag [#allocation3], %s385
        %s387 = sand.u32 %s49, 1
        %s388 = scalar_lea.vmem [#allocation2], %s387
        %p389 = pneg %p62
        %p390 = pneg %p59
        %s391 = sand.u32 %s29, 1
        %s392 = scalar_lea.sflag [#allocation6], %s391
        %s393 = sand.u32 %s75, 1
        %s394 = smul.addr %s393, 24
        %s395 = scalar_lea.vmem [#allocation5], %s394
        %p396 = pneg %p88
        %p397 = pneg %p85
        %p398 = pneg %p109
        %p399 = pneg %p106
        %p400 = pneg %p130
        %p401 = pneg %p127
        %p402 = pneg %p151
        %p403 = pneg %p148
        %p404 = pneg %p172
        %p405 = pneg %p169
        %p406 = pneg %p193
        %p407 = pneg %p190
        %p408 = pneg %p221
        %p409 = pneg %p218
        %s410 = sand.u32 %s208, 1
        %s411 = scalar_lea.sflag [#allocation4], %s410
        %s412 = sand.u32 %s208, 1
        %s413 = smul.addr %s412, 64
        %s414 = scalar_lea.vmem [#allocation14], %s413
        %s415 = smul.u32 2, %s34
        %s418 = smul.u32 %s34, 256
        %s419 = sshra.s32 %s418, 7
        %s420 = sand.u32 %s418, 127
        %s421 = smul.addr %s419, 8
        %s422 = scalar_lea.vmem %s360, %s421 [#allocation5]
        %v423 = vld [vmem:[%s422] sm:$0xff]
        %v424 = vld [vmem:[%s422 + $0x8] sm:$0xff]
        %v425 = vld [vmem:[%s422 + $0x10] sm:$0xff]
        %v426 = vpack.c.bf16 %v423, %v423
        %v427 = vpack.c.bf16 %v424, %v424
        %v428 = vpack.c.bf16 %v425, %v425
        %v432 = vrot.slane %v426, 4
        %v433 = vrot.slane %v427, 4
        %v434 = vrot.slane %v428, 4
        %435 = vrot.lane.b32.xlu0 %v432, 127
        %v436 = vpop.permute.xlu0 %435
        %437 = vrot.lane.b32.xlu0 %v433, 127
        %v438 = vpop.permute.xlu0 %437
        %439 = vrot.lane.b32.xlu0 %v434, 127
        %v440 = vpop.permute.xlu0 %439
        %vm441 = vcmask 1039360
        %v442 = vsel %vm441, %v436, %v438
        %v443 = vsel %vm441, %v438, %v440
        %vm444 = vcmask 1043456
        %v447 = vsel %vm444, %v426, %v442
        %v451 = vsel %vm444, %v427, %v443
        %v453 = vld [vmem:[#allocation7] sm:$0xf]
        %v454 = vld [vmem:[#allocation7 + $0x4] sm:$0xf]
        %v455 = vld [vmem:[#allocation7 + $0x8] sm:$0xf]
        %v456 = vld [vmem:[#allocation7 + $0xc] sm:$0xf]
        %v461 = vunpack.c.l.b16 %v453
        %v462 = vunpack.c.l.b16 %v454
        %v463 = vunpack.c.l.b16 %v455
        %v464 = vunpack.c.l.b16 %v456
        %v465 = vpack.c.b16 %v462, %v461
        %v466 = vpack.c.b16 %v464, %v463
        %vm467 = vcmask 130048
        %v469 = vsel %vm467, %v465, 0
        %v472 = vsel %vm467, %v466, 0
        %474 = vmatprep.subr.bf16.mxu0 %v451
        %475 = vmatpush1.bf16.msra.mxu0 %v447
        %476 = vmatprep.subr.bf16.mxu0 0
        %477 = vmatpush1.bf16.msra.mxu0 0
        %478 = vmatprep.subr.bf16.mxu0 0
        %479 = vmatpush1.bf16.msra.mxu0 0
        %480 = vmatprep.subr.bf16.mxu0 0
        %481 = vmatpush1.bf16.msra.mxu0 0
        %482 = vmatprep.subr.bf16.mxu0 0
        %483 = vmatpush1.bf16.msra.mxu0 0
        %484 = vmatprep.subr.bf16.mxu0 0
        %485 = vmatpush1.bf16.msra.mxu0 0
        %486 = vmatprep.subr.bf16.mxu0 0
        %487 = vmatpush1.bf16.msra.mxu0 0
        %488 = vmatprep.subr.bf16.mxu0 0
        %489 = vmatpush1.bf16.msra.mxu0 0
        %490 = vmatprep.subr.bf16.mxu0 0
        %491 = vmatpush1.bf16.msra.mxu0 0
        %492 = vmatprep.subr.bf16.mxu0 0
        %493 = vmatpush1.bf16.msra.mxu0 0
        %494 = vmatprep.subr.bf16.mxu0 0
        %495 = vmatpush1.bf16.msra.mxu0 0
        %496 = vmatprep.subr.bf16.mxu0 0
        %497 = vmatpush1.bf16.msra.mxu0 0
        %498 = vmatprep.subr.bf16.mxu0 0
        %499 = vmatpush1.bf16.msra.mxu0 0
        %500 = vmatprep.subr.bf16.mxu0 0
        %501 = vmatpush1.bf16.msra.mxu0 0
        %502 = vmatprep.subr.bf16.mxu0 0
        %503 = vmatpush1.bf16.msra.mxu0 0
        %504 = vmatprep.subr.bf16.mxu0 0
        %505 = vmatpush1.bf16.msra.mxu0 0
        %506 = vmatprep.mubr.bf16.mxu0 0
        %507 = vmatmul.mubr.bf16.gmra.mrb[0].mxu0 %v469
        %v508 = vpop.f32.mrb[0].mxu0
        %v509 = vadd.f32 0.0, %v508
        %v510 = vpop.f32.mrb[0].mxu0
        %v511 = vadd.f32 0.0, %v510
        %v512 = vpop.f32.mrb[0].mxu0
        %v513 = vadd.f32 0.0, %v512
        %v514 = vpop.f32.mrb[0].mxu0
        %v515 = vadd.f32 0.0, %v514
        %516 = vmatprep.mubr.bf16.mxu0 0
        %517 = vmatmul.mubr.bf16.gmra.mrb[0].mxu0 %v472
        %v518 = vpop.f32.mrb[0].mxu0
        %v519 = vadd.f32 0.0, %v518
        %v520 = vpop.f32.mrb[0].mxu0
        %v521 = vadd.f32 0.0, %v520
        %v522 = vpop.f32.mrb[0].mxu0
        %v523 = vadd.f32 0.0, %v522
        %v524 = vpop.f32.mrb[0].mxu0
        %v525 = vadd.f32 0.0, %v524
        %526 = vdwg.mxu0
        %v527 = vmul.f32 %v509, %v509
        %v528 = vmul.f32 %v511, %v511
        %v529 = vmul.f32 %v513, %v513
        %v530 = vmul.f32 %v515, %v515
        %v531 = vmul.f32 %v519, %v519
        %v532 = vmul.f32 %v521, %v521
        %v533 = vmul.f32 %v523, %v523
        %v534 = vmul.f32 %v525, %v525
        %v535 = vadd.f32 %v527, %v531
        %v536 = vadd.f32 %v528, %v532
        %v537 = vadd.f32 %v529, %v533
        %v538 = vadd.f32 %v530, %v534
        %v539 = vld [vmem:[#allocation8] sm:$0xff]
        %v540 = vld [vmem:[#allocation8 + $0x8] sm:$0xff]
        %v542 = vsel %vm467, %v539, 0
        %v545 = vsel %vm467, %v540, 0
        %547 = vmatprep.subr.mxu0 %v536
        %548 = vmatpush1.msra.mxu0 %v535
        %549 = vmatprep.subr.mxu0 %v538
        %550 = vmatpush1.msra.mxu0 %v537
        %551 = vmatprep.subr.mxu0 0.0
        %552 = vmatpush1.msra.mxu0 0.0
        %553 = vmatprep.subr.mxu0 0.0
        %554 = vmatpush1.msra.mxu0 0.0
        %555 = vmatprep.subr.mxu0 0.0
        %556 = vmatpush1.msra.mxu0 0.0
        %557 = vmatprep.subr.mxu0 0.0
        %558 = vmatpush1.msra.mxu0 0.0
        %559 = vmatprep.subr.mxu0 0.0
        %560 = vmatpush1.msra.mxu0 0.0
        %561 = vmatprep.subr.mxu0 0.0
        %562 = vmatpush1.msra.mxu0 0.0
        %563 = vmatprep.subr.mxu0 0.0
        %564 = vmatpush1.msra.mxu0 0.0
        %565 = vmatprep.subr.mxu0 0.0
        %566 = vmatpush1.msra.mxu0 0.0
        %567 = vmatprep.subr.mxu0 0.0
        %568 = vmatpush1.msra.mxu0 0.0
        %569 = vmatprep.subr.mxu0 0.0
        %570 = vmatpush1.msra.mxu0 0.0
        %571 = vmatprep.subr.mxu0 0.0
        %572 = vmatpush1.msra.mxu0 0.0
        %573 = vmatprep.subr.mxu0 0.0
        %574 = vmatpush1.msra.mxu0 0.0
        %575 = vmatprep.subr.mxu0 0.0
        %576 = vmatpush1.msra.mxu0 0.0
        %577 = vmatprep.subr.mxu0 0.0
        %578 = vmatpush1.msra.mxu0 0.0
        %579 = vmatprep.subr.mxu0 0.0
        %580 = vmatpush1.msra.mxu0 0.0
        %581 = vmatprep.subr.mxu0 0.0
        %582 = vmatpush1.msra.mxu0 0.0
        %583 = vmatprep.subr.mxu0 0.0
        %584 = vmatpush1.msra.mxu0 0.0
        %585 = vmatprep.subr.mxu0 0.0
        %586 = vmatpush1.msra.mxu0 0.0
        %587 = vmatprep.subr.mxu0 0.0
        %588 = vmatpush1.msra.mxu0 0.0
        %589 = vmatprep.subr.mxu0 0.0
        %590 = vmatpush1.msra.mxu0 0.0
        %591 = vmatprep.subr.mxu0 0.0
        %592 = vmatpush1.msra.mxu0 0.0
        %593 = vmatprep.subr.mxu0 0.0
        %594 = vmatpush1.msra.mxu0 0.0
        %595 = vmatprep.subr.mxu0 0.0
        %596 = vmatpush1.msra.mxu0 0.0
        %597 = vmatprep.subr.mxu0 0.0
        %598 = vmatpush1.msra.mxu0 0.0
        %599 = vmatprep.subr.mxu0 0.0
        %600 = vmatpush1.msra.mxu0 0.0
        %601 = vmatprep.subr.mxu0 0.0
        %602 = vmatpush1.msra.mxu0 0.0
        %603 = vmatprep.subr.mxu0 0.0
        %604 = vmatpush1.msra.mxu0 0.0
        %605 = vmatprep.subr.mxu0 0.0
        %606 = vmatpush1.msra.mxu0 0.0
        %607 = vmatprep.subr.mxu0 0.0
        %608 = vmatpush1.msra.mxu0 0.0
        %609 = vmatprep.subr.mxu0 0.0
        %610 = vmatpush1.msra.mxu0 0.0
        %611 = vmatprep.mubr.f32.mxu0 0.0
        %612 = vmatmul.mubr.f32.gmra.mrb[0].mxu0 %v542
        %v613 = vpop.f32.mrb[0].mxu0
        %v614 = vadd.f32 0.0, %v613
        %v615 = vpop.f32.mrb[0].mxu0
        %v616 = vadd.f32 0.0, %v615
        %617 = vmatprep.mubr.f32.mxu0 0.0
        %618 = vmatmul.mubr.f32.gmra.mrb[0].mxu0 %v545
        %v619 = vpop.f32.mrb[0].mxu0
        %v620 = vadd.f32 0.0, %v619
        %v621 = vpop.f32.mrb[0].mxu0
        %v622 = vadd.f32 0.0, %v621
        %623 = vdwg.mxu0
        %v624 = vmul.f32 %v614, %v614
        %v625 = vmul.f32 %v616, %v616
        %v626 = vmul.f32 %v620, %v620
        %v627 = vmul.f32 %v622, %v622
        %v628 = vadd.f32 %v624, %v625
        %v629 = vadd.f32 %v628, %v626
        %v630 = vadd.f32 %v629, %v627
        %631 = vadd.xlane.f32.xlu0 %v630
        %v632 = vpop.xlane.xlu0 %631
        %v633 = vrot.slane %v632, 4
        %v634 = vadd.f32 %v632, %v633
        %v635 = vrot.slane %v634, 2
        %v636 = vadd.f32 %v634, %v635
        %v637 = vrot.slane %v636, 1
        %v638 = vadd.f32 %v636, %v637
        %s639 = vtos %v638
        %s640 = smul.f32 %s639, 0.00390625
        %v641 = vstv %s640
        %v642 = vrsqrt.pop %v641
        %v643 = vmul.f32 %v641, %v642
        %vm644 = vcmp.eq.f32.partialorder %v641, inf
        %v645 = vsel %vm644, %v641, %v643
        %vm646 = vcmp.eq.f32.partialorder %v641, 0.0
        %v647 = vand.u32 %v641, 2147483648
        %v648 = vsel %vm646, %v647, %v645
        %s649 = vtos %v648
        %s650 = smax.f32 %s649, 1e-05
        %v651 = vstv %s650
        %v652 = vrcp.pop %v651
        %s653 = vtos %v652
        %v654 = vstv %s653
        %v655 = vmul.f32 %v614, %v654
        %v656 = vmul.f32 %v616, %v654
        %v657 = vmul.f32 %v620, %v654
        %v658 = vmul.f32 %v622, %v654
        %v659 = vpack.c.bf16 %v657, %v655
        %v660 = vpack.c.bf16 %v658, %v656
        %v661 = vld [vmem:[#allocation10] sm:$0xf]
        %v662 = vld [vmem:[#allocation10 + $0x4] sm:$0xf]
        %v663 = vld [vmem:[#allocation10 + $0x8] sm:$0xf]
        %v664 = vld [vmem:[#allocation10 + $0xc] sm:$0xf]
        %667 = vrot.lane.b32.xlu0 %v659, 1
        %v668 = vpop.permute.xlu0 %667
        %669 = vrot.lane.b32.xlu0 %v660, 1
        %v670 = vpop.permute.xlu0 %669
        %vm671 = vcmask 7168
        %v672 = vsel %vm671, %v668, %v670
        %vm674 = vcmask 7168
        %v677 = vsel %vm674, 0, %v668
        %679 = vrot.lane.b32.xlu0 %v659, 127
        %v680 = vpop.permute.xlu0 %679
        %681 = vrot.lane.b32.xlu0 %v660, 127
        %v682 = vpop.permute.xlu0 %681
        %v683 = vsel %vm441, %v680, %v682
        %vm685 = vcmask 1039360
        %v687 = vsel %vm685, %v682, 0
        %v693 = vunpack.c.l.b16 %v661
        %v694 = vunpack.c.l.b16 %v662
        %v695 = vunpack.c.l.b16 %v663
        %v696 = vunpack.c.l.b16 %v664
        %v697 = vpack.c.b16 %v694, %v693
        %v698 = vpack.c.b16 %v696, %v695
        %vm699 = vcmask 400384
        %v701 = vsel %vm699, %v697, 0
        %v704 = vsel %vm699, %v698, 0
        %vm706 = vcmask 1040384
        %v707 = vsel 0, 4294967295, 65535
        %v708 = vsel %vm706, %v707, 0
        %v710 = vand.u32 1065369472, %v708
        %712 = vmatprep.subr.bf16.mxu0 %v672
        %713 = vmatpush1.bf16.msra.mxu0 %v677
        %714 = vmatprep.subr.bf16.mxu0 %v660
        %715 = vmatpush1.bf16.msra.mxu0 %v659
        %716 = vmatprep.subr.bf16.mxu0 %v687
        %717 = vmatpush1.bf16.msra.mxu0 %v683
        %718 = vmatprep.subr.bf16.mxu0 %v710
        %719 = vmatpush1.bf16.msra.mxu0 %v710
        %720 = vmatprep.subr.bf16.mxu0 0
        %721 = vmatpush1.bf16.msra.mxu0 0
        %722 = vmatprep.subr.bf16.mxu0 0
        %723 = vmatpush1.bf16.msra.mxu0 0
        %724 = vmatprep.subr.bf16.mxu0 0
        %725 = vmatpush1.bf16.msra.mxu0 0
        %726 = vmatprep.subr.bf16.mxu0 0
        %727 = vmatpush1.bf16.msra.mxu0 0
        %728 = vmatprep.subr.bf16.mxu0 0
        %729 = vmatpush1.bf16.msra.mxu0 0
        %730 = vmatprep.subr.bf16.mxu0 0
        %731 = vmatpush1.bf16.msra.mxu0 0
        %732 = vmatprep.subr.bf16.mxu0 0
        %733 = vmatpush1.bf16.msra.mxu0 0
        %734 = vmatprep.subr.bf16.mxu0 0
        %735 = vmatpush1.bf16.msra.mxu0 0
        %736 = vmatprep.subr.bf16.mxu0 0
        %737 = vmatpush1.bf16.msra.mxu0 0
        %738 = vmatprep.subr.bf16.mxu0 0
        %739 = vmatpush1.bf16.msra.mxu0 0
        %740 = vmatprep.subr.bf16.mxu0 0
        %741 = vmatpush1.bf16.msra.mxu0 0
        %742 = vmatprep.subr.bf16.mxu0 0
        %743 = vmatpush1.bf16.msra.mxu0 0
        %744 = vmatprep.mubr.bf16.mxu0 0
        %745 = vmatmul.mubr.bf16.gmra.mrb[0].mxu0 %v701
        %v746 = vpop.f32.mrb[0].mxu0
        %v747 = vadd.f32 0.0, %v746
        %v748 = vpop.f32.mrb[0].mxu0
        %v749 = vadd.f32 0.0, %v748
        %v750 = vpop.f32.mrb[0].mxu0
        %v751 = vadd.f32 0.0, %v750
        %v752 = vpop.f32.mrb[0].mxu0
        %v753 = vadd.f32 0.0, %v752
        %754 = vmatprep.mubr.bf16.mxu0 0
        %755 = vmatmul.mubr.bf16.gmra.mrb[0].mxu0 %v704
        %v756 = vpop.f32.mrb[0].mxu0
        %v757 = vadd.f32 0.0, %v756
        %v758 = vpop.f32.mrb[0].mxu0
        %v759 = vadd.f32 0.0, %v758
        %v760 = vpop.f32.mrb[0].mxu0
        %v761 = vadd.f32 0.0, %v760
        %v762 = vpop.f32.mrb[0].mxu0
        %v763 = vadd.f32 0.0, %v762
        %764 = vdwg.mxu0
        %v765 = vld [vmem:[#allocation13] sm:$0xff]
        %v766 = vld [vmem:[#allocation13 + $0x8] sm:$0xff]
        %v767 = vld [vmem:[#allocation13 + $0x10] sm:$0xff]
        %v768 = vld [vmem:[#allocation13 + $0x18] sm:$0xff]
        %vm769 = vcmp.ge.f32.partialorder %v747, 0.0
        %vm770 = vcmp.ge.f32.partialorder %v749, 0.0
        %vm771 = vcmp.ge.f32.partialorder %v751, 0.0
        %vm772 = vcmp.ge.f32.partialorder %v753, 0.0
        %vm773 = vcmp.ge.f32.partialorder %v757, 0.0
        %vm774 = vcmp.ge.f32.partialorder %v759, 0.0
        %vm775 = vcmp.ge.f32.partialorder %v761, 0.0
        %vm776 = vcmp.ge.f32.partialorder %v763, 0.0
        %778 = vset.pattern.permute.xlu0 0
        %779 = vperm.xlu0 %778, %v765
        %v780 = vpop.permute.xlu0 %779
        %783 = vset.pattern.permute.xlu0 0
        %784 = vperm.xlu0 %783, %v766
        %v785 = vpop.permute.xlu0 %784
        %788 = vset.pattern.permute.xlu0 0
        %789 = vperm.xlu0 %788, %v767
        %v790 = vpop.permute.xlu0 %789
        %793 = vset.pattern.permute.xlu0 0
        %794 = vperm.xlu0 %793, %v768
        %v795 = vpop.permute.xlu0 %794
        %v797 = vmul.f32 %v780, %v747
        %v798 = vmul.f32 %v780, %v749
        %v799 = vmul.f32 %v785, %v751
        %v800 = vmul.f32 %v785, %v753
        %v801 = vmul.f32 %v790, %v757
        %v802 = vmul.f32 %v790, %v759
        %v803 = vmul.f32 %v795, %v761
        %v804 = vmul.f32 %v795, %v763
        %v805 = vsel %vm769, %v747, %v797
        %v806 = vsel %vm770, %v749, %v798
        %v807 = vsel %vm771, %v751, %v799
        %v808 = vsel %vm772, %v753, %v800
        %v809 = vsel %vm773, %v757, %v801
        %v810 = vsel %vm774, %v759, %v802
        %v811 = vsel %vm775, %v761, %v803
        %v812 = vsel %vm776, %v763, %v804
        %v813 = vpack.c.bf16 %v807, %v805
        %v814 = vpack.c.bf16 %v808, %v806
        %v815 = vpack.c.bf16 %v811, %v809
        %v816 = vpack.c.bf16 %v812, %v810
        %v817 = vld [vmem:[#allocation11] sm:$0xf]
        %v818 = vld [vmem:[#allocation11 + $0x4] sm:$0xf]
        %v819 = vld [vmem:[#allocation11 + $0x8] sm:$0xf]
        %v820 = vld [vmem:[#allocation11 + $0xc] sm:$0xf]
        %825 = vrot.lane.b32.xlu0 %v813, 1
        %v826 = vpop.permute.xlu0 %825
        %827 = vrot.lane.b32.xlu0 %v814, 1
        %v828 = vpop.permute.xlu0 %827
        %829 = vrot.lane.b32.xlu0 %v815, 1
        %v830 = vpop.permute.xlu0 %829
        %831 = vrot.lane.b32.xlu0 %v816, 1
        %v832 = vpop.permute.xlu0 %831
        %v833 = vsel %vm671, %v826, %v828
        %v834 = vsel %vm671, %v830, %v832
        %v838 = vsel %vm674, 0, %v826
        %v841 = vsel %vm674, 0, %v830
        %843 = vrot.lane.b32.xlu0 %v813, 127
        %v844 = vpop.permute.xlu0 %843
        %845 = vrot.lane.b32.xlu0 %v814, 127
        %v846 = vpop.permute.xlu0 %845
        %847 = vrot.lane.b32.xlu0 %v815, 127
        %v848 = vpop.permute.xlu0 %847
        %849 = vrot.lane.b32.xlu0 %v816, 127
        %v850 = vpop.permute.xlu0 %849
        %v851 = vsel %vm441, %v844, %v846
        %v852 = vsel %vm441, %v848, %v850
        %v856 = vsel %vm685, %v846, 0
        %v859 = vsel %vm685, %v850, 0
        %v865 = vunpack.c.l.b16 %v817
        %v866 = vunpack.c.l.b16 %v818
        %v867 = vunpack.c.l.b16 %v819
        %v868 = vunpack.c.l.b16 %v820
        %v869 = vpack.c.b16 %v866, %v865
        %v870 = vpack.c.b16 %v868, %v867
        %vm871 = vcmask 793600
        %v873 = vsel %vm871, %v869, 0
        %v876 = vsel %vm871, %v870, 0
        %878 = vmatprep.subr.bf16.mxu0 %v833
        %879 = vmatpush1.bf16.msra.mxu0 %v838
        %880 = vmatprep.subr.bf16.mxu0 %v834
        %881 = vmatpush1.bf16.msra.mxu0 %v841
        %882 = vmatprep.subr.bf16.mxu0 %v814
        %883 = vmatpush1.bf16.msra.mxu0 %v813
        %884 = vmatprep.subr.bf16.mxu0 %v816
        %885 = vmatpush1.bf16.msra.mxu0 %v815
        %886 = vmatprep.subr.bf16.mxu0 %v856
        %887 = vmatpush1.bf16.msra.mxu0 %v851
        %888 = vmatprep.subr.bf16.mxu0 %v859
        %889 = vmatpush1.bf16.msra.mxu0 %v852
        %890 = vmatprep.subr.bf16.mxu0 %v710
        %891 = vmatpush1.bf16.msra.mxu0 %v710
        %892 = vmatprep.subr.bf16.mxu0 0
        %893 = vmatpush1.bf16.msra.mxu0 0
        %894 = vmatprep.subr.bf16.mxu0 0
        %895 = vmatpush1.bf16.msra.mxu0 0
        %896 = vmatprep.subr.bf16.mxu0 0
        %897 = vmatpush1.bf16.msra.mxu0 0
        %898 = vmatprep.subr.bf16.mxu0 0
        %899 = vmatpush1.bf16.msra.mxu0 0
        %900 = vmatprep.subr.bf16.mxu0 0
        %901 = vmatpush1.bf16.msra.mxu0 0
        %902 = vmatprep.subr.bf16.mxu0 0
        %903 = vmatpush1.bf16.msra.mxu0 0
        %904 = vmatprep.subr.bf16.mxu0 0
        %905 = vmatpush1.bf16.msra.mxu0 0
        %906 = vmatprep.subr.bf16.mxu0 0
        %907 = vmatpush1.bf16.msra.mxu0 0
        %908 = vmatprep.subr.bf16.mxu0 0
        %909 = vmatpush1.bf16.msra.mxu0 0
        %910 = vmatprep.mubr.bf16.mxu0 0
        %911 = vmatmul.mubr.bf16.gmra.mrb[0].mxu0 %v873
        %v912 = vpop.f32.mrb[0].mxu0
        %v913 = vadd.f32 0.0, %v912
        %v914 = vpop.f32.mrb[0].mxu0
        %v915 = vadd.f32 0.0, %v914
        %v916 = vpop.f32.mrb[0].mxu0
        %v917 = vadd.f32 0.0, %v916
        %v918 = vpop.f32.mrb[0].mxu0
        %v919 = vadd.f32 0.0, %v918
        %920 = vmatprep.mubr.bf16.mxu0 0
        %921 = vmatmul.mubr.bf16.gmra.mrb[0].mxu0 %v876
        %v922 = vpop.f32.mrb[0].mxu0
        %v923 = vadd.f32 0.0, %v922
        %v924 = vpop.f32.mrb[0].mxu0
        %v925 = vadd.f32 0.0, %v924
        %v926 = vpop.f32.mrb[0].mxu0
        %v927 = vadd.f32 0.0, %v926
        %v928 = vpop.f32.mrb[0].mxu0
        %v929 = vadd.f32 0.0, %v928
        %930 = vdwg.mxu0
        %v931 = vadd.f32 %v747, %v913
        %v932 = vadd.f32 %v749, %v915
        %v933 = vadd.f32 %v751, %v917
        %v934 = vadd.f32 %v753, %v919
        %v935 = vadd.f32 %v757, %v923
        %v936 = vadd.f32 %v759, %v925
        %v937 = vadd.f32 %v761, %v927
        %v938 = vadd.f32 %v763, %v929
        %s939 = scalar_lea.vmem [#allocation13], 32
        %v940 = vld [vmem:[%s939] sm:$0xff]
        %v941 = vld [vmem:[%s939 + $0x8] sm:$0xff]
        %v942 = vld [vmem:[%s939 + $0x10] sm:$0xff]
        %v943 = vld [vmem:[%s939 + $0x18] sm:$0xff]
        %vm944 = vcmp.ge.f32.partialorder %v931, 0.0
        %vm945 = vcmp.ge.f32.partialorder %v932, 0.0
        %vm946 = vcmp.ge.f32.partialorder %v933, 0.0
        %vm947 = vcmp.ge.f32.partialorder %v934, 0.0
        %vm948 = vcmp.ge.f32.partialorder %v935, 0.0
        %vm949 = vcmp.ge.f32.partialorder %v936, 0.0
        %vm950 = vcmp.ge.f32.partialorder %v937, 0.0
        %vm951 = vcmp.ge.f32.partialorder %v938, 0.0
        %953 = vset.pattern.permute.xlu0 0
        %954 = vperm.xlu0 %953, %v940
        %v955 = vpop.permute.xlu0 %954
        %958 = vset.pattern.permute.xlu0 0
        %959 = vperm.xlu0 %958, %v941
        %v960 = vpop.permute.xlu0 %959
        %963 = vset.pattern.permute.xlu0 0
        %964 = vperm.xlu0 %963, %v942
        %v965 = vpop.permute.xlu0 %964
        %968 = vset.pattern.permute.xlu0 0
        %969 = vperm.xlu0 %968, %v943
        %v970 = vpop.permute.xlu0 %969
        %v972 = vmul.f32 %v955, %v931
        %v973 = vmul.f32 %v955, %v932
        %v974 = vmul.f32 %v960, %v933
        %v975 = vmul.f32 %v960, %v934
        %v976 = vmul.f32 %v965, %v935
        %v977 = vmul.f32 %v965, %v936
        %v978 = vmul.f32 %v970, %v937
        %v979 = vmul.f32 %v970, %v938
        %v980 = vsel %vm944, %v931, %v972
        %v981 = vsel %vm945, %v932, %v973
        %v982 = vsel %vm946, %v933, %v974
        %v983 = vsel %vm947, %v934, %v975
        %v984 = vsel %vm948, %v935, %v976
        %v985 = vsel %vm949, %v936, %v977
        %v986 = vsel %vm950, %v937, %v978
        %v987 = vsel %vm951, %v938, %v979
        %v988 = vpack.c.bf16 %v982, %v980
        %v989 = vpack.c.bf16 %v983, %v981
        %v990 = vpack.c.bf16 %v986, %v984
        %v991 = vpack.c.bf16 %v987, %v985
        %s992 = scalar_lea.vmem [#allocation11], 16
        %v993 = vld [vmem:[%s992] sm:$0xf]
        %v994 = vld [vmem:[%s992 + $0x4] sm:$0xf]
        %v995 = vld [vmem:[%s992 + $0x8] sm:$0xf]
        %v996 = vld [vmem:[%s992 + $0xc] sm:$0xf]
        %1001 = vrot.lane.b32.xlu0 %v988, 2
        %v1002 = vpop.permute.xlu0 %1001
        %1003 = vrot.lane.b32.xlu0 %v989, 2
        %v1004 = vpop.permute.xlu0 %1003
        %1005 = vrot.lane.b32.xlu0 %v990, 2
        %v1006 = vpop.permute.xlu0 %1005
        %1007 = vrot.lane.b32.xlu0 %v991, 2
        %v1008 = vpop.permute.xlu0 %1007
        %vm1009 = vcmask 15360
        %v1010 = vsel %vm1009, %v1002, %v1004
        %v1011 = vsel %vm1009, %v1006, %v1008
        %vm1014 = vcmask 15360
        %v1016 = vsel %vm1014, 0, %v1002
        %v1019 = vsel %vm1014, 0, %v1006
        %1021 = vrot.lane.b32.xlu0 %v988, 126
        %v1022 = vpop.permute.xlu0 %1021
        %1023 = vrot.lane.b32.xlu0 %v989, 126
        %v1024 = vpop.permute.xlu0 %1023
        %1025 = vrot.lane.b32.xlu0 %v990, 126
        %v1026 = vpop.permute.xlu0 %1025
        %1027 = vrot.lane.b32.xlu0 %v991, 126
        %v1028 = vpop.permute.xlu0 %1027
        %vm1029 = vcmask 1031168
        %v1030 = vsel %vm1029, %v1022, %v1024
        %v1031 = vsel %vm1029, %v1026, %v1028
        %vm1034 = vcmask 1031168
        %v1036 = vsel %vm1034, %v1024, 0
        %v1039 = vsel %vm1034, %v1028, 0
        %v1045 = vunpack.c.l.b16 %v993
        %v1046 = vunpack.c.l.b16 %v994
        %v1047 = vunpack.c.l.b16 %v995
        %v1048 = vunpack.c.l.b16 %v996
        %v1049 = vpack.c.b16 %v1046, %v1045
        %v1050 = vpack.c.b16 %v1048, %v1047
        %v1052 = vsel %vm871, %v1049, 0
        %v1055 = vsel %vm871, %v1050, 0
        %1057 = vmatprep.subr.bf16.mxu0 %v1010
        %1058 = vmatpush1.bf16.msra.mxu0 %v1016
        %1059 = vmatprep.subr.bf16.mxu0 %v1011
        %1060 = vmatpush1.bf16.msra.mxu0 %v1019
        %1061 = vmatprep.subr.bf16.mxu0 %v989
        %1062 = vmatpush1.bf16.msra.mxu0 %v988
        %1063 = vmatprep.subr.bf16.mxu0 %v991
        %1064 = vmatpush1.bf16.msra.mxu0 %v990
        %1065 = vmatprep.subr.bf16.mxu0 %v1036
        %1066 = vmatpush1.bf16.msra.mxu0 %v1030
        %1067 = vmatprep.subr.bf16.mxu0 %v1039
        %1068 = vmatpush1.bf16.msra.mxu0 %v1031
        %1069 = vmatprep.subr.bf16.mxu0 %v710
        %1070 = vmatpush1.bf16.msra.mxu0 %v710
        %1071 = vmatprep.subr.bf16.mxu0 0
        %1072 = vmatpush1.bf16.msra.mxu0 0
        %1073 = vmatprep.subr.bf16.mxu0 0
        %1074 = vmatpush1.bf16.msra.mxu0 0
        %1075 = vmatprep.subr.bf16.mxu0 0
        %1076 = vmatpush1.bf16.msra.mxu0 0
        %1077 = vmatprep.subr.bf16.mxu0 0
        %1078 = vmatpush1.bf16.msra.mxu0 0
        %1079 = vmatprep.subr.bf16.mxu0 0
        %1080 = vmatpush1.bf16.msra.mxu0 0
        %1081 = vmatprep.subr.bf16.mxu0 0
        %1082 = vmatpush1.bf16.msra.mxu0 0
        %1083 = vmatprep.subr.bf16.mxu0 0
        %1084 = vmatpush1.bf16.msra.mxu0 0
        %1085 = vmatprep.subr.bf16.mxu0 0
        %1086 = vmatpush1.bf16.msra.mxu0 0
        %1087 = vmatprep.subr.bf16.mxu0 0
        %1088 = vmatpush1.bf16.msra.mxu0 0
        %1089 = vmatprep.mubr.bf16.mxu0 0
        %1090 = vmatmul.mubr.bf16.gmra.mrb[0].mxu0 %v1052
        %v1091 = vpop.f32.mrb[0].mxu0
        %v1092 = vadd.f32 0.0, %v1091
        %v1093 = vpop.f32.mrb[0].mxu0
        %v1094 = vadd.f32 0.0, %v1093
        %v1095 = vpop.f32.mrb[0].mxu0
        %v1096 = vadd.f32 0.0, %v1095
        %v1097 = vpop.f32.mrb[0].mxu0
        %v1098 = vadd.f32 0.0, %v1097
        %1099 = vmatprep.mubr.bf16.mxu0 0
        %1100 = vmatmul.mubr.bf16.gmra.mrb[0].mxu0 %v1055
        %v1101 = vpop.f32.mrb[0].mxu0
        %v1102 = vadd.f32 0.0, %v1101
        %v1103 = vpop.f32.mrb[0].mxu0
        %v1104 = vadd.f32 0.0, %v1103
        %v1105 = vpop.f32.mrb[0].mxu0
        %v1106 = vadd.f32 0.0, %v1105
        %v1107 = vpop.f32.mrb[0].mxu0
        %v1108 = vadd.f32 0.0, %v1107
        %1109 = vdwg.mxu0
        %v1110 = vadd.f32 %v931, %v1092
        %v1111 = vadd.f32 %v932, %v1094
        %v1112 = vadd.f32 %v933, %v1096
        %v1113 = vadd.f32 %v934, %v1098
        %v1114 = vadd.f32 %v935, %v1102
        %v1115 = vadd.f32 %v936, %v1104
        %v1116 = vadd.f32 %v937, %v1106
        %v1117 = vadd.f32 %v938, %v1108
        %s1118 = scalar_lea.vmem [#allocation13], 64
        %v1119 = vld [vmem:[%s1118] sm:$0xff]
        %v1120 = vld [vmem:[%s1118 + $0x8] sm:$0xff]
        %v1121 = vld [vmem:[%s1118 + $0x10] sm:$0xff]
        %v1122 = vld [vmem:[%s1118 + $0x18] sm:$0xff]
        %vm1123 = vcmp.ge.f32.partialorder %v1110, 0.0
        %vm1124 = vcmp.ge.f32.partialorder %v1111, 0.0
        %vm1125 = vcmp.ge.f32.partialorder %v1112, 0.0
        %vm1126 = vcmp.ge.f32.partialorder %v1113, 0.0
        %vm1127 = vcmp.ge.f32.partialorder %v1114, 0.0
        %vm1128 = vcmp.ge.f32.partialorder %v1115, 0.0
        %vm1129 = vcmp.ge.f32.partialorder %v1116, 0.0
        %vm1130 = vcmp.ge.f32.partialorder %v1117, 0.0
        %1132 = vset.pattern.permute.xlu0 0
        %1133 = vperm.xlu0 %1132, %v1119
        %v1134 = vpop.permute.xlu0 %1133
        %1137 = vset.pattern.permute.xlu0 0
        %1138 = vperm.xlu0 %1137, %v1120
        %v1139 = vpop.permute.xlu0 %1138
        %1142 = vset.pattern.permute.xlu0 0
        %1143 = vperm.xlu0 %1142, %v1121
        %v1144 = vpop.permute.xlu0 %1143
        %1147 = vset.pattern.permute.xlu0 0
        %1148 = vperm.xlu0 %1147, %v1122
        %v1149 = vpop.permute.xlu0 %1148
        %v1151 = vmul.f32 %v1134, %v1110
        %v1152 = vmul.f32 %v1134, %v1111
        %v1153 = vmul.f32 %v1139, %v1112
        %v1154 = vmul.f32 %v1139, %v1113
        %v1155 = vmul.f32 %v1144, %v1114
        %v1156 = vmul.f32 %v1144, %v1115
        %v1157 = vmul.f32 %v1149, %v1116
        %v1158 = vmul.f32 %v1149, %v1117
        %v1159 = vsel %vm1123, %v1110, %v1151
        %v1160 = vsel %vm1124, %v1111, %v1152
        %v1161 = vsel %vm1125, %v1112, %v1153
        %v1162 = vsel %vm1126, %v1113, %v1154
        %v1163 = vsel %vm1127, %v1114, %v1155
        %v1164 = vsel %vm1128, %v1115, %v1156
        %v1165 = vsel %vm1129, %v1116, %v1157
        %v1166 = vsel %vm1130, %v1117, %v1158
        %v1167 = vpack.c.bf16 %v1161, %v1159
        %v1168 = vpack.c.bf16 %v1162, %v1160
        %v1169 = vpack.c.bf16 %v1165, %v1163
        %v1170 = vpack.c.bf16 %v1166, %v1164
        %s1171 = scalar_lea.vmem [#allocation11], 32
        %v1172 = vld [vmem:[%s1171] sm:$0xf]
        %v1173 = vld [vmem:[%s1171 + $0x4] sm:$0xf]
        %v1174 = vld [vmem:[%s1171 + $0x8] sm:$0xf]
        %v1175 = vld [vmem:[%s1171 + $0xc] sm:$0xf]
        %1180 = vrot.lane.b32.xlu0 %v1167, 4
        %v1181 = vpop.permute.xlu0 %1180
        %1182 = vrot.lane.b32.xlu0 %v1168, 4
        %v1183 = vpop.permute.xlu0 %1182
        %1184 = vrot.lane.b32.xlu0 %v1169, 4
        %v1185 = vpop.permute.xlu0 %1184
        %1186 = vrot.lane.b32.xlu0 %v1170, 4
        %v1187 = vpop.permute.xlu0 %1186
        %vm1188 = vcmask 31744
        %v1189 = vsel %vm1188, %v1181, %v1183
        %v1190 = vsel %vm1188, %v1185, %v1187
        %vm1193 = vcmask 31744
        %v1195 = vsel %vm1193, 0, %v1181
        %v1198 = vsel %vm1193, 0, %v1185
        %1200 = vrot.lane.b32.xlu0 %v1167, 124
        %v1201 = vpop.permute.xlu0 %1200
        %1202 = vrot.lane.b32.xlu0 %v1168, 124
        %v1203 = vpop.permute.xlu0 %1202
        %1204 = vrot.lane.b32.xlu0 %v1169, 124
        %v1205 = vpop.permute.xlu0 %1204
        %1206 = vrot.lane.b32.xlu0 %v1170, 124
        %v1207 = vpop.permute.xlu0 %1206
        %vm1208 = vcmask 1014784
        %v1209 = vsel %vm1208, %v1201, %v1203
        %v1210 = vsel %vm1208, %v1205, %v1207
        %vm1213 = vcmask 1014784
        %v1215 = vsel %vm1213, %v1203, 0
        %v1218 = vsel %vm1213, %v1207, 0
        %v1224 = vunpack.c.l.b16 %v1172
        %v1225 = vunpack.c.l.b16 %v1173
        %v1226 = vunpack.c.l.b16 %v1174
        %v1227 = vunpack.c.l.b16 %v1175
        %v1228 = vpack.c.b16 %v1225, %v1224
        %v1229 = vpack.c.b16 %v1227, %v1226
        %v1231 = vsel %vm871, %v1228, 0
        %v1234 = vsel %vm871, %v1229, 0
        %1236 = vmatprep.subr.bf16.mxu0 %v1189
        %1237 = vmatpush1.bf16.msra.mxu0 %v1195
        %1238 = vmatprep.subr.bf16.mxu0 %v1190
        %1239 = vmatpush1.bf16.msra.mxu0 %v1198
        %1240 = vmatprep.subr.bf16.mxu0 %v1168
        %1241 = vmatpush1.bf16.msra.mxu0 %v1167
        %1242 = vmatprep.subr.bf16.mxu0 %v1170
        %1243 = vmatpush1.bf16.msra.mxu0 %v1169
        %1244 = vmatprep.subr.bf16.mxu0 %v1215
        %1245 = vmatpush1.bf16.msra.mxu0 %v1209
        %1246 = vmatprep.subr.bf16.mxu0 %v1218
        %1247 = vmatpush1.bf16.msra.mxu0 %v1210
        %1248 = vmatprep.subr.bf16.mxu0 %v710
        %1249 = vmatpush1.bf16.msra.mxu0 %v710
        %1250 = vmatprep.subr.bf16.mxu0 0
        %1251 = vmatpush1.bf16.msra.mxu0 0
        %1252 = vmatprep.subr.bf16.mxu0 0
        %1253 = vmatpush1.bf16.msra.mxu0 0
        %1254 = vmatprep.subr.bf16.mxu0 0
        %1255 = vmatpush1.bf16.msra.mxu0 0
        %1256 = vmatprep.subr.bf16.mxu0 0
        %1257 = vmatpush1.bf16.msra.mxu0 0
        %1258 = vmatprep.subr.bf16.mxu0 0
        %1259 = vmatpush1.bf16.msra.mxu0 0
        %1260 = vmatprep.subr.bf16.mxu0 0
        %1261 = vmatpush1.bf16.msra.mxu0 0
        %1262 = vmatprep.subr.bf16.mxu0 0
        %1263 = vmatpush1.bf16.msra.mxu0 0
        %1264 = vmatprep.subr.bf16.mxu0 0
        %1265 = vmatpush1.bf16.msra.mxu0 0
        %1266 = vmatprep.subr.bf16.mxu0 0
        %1267 = vmatpush1.bf16.msra.mxu0 0
        %1268 = vmatprep.mubr.bf16.mxu0 0
        %1269 = vmatmul.mubr.bf16.gmra.mrb[0].mxu0 %v1231
        %v1270 = vpop.f32.mrb[0].mxu0
        %v1271 = vadd.f32 0.0, %v1270
        %v1272 = vpop.f32.mrb[0].mxu0
        %v1273 = vadd.f32 0.0, %v1272
        %v1274 = vpop.f32.mrb[0].mxu0
        %v1275 = vadd.f32 0.0, %v1274
        %v1276 = vpop.f32.mrb[0].mxu0
        %v1277 = vadd.f32 0.0, %v1276
        %1278 = vmatprep.mubr.bf16.mxu0 0
        %1279 = vmatmul.mubr.bf16.gmra.mrb[0].mxu0 %v1234
        %v1280 = vpop.f32.mrb[0].mxu0
        %v1281 = vadd.f32 0.0, %v1280
        %v1282 = vpop.f32.mrb[0].mxu0
        %v1283 = vadd.f32 0.0, %v1282
        %v1284 = vpop.f32.mrb[0].mxu0
        %v1285 = vadd.f32 0.0, %v1284
        %v1286 = vpop.f32.mrb[0].mxu0
        %v1287 = vadd.f32 0.0, %v1286
        %1288 = vdwg.mxu0
        %v1289 = vadd.f32 %v1110, %v1271
        %v1290 = vadd.f32 %v1111, %v1273
        %v1291 = vadd.f32 %v1112, %v1275
        %v1292 = vadd.f32 %v1113, %v1277
        %v1293 = vadd.f32 %v1114, %v1281
        %v1294 = vadd.f32 %v1115, %v1283
        %v1295 = vadd.f32 %v1116, %v1285
        %v1296 = vadd.f32 %v1117, %v1287
        %1297 = vst [vmem:[%s414] sm:$0xff] %v1289
        %1298 = vst [vmem:[%s414 + $0x8] sm:$0xff] %v1290
        %1299 = vst [vmem:[%s414 + $0x10] sm:$0xff] %v1291
        %1300 = vst [vmem:[%s414 + $0x18] sm:$0xff] %v1292
        %1301 = vst [vmem:[%s414 + $0x20] sm:$0xff] %v1293
        %1302 = vst [vmem:[%s414 + $0x28] sm:$0xff] %v1294
        %1303 = vst [vmem:[%s414 + $0x30] sm:$0xff] %v1295
        %1304 = vst [vmem:[%s414 + $0x38] sm:$0xff] %v1296
        %s1305 = sand.u32 %s208, 1
        %s1306 = scalar_lea.sflag [#allocation4], %s1305
        %s1307 = sand.u32 %s208, 1
        %s1308 = smul.addr %s1307, 64
        %s1309 = scalar_lea.vmem [#allocation14], %s1308
        // Predicated region
        $region77: #{_forward.1} parent=47 // pred_check
          %p1310 = pneg %p218
        $region78: #{_forward.1} parent=47 // pred_check_branch
          %1312 = sbr.rel (%p1310) target = $region80
        $region79: #{_forward.1} parent=47 // pred_region
          %s1313 = smul.u32 2, %s34
          %s1315 = ssub.s32 1024, 1024
          %1316 = vsyncadd %s1306, %s1315
          %s1317 = smul.addr %s33, 8
          %s1318 = sadd.s32 %s1313, %s1317
          %s1319 = smul.addr %s1318, 128
          %s1320 = scalar_lea.hbm %s7, %s1319
          %s1321 = sshll.u32 %s1309, 4
          %s1322 = int_to_ptr.vmem [resolvable:$true] %s1321
          %1327 = dma.vmem_to_hbm [thread:$0]  %s1322, 1024, %s1320, %s1306, 256, 256, 16
        $region80: #{_forward.1} parent=47 // pred_fallthru
          _
      $region48: #{_forward.1} parent=5 // pred_fallthru
        _
      %p1328 = scmp.le.s32.totalorder 2, %s24
      // Predicated region
      $region81: #{_forward.1} parent=5 // pred_check
        %p1329 = pneg %p1328
      $region82: #{_forward.1} parent=5 // pred_check_branch
        %1331 = sbr.rel (%p1329) target = $region84
      $region83: #{_forward.1} parent=5 // pred_region
        %s1332 = ssub.s32 %s24, 2
        // Predicated region
        $region85: #{_forward.1} parent=83 // pred_check
          %p1333 = pneg %p224
        $region86: #{_forward.1} parent=83 // pred_check_branch
          %1335 = sbr.rel (%p1333) target = $region88
        $region87: #{_forward.1} parent=83 // pred_region
          %s1336 = sand.u32 %s209, 1
          %s1337 = scalar_lea.sflag [#allocation4], %s1336
          %s1338 = sand.u32 %s209, 1
          %s1339 = smul.addr %s1338, 64
          %s1340 = scalar_lea.vmem [#allocation14], %s1339
          %1341 = dma.done %s1337, 1024
        $region88: #{_forward.1} parent=83 // pred_fallthru
          _
      $region84: #{_forward.1} parent=5 // pred_fallthru
        _
    $region6: #{_forward.1} parent=1 // loop_footer
      %s28 = sadd.s32 1, %s24
    $region7: #{_forward.1} parent=1 // loop_footer_branch
      %23 = sbr.rel target = $region3
    $region8: #{_forward.1} parent=1 // loop_exit
      _
    %1342 = vsyncpa [#allocation3], 1
    %s1343 = scalar_lea.sflag [#allocation3], 1
    %1344 = vsyncpa %s1343, 1
    %1345 = vsyncpa [#allocation6], 1
    %s1346 = scalar_lea.sflag [#allocation6], 1
    %1347 = vsyncpa %s1346, 1
    %1348 = vsyncpa [#allocation9], 1
    %1349 = vsyncpa [#allocation12], 1
    %1350 = vsyncpa [#allocation4], 1
    %s1351 = scalar_lea.sflag [#allocation4], 1
    %1352 = vsyncpa %s1351, 1

// kernel: _forward.1
$region0: #{_forward.1}
  #allocation0 [shape = 'u32[]', space=smem, size = 0x4, offset = 0x4, fixed_abs, tag = 'smem constant byte address 0x4 - core index']
  #allocation1 [shape = 'u32[144,128]{1,0:T(1,128)}', space=vmem, size = 0x12000, scoped, tag = 'internal scratch']
  %s0 = inlined_call_operand.hbm [shape: f32[2,1,1], index: 0, kind: input, shape index: {}]
  %s1 = inlined_call_operand.hbm [shape: f32[2,8,257], index: 1, kind: input, shape index: {}]
  %s2 = inlined_call_operand.hbm [shape: bf16[32,16], index: 2, kind: input, shape index: {}]
  %s3 = inlined_call_operand.hbm [shape: f32[16,16], index: 3, kind: input, shape index: {}]
  %s4 = inlined_call_operand.hbm [shape: bf16[32,49], index: 4, kind: input, shape index: {}]
  %s5 = inlined_call_operand.hbm [shape: bf16[3,32,97], index: 5, kind: input, shape index: {}]
  %s6 = inlined_call_operand.hbm [shape: f32[3,32,1], index: 6, kind: input, shape index: {}]
  %s7 = inlined_call_operand.hbm [shape: f32[2,32,256], index: 7, kind: output, shape index: {}]
  %s8 = sld [smem:[#allocation0]]
  $region89: #{_forward.1} parent=0
    _
  %s10 = ssub.s32 1, %s8
  %s11 = scalar_select 0, %s10, %s8
  $region1: #{_forward.1} parent=0
    #allocation2 [shape = 'u8[1024]{0}', space=vmem, size = 0x400, scoped, tag = 'input window, operand 0']
    #allocation3 [shape = 's32[2]{0}', space=sflag, size = 0x8, scoped, tag = 'scoped memory for _forward.1']
    #allocation4 [shape = 's32[2]{0}', space=sflag, size = 0x8, scoped, tag = 'scoped memory for _forward.1']
    #allocation5 [shape = 'u8[24576]{0}', space=vmem, size = 0x6000, scoped, tag = 'input window, operand 1']
    #allocation6 [shape = 's32[2]{0}', space=sflag, size = 0x8, scoped, tag = 'scoped memory for _forward.1']
    #allocation7 [shape = 'u8[8192]{0}', space=vmem, size = 0x2000, scoped, tag = 'input window, operand 2, single buffered']
    #allocation8 [shape = 'u8[8192]{0}', space=vmem, size = 0x2000, scoped, tag = 'input window, operand 3, single buffered']
    #allocation9 [shape = 's32[1]{0}', space=sflag, size = 0x4, scoped, tag = 'scoped memory for _forward.1']
    #allocation10 [shape = 'u8[8192]{0}', space=vmem, size = 0x2000, scoped, tag = 'input window, operand 4, single buffered']
    #allocation11 [shape = 'u8[24576]{0}', space=vmem, size = 0x6000, scoped, tag = 'input window, operand 5, single buffered']
    #allocation12 [shape = 's32[1]{0}', space=sflag, size = 0x4, scoped, tag = 'scoped memory for _forward.1']
    #allocation13 [shape = 'u8[49152]{0}', space=vmem, size = 0xc000, scoped, tag = 'input window, operand 6, single buffered']
    #allocation14 [shape = 'u8[65536]{0}', space=vmem, size = 0x10000, scoped, tag = 'output window, operand 0']
    %12 = vsyncpa [#allocation3], 0
    %s13 = scalar_lea.sflag [#allocation3], 1
    %14 = vsyncpa %s13, 0
    %15 = vsyncpa [#allocation6], 0
    %s16 = scalar_lea.sflag [#allocation6], 1
    %17 = vsyncpa %s16, 0
    %18 = vsyncpa [#allocation9], 0
    %19 = vsyncpa [#allocation12], 0
    %20 = vsyncpa [#allocation4], 0
    %s21 = scalar_lea.sflag [#allocation4], 1
    %22 = vsyncpa %s21, 0
    loop: start=0, step=1, limit=4
    $region2: #{_forward.1} parent=1 // loop_pre_header
      _
    $region3: #{_forward.1} parent=1 // loop_header
      %s24 = sphi 0, %s28
      %p25 = scmp.ge.s32.totalorder %s24, 4
      %s31 = sphi 0, %s43
      %s32 = sphi 0, %s39
      %s33 = sphi 0, %s31
      %s34 = sphi 0, %s32
      %s35 = sphi 0, %s33
      %s36 = sphi 0, %s34
      %s46 = sphi 0, %s48
      %s49 = sphi 0, %s46
      %s50 = sphi 0, %s49
      %s66 = sphi 0, %s50
      %s72 = sphi 0, %s74
      %s75 = sphi 0, %s72
      %s76 = sphi 0, %s75
      %s92 = sphi 0, %s76
      %s96 = sphi 0, %s96
      %s98 = sphi 0, %s96
      %s99 = sphi 0, %s98
      %s113 = sphi 0, %s99
      %s117 = sphi 0, %s117
      %s119 = sphi 0, %s117
      %s120 = sphi 0, %s119
      %s134 = sphi 0, %s120
      %s138 = sphi 0, %s138
      %s140 = sphi 0, %s138
      %s141 = sphi 0, %s140
      %s155 = sphi 0, %s141
      %s159 = sphi 0, %s159
      %s161 = sphi 0, %s159
      %s162 = sphi 0, %s161
      %s176 = sphi 0, %s162
      %s180 = sphi 0, %s180
      %s182 = sphi 0, %s180
      %s183 = sphi 0, %s182
      %s197 = sphi 0, %s183
      %s205 = sphi 0, %s207
      %s208 = sphi 0, %s205
      %s209 = sphi 0, %s208
      %s225 = sphi 0, %s209
    $region4: #{_forward.1} parent=1 // loop_header_branch
      %27 = sbr.rel (%p25) target = $region8
    $region5: #{_forward.1} parent=1 // loop_body
      %s29 = ssub.s32 %s24, 1
      %s30 = ssub.s32 %s24, 2
      %s37 = sadd.s32 1, %s32
      %p38 = scmp.ge.s32.totalorder %s37, 1
      %s39 = scalar_select %p38, 0, %s37
      %s40 = sadd.s32 1, %s31
      %s41 = scalar_select %p38, %s40, %s31
      %p42 = scmp.ge.s32.totalorder %s41, 2
      %s43 = scalar_select %p42, 0, %s41
      %s44 = ssub.s32 %s31, %s43
      %p45 = scmp.eq.s32.totalorder %s44, 0
      %s47 = sadd.s32 %s46, 1
      %s48 = scalar_select %p45, %s46, %s47
      %p51 = pneg %p45
      %p52 = scmp.eq.s32.totalorder %s24, 1
      %p53 = por %p51, %p52
      %p54 = scmp.ne.s32.totalorder %s46, %s49
      %p55 = scmp.eq.s32.totalorder %s24, 0
      %p56 = por %p54, %p55
      %p57 = scmp.ne.s32.totalorder %s46, %s49
      %p58 = scmp.eq.s32.totalorder %s29, 1
      %p59 = por %p57, %p58
      %p60 = scmp.ne.s32.totalorder %s49, %s50
      %p61 = scmp.eq.s32.totalorder %s29, 0
      %p62 = por %p60, %p61
      %p63 = scmp.ne.s32.totalorder %s49, %s50
      %p64 = scmp.eq.s32.totalorder %s30, 1
      %p65 = por %p63, %p64
      %p67 = scmp.ne.s32.totalorder %s50, %s66
      %p68 = scmp.eq.s32.totalorder %s30, 0
      %p69 = por %p67, %p68
      %s70 = ssub.s32 %s31, %s43
      %p71 = scmp.eq.s32.totalorder %s70, 0
      %s73 = sadd.s32 %s72, 1
      %s74 = scalar_select %p71, %s72, %s73
      %p77 = pneg %p71
      %p78 = scmp.eq.s32.totalorder %s24, 1
      %p79 = por %p77, %p78
      %p80 = scmp.ne.s32.totalorder %s72, %s75
      %p81 = scmp.eq.s32.totalorder %s24, 0
      %p82 = por %p80, %p81
      %p83 = scmp.ne.s32.totalorder %s72, %s75
      %p84 = scmp.eq.s32.totalorder %s29, 1
      %p85 = por %p83, %p84
      %p86 = scmp.ne.s32.totalorder %s75, %s76
      %p87 = scmp.eq.s32.totalorder %s29, 0
      %p88 = por %p86, %p87
      %p89 = scmp.ne.s32.totalorder %s75, %s76
      %p90 = scmp.eq.s32.totalorder %s30, 1
      %p91 = por %p89, %p90
      %p93 = scmp.ne.s32.totalorder %s76, %s92
      %p94 = scmp.eq.s32.totalorder %s30, 0
      %p95 = por %p93, %p94
      %s97 = sadd.s32 %s96, 1
      %p100 = scmp.eq.s32.totalorder %s24, 1
      %p101 = scmp.ne.s32.totalorder %s96, %s98
      %p102 = scmp.eq.s32.totalorder %s24, 0
      %p103 = por %p101, %p102
      %p104 = scmp.ne.s32.totalorder %s96, %s98
      %p105 = scmp.eq.s32.totalorder %s29, 1
      %p106 = por %p104, %p105
      %p107 = scmp.ne.s32.totalorder %s98, %s99
      %p108 = scmp.eq.s32.totalorder %s29, 0
      %p109 = por %p107, %p108
      %p110 = scmp.ne.s32.totalorder %s98, %s99
      %p111 = scmp.eq.s32.totalorder %s30, 1
      %p112 = por %p110, %p111
      %p114 = scmp.ne.s32.totalorder %s99, %s113
      %p115 = scmp.eq.s32.totalorder %s30, 0
      %p116 = por %p114, %p115
      %s118 = sadd.s32 %s117, 1
      %p121 = scmp.eq.s32.totalorder %s24, 1
      %p122 = scmp.ne.s32.totalorder %s117, %s119
      %p123 = scmp.eq.s32.totalorder %s24, 0
      %p124 = por %p122, %p123
      %p125 = scmp.ne.s32.totalorder %s117, %s119
      %p126 = scmp.eq.s32.totalorder %s29, 1
      %p127 = por %p125, %p126
      %p128 = scmp.ne.s32.totalorder %s119, %s120
      %p129 = scmp.eq.s32.totalorder %s29, 0
      %p130 = por %p128, %p129
      %p131 = scmp.ne.s32.totalorder %s119, %s120
      %p132 = scmp.eq.s32.totalorder %s30, 1
      %p133 = por %p131, %p132
      %p135 = scmp.ne.s32.totalorder %s120, %s134
      %p136 = scmp.eq.s32.totalorder %s30, 0
      %p137 = por %p135, %p136
      %s139 = sadd.s32 %s138, 1
      %p142 = scmp.eq.s32.totalorder %s24, 1
      %p143 = scmp.ne.s32.totalorder %s138, %s140
      %p144 = scmp.eq.s32.totalorder %s24, 0
      %p145 = por %p143, %p144
      %p146 = scmp.ne.s32.totalorder %s138, %s140
      %p147 = scmp.eq.s32.totalorder %s29, 1
      %p148 = por %p146, %p147
      %p149 = scmp.ne.s32.totalorder %s140, %s141
      %p150 = scmp.eq.s32.totalorder %s29, 0
      %p151 = por %p149, %p150
      %p152 = scmp.ne.s32.totalorder %s140, %s141
      %p153 = scmp.eq.s32.totalorder %s30, 1
      %p154 = por %p152, %p153
      %p156 = scmp.ne.s32.totalorder %s141, %s155
      %p157 = scmp.eq.s32.totalorder %s30, 0
      %p158 = por %p156, %p157
      %s160 = sadd.s32 %s159, 1
      %p163 = scmp.eq.s32.totalorder %s24, 1
      %p164 = scmp.ne.s32.totalorder %s159, %s161
      %p165 = scmp.eq.s32.totalorder %s24, 0
      %p166 = por %p164, %p165
      %p167 = scmp.ne.s32.totalorder %s159, %s161
      %p168 = scmp.eq.s32.totalorder %s29, 1
      %p169 = por %p167, %p168
      %p170 = scmp.ne.s32.totalorder %s161, %s162
      %p171 = scmp.eq.s32.totalorder %s29, 0
      %p172 = por %p170, %p171
      %p173 = scmp.ne.s32.totalorder %s161, %s162
      %p174 = scmp.eq.s32.totalorder %s30, 1
      %p175 = por %p173, %p174
      %p177 = scmp.ne.s32.totalorder %s162, %s176
      %p178 = scmp.eq.s32.totalorder %s30, 0
      %p179 = por %p177, %p178
      %s181 = sadd.s32 %s180, 1
      %p184 = scmp.eq.s32.totalorder %s24, 1
      %p185 = scmp.ne.s32.totalorder %s180, %s182
      %p186 = scmp.eq.s32.totalorder %s24, 0
      %p187 = por %p185, %p186
      %p188 = scmp.ne.s32.totalorder %s180, %s182
      %p189 = scmp.eq.s32.totalorder %s29, 1
      %p190 = por %p188, %p189
      %p191 = scmp.ne.s32.totalorder %s182, %s183
      %p192 = scmp.eq.s32.totalorder %s29, 0
      %p193 = por %p191, %p192
      %p194 = scmp.ne.s32.totalorder %s182, %s183
      %p195 = scmp.eq.s32.totalorder %s30, 1
      %p196 = por %p194, %p195
      %p198 = scmp.ne.s32.totalorder %s183, %s197
      %p199 = scmp.eq.s32.totalorder %s30, 0
      %p200 = por %p198, %p199
      %s201 = ssub.s32 %s31, %s43
      %s202 = ssub.s32 %s32, %s39
      %s203 = sor.u32 %s201, %s202
      %p204 = scmp.eq.s32.totalorder %s203, 0
      %s206 = sadd.s32 %s205, 1
      %s207 = scalar_select %p204, %s205, %s206
      %p210 = pneg %p204
      %p211 = scmp.eq.s32.totalorder %s24, 1
      %p212 = por %p210, %p211
      %p213 = scmp.ne.s32.totalorder %s205, %s208
      %p214 = scmp.eq.s32.totalorder %s24, 0
      %p215 = por %p213, %p214
      %p216 = scmp.ne.s32.totalorder %s205, %s208
      %p217 = scmp.eq.s32.totalorder %s29, 1
      %p218 = por %p216, %p217
      %p219 = scmp.ne.s32.totalorder %s208, %s209
      %p220 = scmp.eq.s32.totalorder %s29, 0
      %p221 = por %p219, %p220
      %p222 = scmp.ne.s32.totalorder %s208, %s209
      %p223 = scmp.eq.s32.totalorder %s30, 1
      %p224 = por %p222, %p223
      %p226 = scmp.ne.s32.totalorder %s209, %s225
      %p227 = scmp.eq.s32.totalorder %s30, 0
      %p228 = por %p226, %p227
      %p229 = scmp.le.s32.totalorder 1, %s24
      %p230 = scmp.lt.s32.totalorder %s24, 3
      %p231 = pnand %p229, %p230
      %p232 = pneg %p231
      // Predicated region
      $region9: #{_forward.1} parent=5 // pred_check
        _
      $region10: #{_forward.1} parent=5 // pred_check_branch
        %234 = sbr.rel (%p231) target = $region12
      $region11: #{_forward.1} parent=5 // pred_region
        %s235 = ssub.s32 %s24, 1
        // Predicated region
        $region13: #{_forward.1} parent=11 // pred_check
          %p236 = pneg %p109
        $region14: #{_forward.1} parent=11 // pred_check_branch
          %238 = sbr.rel (%p236) target = $region16
        $region15: #{_forward.1} parent=11 // pred_region
          %s240 = ssub.s32 256, 256
          %241 = vsyncadd [#allocation6], %s240
          %s242 = sshll.u32 [#allocation7], 4
          %s243 = int_to_ptr.vmem [resolvable:$true] %s242
          %248 = dma.hbm_to_vmem [thread:$0]  %s2, 256, %s243, [#allocation6], 64, 64, 4
        $region16: #{_forward.1} parent=11 // pred_fallthru
          _
        // Predicated region
        $region17: #{_forward.1} parent=11 // pred_check
          %p249 = pneg %p130
        $region18: #{_forward.1} parent=11 // pred_check_branch
          %251 = sbr.rel (%p249) target = $region20
        $region19: #{_forward.1} parent=11 // pred_region
          %s253 = ssub.s32 256, 256
          %254 = vsyncadd [#allocation9], %s253
          %s255 = sshll.u32 [#allocation8], 4
          %s256 = int_to_ptr.vmem [resolvable:$true] %s255
          %261 = dma.hbm_to_vmem [thread:$0]  %s3, 256, %s256, [#allocation9], 128, 128, 8
        $region20: #{_forward.1} parent=11 // pred_fallthru
          _
        // Predicated region
        $region21: #{_forward.1} parent=11 // pred_check
          %p262 = pneg %p151
        $region22: #{_forward.1} parent=11 // pred_check_branch
          %264 = sbr.rel (%p262) target = $region24
        $region23: #{_forward.1} parent=11 // pred_region
          %s266 = ssub.s32 256, 256
          %267 = vsyncadd [#allocation9], %s266
          %s268 = sshll.u32 [#allocation10], 4
          %s269 = int_to_ptr.vmem [resolvable:$true] %s268
          %274 = dma.hbm_to_vmem [thread:$0]  %s4, 256, %s269, [#allocation9], 64, 64, 4
        $region24: #{_forward.1} parent=11 // pred_fallthru
          _
        // Predicated region
        $region25: #{_forward.1} parent=11 // pred_check
          %p275 = pneg %p172
        $region26: #{_forward.1} parent=11 // pred_check_branch
          %277 = sbr.rel (%p275) target = $region28
        $region27: #{_forward.1} parent=11 // pred_region
          %s279 = ssub.s32 768, 768
          %280 = vsyncadd [#allocation12], %s279
          %s281 = sshll.u32 [#allocation11], 4
          %s282 = int_to_ptr.vmem [resolvable:$true] %s281
          %287 = dma.hbm_to_vmem [thread:$0]  %s5, 768, %s282, [#allocation12], 64, 64, 4
        $region28: #{_forward.1} parent=11 // pred_fallthru
          _
        // Predicated region
        $region29: #{_forward.1} parent=11 // pred_check
          %p288 = pneg %p193
        $region30: #{_forward.1} parent=11 // pred_check_branch
          %290 = sbr.rel (%p288) target = $region32
        $region31: #{_forward.1} parent=11 // pred_region
          %s292 = ssub.s32 1536, 1536
          %293 = vsyncadd [#allocation12], %s292
          %s294 = sshll.u32 [#allocation13], 4
          %s295 = int_to_ptr.vmem [resolvable:$true] %s294
          %300 = dma.hbm_to_vmem [thread:$0]  %s6, 1536, %s295, [#allocation12], 128, 128, 8
        $region32: #{_forward.1} parent=11 // pred_fallthru
          _
      $region12: #{_forward.1} parent=5 // pred_fallthru
        _
      %p301 = scmp.lt.s32.totalorder %s24, 2
      // Predicated region
      $region33: #{_forward.1} parent=5 // pred_check
        %p302 = pneg %p301
      $region34: #{_forward.1} parent=5 // pred_check_branch
        %304 = sbr.rel (%p302) target = $region36
      $region35: #{_forward.1} parent=5 // pred_region
        // Predicated region
        $region37: #{_forward.1} parent=35 // pred_check
          %p305 = pneg %p56
        $region38: #{_forward.1} parent=35 // pred_check_branch
          %307 = sbr.rel (%p305) target = $region40
        $region39: #{_forward.1} parent=35 // pred_region
          %s308 = sand.u32 %s46, 1
          %s309 = scalar_lea.sflag [#allocation3], %s308
          %s310 = sand.u32 %s46, 1
          %s311 = scalar_lea.vmem [#allocation2], %s310
          %s313 = ssub.s32 16, 16
          %314 = vsyncadd %s309, %s313
          %s315 = smul.addr %s31, 16
          %s316 = scalar_lea.hbm %s0, %s315
          %s318 = sshll.u32 %s311, 4
          %s319 = int_to_ptr.vmem [resolvable:$true] %s318
          %321 = dma.hbm_to_vmem [thread:$0]  %s316, 16, %s319, %s309
        $region40: #{_forward.1} parent=35 // pred_fallthru
          _
        // Predicated region
        $region41: #{_forward.1} parent=35 // pred_check
          %p322 = pneg %p82
        $region42: #{_forward.1} parent=35 // pred_check_branch
          %324 = sbr.rel (%p322) target = $region44
        $region43: #{_forward.1} parent=35 // pred_region
          %s325 = sand.u32 %s24, 1
          %s326 = scalar_lea.sflag [#allocation6], %s325
          %s327 = sand.u32 %s72, 1
          %s328 = smul.addr %s327, 24
          %s329 = scalar_lea.vmem [#allocation5], %s328
          %s331 = ssub.s32 384, 384
          %332 = vsyncadd %s326, %s331
          %s333 = smul.addr %s31, 3
          %s334 = smul.addr %s333, 128
          %s335 = scalar_lea.hbm %s1, %s334
          %s337 = sshll.u32 %s329, 4
          %s338 = int_to_ptr.vmem [resolvable:$true] %s337
          %340 = dma.hbm_to_vmem [thread:$0]  %s335, 384, %s338, %s326
        $region44: #{_forward.1} parent=35 // pred_fallthru
          _
      $region36: #{_forward.1} parent=5 // pred_fallthru
        _
      %p341 = scmp.le.s32.totalorder 1, %s24
      %p342 = scmp.lt.s32.totalorder %s24, 3
      %p343 = pnand %p341, %p342
      %p344 = pneg %p343
      // Predicated region
      $region45: #{_forward.1} parent=5 // pred_check
        _
      $region46: #{_forward.1} parent=5 // pred_check_branch
        %346 = sbr.rel (%p343) target = $region48
      $region47: #{_forward.1} parent=5 // pred_region
        %s347 = ssub.s32 %s24, 1
        %s348 = sand.u32 %s49, 1
        %s349 = scalar_lea.sflag [#allocation3], %s348
        %s350 = sand.u32 %s49, 1
        %s351 = scalar_lea.vmem [#allocation2], %s350
        // Predicated region
        $region49: #{_forward.1} parent=47 // pred_check
          %p352 = pneg %p62
        $region50: #{_forward.1} parent=47 // pred_check_branch
          %354 = sbr.rel (%p352) target = $region52
        $region51: #{_forward.1} parent=47 // pred_region
          %355 = dma.done %s349, 16
        $region52: #{_forward.1} parent=47 // pred_fallthru
          _
        %s356 = sand.u32 %s29, 1
        %s357 = scalar_lea.sflag [#allocation6], %s356
        %s358 = sand.u32 %s75, 1
        %s359 = smul.addr %s358, 24
        %s360 = scalar_lea.vmem [#allocation5], %s359
        // Predicated region
        $region53: #{_forward.1} parent=47 // pred_check
          %p361 = pneg %p88
        $region54: #{_forward.1} parent=47 // pred_check_branch
          %363 = sbr.rel (%p361) target = $region56
        $region55: #{_forward.1} parent=47 // pred_region
          %364 = dma.done %s357, 384
        $region56: #{_forward.1} parent=47 // pred_fallthru
          _
        // Predicated region
        $region57: #{_forward.1} parent=47 // pred_check
          %p365 = pneg %p109
        $region58: #{_forward.1} parent=47 // pred_check_branch
          %367 = sbr.rel (%p365) target = $region60
        $region59: #{_forward.1} parent=47 // pred_region
          %368 = dma.done [#allocation6], 256
        $region60: #{_forward.1} parent=47 // pred_fallthru
          _
        // Predicated region
        $region61: #{_forward.1} parent=47 // pred_check
          %p369 = pneg %p130
        $region62: #{_forward.1} parent=47 // pred_check_branch
          %371 = sbr.rel (%p369) target = $region64
        $region63: #{_forward.1} parent=47 // pred_region
          %372 = dma.done [#allocation9], 256
        $region64: #{_forward.1} parent=47 // pred_fallthru
          _
        // Predicated region
        $region65: #{_forward.1} parent=47 // pred_check
          %p373 = pneg %p151
        $region66: #{_forward.1} parent=47 // pred_check_branch
          %375 = sbr.rel (%p373) target = $region68
        $region67: #{_forward.1} parent=47 // pred_region
          %376 = dma.done [#allocation9], 256
        $region68: #{_forward.1} parent=47 // pred_fallthru
          _
        // Predicated region
        $region69: #{_forward.1} parent=47 // pred_check
          %p377 = pneg %p172
        $region70: #{_forward.1} parent=47 // pred_check_branch
          %379 = sbr.rel (%p377) target = $region72
        $region71: #{_forward.1} parent=47 // pred_region
          %380 = dma.done [#allocation12], 768
        $region72: #{_forward.1} parent=47 // pred_fallthru
          _
        // Predicated region
        $region73: #{_forward.1} parent=47 // pred_check
          %p381 = pneg %p193
        $region74: #{_forward.1} parent=47 // pred_check_branch
          %383 = sbr.rel (%p381) target = $region76
        $region75: #{_forward.1} parent=47 // pred_region
          %384 = dma.done [#allocation12], 1536
        $region76: #{_forward.1} parent=47 // pred_fallthru
          _
        %s385 = sand.u32 %s49, 1
        %s386 = scalar_lea.sflag [#allocation3], %s385
        %s387 = sand.u32 %s49, 1
        %s388 = scalar_lea.vmem [#allocation2], %s387
        %p389 = pneg %p62
        %p390 = pneg %p59
        %s391 = sand.u32 %s29, 1
        %s392 = scalar_lea.sflag [#allocation6], %s391
        %s393 = sand.u32 %s75, 1
        %s394 = smul.addr %s393, 24
        %s395 = scalar_lea.vmem [#allocation5], %s394
        %p396 = pneg %p88
        %p397 = pneg %p85
        %p398 = pneg %p109
        %p399 = pneg %p106
        %p400 = pneg %p130
        %p401 = pneg %p127
        %p402 = pneg %p151
        %p403 = pneg %p148
        %p404 = pneg %p172
        %p405 = pneg %p169
        %p406 = pneg %p193
        %p407 = pneg %p190
        %p408 = pneg %p221
        %p409 = pneg %p218
        %s410 = sand.u32 %s208, 1
        %s411 = scalar_lea.sflag [#allocation4], %s410
        %s412 = sand.u32 %s208, 1
        %s413 = smul.addr %s412, 64
        %s414 = scalar_lea.vmem [#allocation14], %s413
        %s415 = smul.u32 2, %s34
        %s418 = smul.u32 %s34, 256
        %s419 = sshra.s32 %s418, 7
        %s420 = sand.u32 %s418, 127
        %s421 = smul.addr %s419, 8
        %s422 = scalar_lea.vmem %s360, %s421 [#allocation5]
        %v423 = vld [vmem:[%s422] sm:$0xff]
        %v424 = vld [vmem:[%s422 + $0x8] sm:$0xff]
        %v425 = vld [vmem:[%s422 + $0x10] sm:$0xff]
        %v426 = vpack.c.bf16 %v423, %v423
        %v427 = vpack.c.bf16 %v424, %v424
        %v428 = vpack.c.bf16 %v425, %v425
        %v432 = vrot.slane %v426, 4
        %v433 = vrot.slane %v427, 4
        %v434 = vrot.slane %v428, 4
        %435 = vrot.lane.b32.xlu0 %v432, 127
        %v436 = vpop.permute.xlu0 %435
        %437 = vrot.lane.b32.xlu0 %v433, 127
        %v438 = vpop.permute.xlu0 %437
        %439 = vrot.lane.b32.xlu0 %v434, 127
        %v440 = vpop.permute.xlu0 %439
        %vm441 = vcmask 1039360
        %v442 = vsel %vm441, %v436, %v438
        %v443 = vsel %vm441, %v438, %v440
        %vm444 = vcmask 1043456
        %v447 = vsel %vm444, %v426, %v442
        %v451 = vsel %vm444, %v427, %v443
        %v453 = vld [vmem:[#allocation7] sm:$0xf]
        %v454 = vld [vmem:[#allocation7 + $0x4] sm:$0xf]
        %v455 = vld [vmem:[#allocation7 + $0x8] sm:$0xf]
        %v456 = vld [vmem:[#allocation7 + $0xc] sm:$0xf]
        %v461 = vunpack.c.l.b16 %v453
        %v462 = vunpack.c.l.b16 %v454
        %v463 = vunpack.c.l.b16 %v455
        %v464 = vunpack.c.l.b16 %v456
        %v465 = vpack.c.b16 %v462, %v461
        %v466 = vpack.c.b16 %v464, %v463
        %vm467 = vcmask 130048
        %v469 = vsel %vm467, %v465, 0
        %v472 = vsel %vm467, %v466, 0
        %474 = vmatprep.subr.bf16.mxu0 %v451
        %475 = vmatpush1.bf16.msra.mxu0 %v447
        %476 = vmatprep.subr.bf16.mxu0 0
        %477 = vmatpush1.bf16.msra.mxu0 0
        %478 = vmatprep.subr.bf16.mxu0 0
        %479 = vmatpush1.bf16.msra.mxu0 0
        %480 = vmatprep.subr.bf16.mxu0 0
        %481 = vmatpush1.bf16.msra.mxu0 0
        %482 = vmatprep.subr.bf16.mxu0 0
        %483 = vmatpush1.bf16.msra.mxu0 0
        %484 = vmatprep.subr.bf16.mxu0 0
        %485 = vmatpush1.bf16.msra.mxu0 0
        %486 = vmatprep.subr.bf16.mxu0 0
        %487 = vmatpush1.bf16.msra.mxu0 0
        %488 = vmatprep.subr.bf16.mxu0 0
        %489 = vmatpush1.bf16.msra.mxu0 0
        %490 = vmatprep.subr.bf16.mxu0 0
        %491 = vmatpush1.bf16.msra.mxu0 0
        %492 = vmatprep.subr.bf16.mxu0 0
        %493 = vmatpush1.bf16.msra.mxu0 0
        %494 = vmatprep.subr.bf16.mxu0 0
        %495 = vmatpush1.bf16.msra.mxu0 0
        %496 = vmatprep.subr.bf16.mxu0 0
        %497 = vmatpush1.bf16.msra.mxu0 0
        %498 = vmatprep.subr.bf16.mxu0 0
        %499 = vmatpush1.bf16.msra.mxu0 0
        %500 = vmatprep.subr.bf16.mxu0 0
        %501 = vmatpush1.bf16.msra.mxu0 0
        %502 = vmatprep.subr.bf16.mxu0 0
        %503 = vmatpush1.bf16.msra.mxu0 0
        %504 = vmatprep.subr.bf16.mxu0 0
        %505 = vmatpush1.bf16.msra.mxu0 0
        %506 = vmatprep.mubr.bf16.mxu0 0
        %507 = vmatmul.mubr.bf16.gmra.mrb[0].mxu0 %v469
        %v508 = vpop.f32.mrb[0].mxu0
        %v509 = vadd.f32 0.0, %v508
        %v510 = vpop.f32.mrb[0].mxu0
        %v511 = vadd.f32 0.0, %v510
        %v512 = vpop.f32.mrb[0].mxu0
        %v513 = vadd.f32 0.0, %v512
        %v514 = vpop.f32.mrb[0].mxu0
        %v515 = vadd.f32 0.0, %v514
        %516 = vmatprep.mubr.bf16.mxu0 0
        %517 = vmatmul.mubr.bf16.gmra.mrb[0].mxu0 %v472
        %v518 = vpop.f32.mrb[0].mxu0
        %v519 = vadd.f32 0.0, %v518
        %v520 = vpop.f32.mrb[0].mxu0
        %v521 = vadd.f32 0.0, %v520
        %v522 = vpop.f32.mrb[0].mxu0
        %v523 = vadd.f32 0.0, %v522
        %v524 = vpop.f32.mrb[0].mxu0
        %v525 = vadd.f32 0.0, %v524
        %526 = vdwg.mxu0
        %v527 = vmul.f32 %v509, %v509
        %v528 = vmul.f32 %v511, %v511
        %v529 = vmul.f32 %v513, %v513
        %v530 = vmul.f32 %v515, %v515
        %v531 = vmul.f32 %v519, %v519
        %v532 = vmul.f32 %v521, %v521
        %v533 = vmul.f32 %v523, %v523
        %v534 = vmul.f32 %v525, %v525
        %v535 = vadd.f32 %v527, %v531
        %v536 = vadd.f32 %v528, %v532
        %v537 = vadd.f32 %v529, %v533
        %v538 = vadd.f32 %v530, %v534
        %v539 = vld [vmem:[#allocation8] sm:$0xff]
        %v540 = vld [vmem:[#allocation8 + $0x8] sm:$0xff]
        %v542 = vsel %vm467, %v539, 0
        %v545 = vsel %vm467, %v540, 0
        %547 = vmatprep.subr.mxu0 %v536
        %548 = vmatpush1.msra.mxu0 %v535
        %549 = vmatprep.subr.mxu0 %v538
        %550 = vmatpush1.msra.mxu0 %v537
        %551 = vmatprep.subr.mxu0 0.0
        %552 = vmatpush1.msra.mxu0 0.0
        %553 = vmatprep.subr.mxu0 0.0
        %554 = vmatpush1.msra.mxu0 0.0
        %555 = vmatprep.subr.mxu0 0.0
        %556 = vmatpush1.msra.mxu0 0.0
        %557 = vmatprep.subr.mxu0 0.0
        %558 = vmatpush1.msra.mxu0 0.0
        %559 = vmatprep.subr.mxu0 0.0
        %560 = vmatpush1.msra.mxu0 0.0
        %561 = vmatprep.subr.mxu0 0.0
        %562 = vmatpush1.msra.mxu0 0.0
        %563 = vmatprep.subr.mxu0 0.0
        %564 = vmatpush1.msra.mxu0 0.0
        %565 = vmatprep.subr.mxu0 0.0
        %566 = vmatpush1.msra.mxu0 0.0
        %567 = vmatprep.subr.mxu0 0.0
        %568 = vmatpush1.msra.mxu0 0.0
        %569 = vmatprep.subr.mxu0 0.0
        %570 = vmatpush1.msra.mxu0 0.0
        %571 = vmatprep.subr.mxu0 0.0
        %572 = vmatpush1.msra.mxu0 0.0
        %573 = vmatprep.subr.mxu0 0.0
        %574 = vmatpush1.msra.mxu0 0.0
        %575 = vmatprep.subr.mxu0 0.0
        %576 = vmatpush1.msra.mxu0 0.0
        %577 = vmatprep.subr.mxu0 0.0
        %578 = vmatpush1.msra.mxu0 0.0
        %579 = vmatprep.subr.mxu0 0.0
        %580 = vmatpush1.msra.mxu0 0.0
        %581 = vmatprep.subr.mxu0 0.0
        %582 = vmatpush1.msra.mxu0 0.0
        %583 = vmatprep.subr.mxu0 0.0
        %584 = vmatpush1.msra.mxu0 0.0
        %585 = vmatprep.subr.mxu0 0.0
        %586 = vmatpush1.msra.mxu0 0.0
        %587 = vmatprep.subr.mxu0 0.0
        %588 = vmatpush1.msra.mxu0 0.0
        %589 = vmatprep.subr.mxu0 0.0
        %590 = vmatpush1.msra.mxu0 0.0
        %591 = vmatprep.subr.mxu0 0.0
        %592 = vmatpush1.msra.mxu0 0.0
        %593 = vmatprep.subr.mxu0 0.0
        %594 = vmatpush1.msra.mxu0 0.0
        %595 = vmatprep.subr.mxu0 0.0
        %596 = vmatpush1.msra.mxu0 0.0
        %597 = vmatprep.subr.mxu0 0.0
        %598 = vmatpush1.msra.mxu0 0.0
        %599 = vmatprep.subr.mxu0 0.0
        %600 = vmatpush1.msra.mxu0 0.0
        %601 = vmatprep.subr.mxu0 0.0
        %602 = vmatpush1.msra.mxu0 0.0
        %603 = vmatprep.subr.mxu0 0.0
        %604 = vmatpush1.msra.mxu0 0.0
        %605 = vmatprep.subr.mxu0 0.0
        %606 = vmatpush1.msra.mxu0 0.0
        %607 = vmatprep.subr.mxu0 0.0
        %608 = vmatpush1.msra.mxu0 0.0
        %609 = vmatprep.subr.mxu0 0.0
        %610 = vmatpush1.msra.mxu0 0.0
        %611 = vmatprep.mubr.f32.mxu0 0.0
        %612 = vmatmul.mubr.f32.gmra.mrb[0].mxu0 %v542
        %v613 = vpop.f32.mrb[0].mxu0
        %v614 = vadd.f32 0.0, %v613
        %v615 = vpop.f32.mrb[0].mxu0
        %v616 = vadd.f32 0.0, %v615
        %617 = vmatprep.mubr.f32.mxu0 0.0
        %618 = vmatmul.mubr.f32.gmra.mrb[0].mxu0 %v545
        %v619 = vpop.f32.mrb[0].mxu0
        %v620 = vadd.f32 0.0, %v619
        %v621 = vpop.f32.mrb[0].mxu0
        %v622 = vadd.f32 0.0, %v621
        %623 = vdwg.mxu0
        %v624 = vmul.f32 %v614, %v614
        %v625 = vmul.f32 %v616, %v616
        %v626 = vmul.f32 %v620, %v620
        %v627 = vmul.f32 %v622, %v622
        %v628 = vadd.f32 %v624, %v625
        %v629 = vadd.f32 %v628, %v626
        %v630 = vadd.f32 %v629, %v627
        %631 = vadd.xlane.f32.xlu0 %v630
        %v632 = vpop.xlane.xlu0 %631
        %v633 = vrot.slane %v632, 4
        %v634 = vadd.f32 %v632, %v633
        %v635 = vrot.slane %v634, 2
        %v636 = vadd.f32 %v634, %v635
        %v637 = vrot.slane %v636, 1
        %v638 = vadd.f32 %v636, %v637
        %s639 = vtos %v638
        %s640 = smul.f32 %s639, 0.00390625
        %v641 = vstv %s640
        %v642 = vrsqrt.pop %v641
        %v643 = vmul.f32 %v641, %v642
        %vm644 = vcmp.eq.f32.partialorder %v641, inf
        %v645 = vsel %vm644, %v641, %v643
        %vm646 = vcmp.eq.f32.partialorder %v641, 0.0
        %v647 = vand.u32 %v641, 2147483648
        %v648 = vsel %vm646, %v647, %v645
        %s649 = vtos %v648
        %s650 = smax.f32 %s649, 1e-05
        %v651 = vstv %s650
        %v652 = vrcp.pop %v651
        %s653 = vtos %v652
        %v654 = vstv %s653
        %v655 = vmul.f32 %v614, %v654
        %v656 = vmul.f32 %v616, %v654
        %v657 = vmul.f32 %v620, %v654
        %v658 = vmul.f32 %v622, %v654
        %v659 = vpack.c.bf16 %v657, %v655
        %v660 = vpack.c.bf16 %v658, %v656
        %v661 = vld [vmem:[#allocation10] sm:$0xf]
        %v662 = vld [vmem:[#allocation10 + $0x4] sm:$0xf]
        %v663 = vld [vmem:[#allocation10 + $0x8] sm:$0xf]
        %v664 = vld [vmem:[#allocation10 + $0xc] sm:$0xf]
        %667 = vrot.lane.b32.xlu0 %v659, 1
        %v668 = vpop.permute.xlu0 %667
        %669 = vrot.lane.b32.xlu0 %v660, 1
        %v670 = vpop.permute.xlu0 %669
        %vm671 = vcmask 7168
        %v672 = vsel %vm671, %v668, %v670
        %vm674 = vcmask 7168
        %v677 = vsel %vm674, 0, %v668
        %679 = vrot.lane.b32.xlu0 %v659, 127
        %v680 = vpop.permute.xlu0 %679
        %681 = vrot.lane.b32.xlu0 %v660, 127
        %v682 = vpop.permute.xlu0 %681
        %v683 = vsel %vm441, %v680, %v682
        %vm685 = vcmask 1039360
        %v687 = vsel %vm685, %v682, 0
        %v693 = vunpack.c.l.b16 %v661
        %v694 = vunpack.c.l.b16 %v662
        %v695 = vunpack.c.l.b16 %v663
        %v696 = vunpack.c.l.b16 %v664
        %v697 = vpack.c.b16 %v694, %v693
        %v698 = vpack.c.b16 %v696, %v695
        %vm699 = vcmask 400384
        %v701 = vsel %vm699, %v697, 0
        %v704 = vsel %vm699, %v698, 0
        %vm706 = vcmask 1040384
        %v707 = vsel 0, 4294967295, 65535
        %v708 = vsel %vm706, %v707, 0
        %v710 = vand.u32 1065369472, %v708
        %712 = vmatprep.subr.bf16.mxu0 %v672
        %713 = vmatpush1.bf16.msra.mxu0 %v677
        %714 = vmatprep.subr.bf16.mxu0 %v660
        %715 = vmatpush1.bf16.msra.mxu0 %v659
        %716 = vmatprep.subr.bf16.mxu0 %v687
        %717 = vmatpush1.bf16.msra.mxu0 %v683
        %718 = vmatprep.subr.bf16.mxu0 %v710
        %719 = vmatpush1.bf16.msra.mxu0 %v710
        %720 = vmatprep.subr.bf16.mxu0 0
        %721 = vmatpush1.bf16.msra.mxu0 0
        %722 = vmatprep.subr.bf16.mxu0 0
        %723 = vmatpush1.bf16.msra.mxu0 0
        %724 = vmatprep.subr.bf16.mxu0 0
        %725 = vmatpush1.bf16.msra.mxu0 0
        %726 = vmatprep.subr.bf16.mxu0 0
        %727 = vmatpush1.bf16.msra.mxu0 0
        %728 = vmatprep.subr.bf16.mxu0 0
        %729 = vmatpush1.bf16.msra.mxu0 0
        %730 = vmatprep.subr.bf16.mxu0 0
        %731 = vmatpush1.bf16.msra.mxu0 0
        %732 = vmatprep.subr.bf16.mxu0 0
        %733 = vmatpush1.bf16.msra.mxu0 0
        %734 = vmatprep.subr.bf16.mxu0 0
        %735 = vmatpush1.bf16.msra.mxu0 0
        %736 = vmatprep.subr.bf16.mxu0 0
        %737 = vmatpush1.bf16.msra.mxu0 0
        %738 = vmatprep.subr.bf16.mxu0 0
        %739 = vmatpush1.bf16.msra.mxu0 0
        %740 = vmatprep.subr.bf16.mxu0 0
        %741 = vmatpush1.bf16.msra.mxu0 0
        %742 = vmatprep.subr.bf16.mxu0 0
        %743 = vmatpush1.bf16.msra.mxu0 0
        %744 = vmatprep.mubr.bf16.mxu0 0
        %745 = vmatmul.mubr.bf16.gmra.mrb[0].mxu0 %v701
        %v746 = vpop.f32.mrb[0].mxu0
        %v747 = vadd.f32 0.0, %v746
        %v748 = vpop.f32.mrb[0].mxu0
        %v749 = vadd.f32 0.0, %v748
        %v750 = vpop.f32.mrb[0].mxu0
        %v751 = vadd.f32 0.0, %v750
        %v752 = vpop.f32.mrb[0].mxu0
        %v753 = vadd.f32 0.0, %v752
        %754 = vmatprep.mubr.bf16.mxu0 0
        %755 = vmatmul.mubr.bf16.gmra.mrb[0].mxu0 %v704
        %v756 = vpop.f32.mrb[0].mxu0
        %v757 = vadd.f32 0.0, %v756
        %v758 = vpop.f32.mrb[0].mxu0
        %v759 = vadd.f32 0.0, %v758
        %v760 = vpop.f32.mrb[0].mxu0
        %v761 = vadd.f32 0.0, %v760
        %v762 = vpop.f32.mrb[0].mxu0
        %v763 = vadd.f32 0.0, %v762
        %764 = vdwg.mxu0
        %v765 = vld [vmem:[#allocation13] sm:$0xff]
        %v766 = vld [vmem:[#allocation13 + $0x8] sm:$0xff]
        %v767 = vld [vmem:[#allocation13 + $0x10] sm:$0xff]
        %v768 = vld [vmem:[#allocation13 + $0x18] sm:$0xff]
        %vm769 = vcmp.ge.f32.partialorder %v747, 0.0
        %vm770 = vcmp.ge.f32.partialorder %v749, 0.0
        %vm771 = vcmp.ge.f32.partialorder %v751, 0.0
        %vm772 = vcmp.ge.f32.partialorder %v753, 0.0
        %vm773 = vcmp.ge.f32.partialorder %v757, 0.0
        %vm774 = vcmp.ge.f32.partialorder %v759, 0.0
        %vm775 = vcmp.ge.f32.partialorder %v761, 0.0
        %vm776 = vcmp.ge.f32.partialorder %v763, 0.0
        %778 = vset.pattern.permute.xlu0 0
        %779 = vperm.xlu0 %778, %v765
        %v780 = vpop.permute.xlu0 %779
        %783 = vset.pattern.permute.xlu0 0
        %784 = vperm.xlu0 %783, %v766
        %v785 = vpop.permute.xlu0 %784
        %788 = vset.pattern.permute.xlu0 0
        %789 = vperm.xlu0 %788, %v767
        %v790 = vpop.permute.xlu0 %789
        %793 = vset.pattern.permute.xlu0 0
        %794 = vperm.xlu0 %793, %v768
        %v795 = vpop.permute.xlu0 %794
        %v797 = vmul.f32 %v780, %v747
        %v798 = vmul.f32 %v780, %v749
        %v799 = vmul.f32 %v785, %v751
        %v800 = vmul.f32 %v785, %v753
        %v801 = vmul.f32 %v790, %v757
        %v802 = vmul.f32 %v790, %v759
        %v803 = vmul.f32 %v795, %v761
        %v804 = vmul.f32 %v795, %v763
        %v805 = vsel %vm769, %v747, %v797
        %v806 = vsel %vm770, %v749, %v798
        %v807 = vsel %vm771, %v751, %v799
        %v808 = vsel %vm772, %v753, %v800
        %v809 = vsel %vm773, %v757, %v801
        %v810 = vsel %vm774, %v759, %v802
        %v811 = vsel %vm775, %v761, %v803
        %v812 = vsel %vm776, %v763, %v804
        %v813 = vpack.c.bf16 %v807, %v805
        %v814 = vpack.c.bf16 %v808, %v806
        %v815 = vpack.c.bf16 %v811, %v809
        %v816 = vpack.c.bf16 %v812, %v810
        %v817 = vld [vmem:[#allocation11] sm:$0xf]
        %v818 = vld [vmem:[#allocation11 + $0x4] sm:$0xf]
        %v819 = vld [vmem:[#allocation11 + $0x8] sm:$0xf]
        %v820 = vld [vmem:[#allocation11 + $0xc] sm:$0xf]
        %825 = vrot.lane.b32.xlu0 %v813, 1
        %v826 = vpop.permute.xlu0 %825
        %827 = vrot.lane.b32.xlu0 %v814, 1
        %v828 = vpop.permute.xlu0 %827
        %829 = vrot.lane.b32.xlu0 %v815, 1
        %v830 = vpop.permute.xlu0 %829
        %831 = vrot.lane.b32.xlu0 %v816, 1
        %v832 = vpop.permute.xlu0 %831
        %v833 = vsel %vm671, %v826, %v828
        %v834 = vsel %vm671, %v830, %v832
        %v838 = vsel %vm674, 0, %v826
        %v841 = vsel %vm674, 0, %v830
        %843 = vrot.lane.b32.xlu0 %v813, 127
        %v844 = vpop.permute.xlu0 %843
        %845 = vrot.lane.b32.xlu0 %v814, 127
        %v846 = vpop.permute.xlu0 %845
        %847 = vrot.lane.b32.xlu0 %v815, 127
        %v848 = vpop.permute.xlu0 %847
        %849 = vrot.lane.b32.xlu0 %v816, 127
        %v850 = vpop.permute.xlu0 %849
        %v851 = vsel %vm441, %v844, %v846
        %v852 = vsel %vm441, %v848, %v850
        %v856 = vsel %vm685, %v846, 0
        %v859 = vsel %vm685, %v850, 0
        %v865 = vunpack.c.l.b16 %v817
        %v866 = vunpack.c.l.b16 %v818
        %v867 = vunpack.c.l.b16 %v819
        %v868 = vunpack.c.l.b16 %v820
        %v869 = vpack.c.b16 %v866, %v865
        %v870 = vpack.c.b16 %v868, %v867
        %vm871 = vcmask 793600
        %v873 = vsel %vm871, %v869, 0
        %v876 = vsel %vm871, %v870, 0
        %878 = vmatprep.subr.bf16.mxu0 %v833
        %879 = vmatpush1.bf16.msra.mxu0 %v838
        %880 = vmatprep.subr.bf16.mxu0 %v834
        %881 = vmatpush1.bf16.msra.mxu0 %v841
        %882 = vmatprep.subr.bf16.mxu0 %v814
        %883 = vmatpush1.bf16.msra.mxu0 %v813
        %884 = vmatprep.subr.bf16.mxu0 %v816
        %885 = vmatpush1.bf16.msra.mxu0 %v815
        %886 = vmatprep.subr.bf16.mxu0 %v856
        %887 = vmatpush1.bf16.msra.mxu0 %v851
        %888 = vmatprep.subr.bf16.mxu0 %v859
        %889 = vmatpush1.bf16.msra.mxu0 %v852
        %890 = vmatprep.subr.bf16.mxu0 %v710
        %891 = vmatpush1.bf16.msra.mxu0 %v710
        %892 = vmatprep.subr.bf16.mxu0 0
        %893 = vmatpush1.bf16.msra.mxu0 0
        %894 = vmatprep.subr.bf16.mxu0 0
        %895 = vmatpush1.bf16.msra.mxu0 0
        %896 = vmatprep.subr.bf16.mxu0 0
        %897 = vmatpush1.bf16.msra.mxu0 0
        %898 = vmatprep.subr.bf16.mxu0 0
        %899 = vmatpush1.bf16.msra.mxu0 0
        %900 = vmatprep.subr.bf16.mxu0 0
        %901 = vmatpush1.bf16.msra.mxu0 0
        %902 = vmatprep.subr.bf16.mxu0 0
        %903 = vmatpush1.bf16.msra.mxu0 0
        %904 = vmatprep.subr.bf16.mxu0 0
        %905 = vmatpush1.bf16.msra.mxu0 0
        %906 = vmatprep.subr.bf16.mxu0 0
        %907 = vmatpush1.bf16.msra.mxu0 0
        %908 = vmatprep.subr.bf16.mxu0 0
        %909 = vmatpush1.bf16.msra.mxu0 0
        %910 = vmatprep.mubr.bf16.mxu0 0
        %911 = vmatmul.mubr.bf16.gmra.mrb[0].mxu0 %v873
        %v912 = vpop.f32.mrb[0].mxu0
        %v913 = vadd.f32 0.0, %v912
        %v914 = vpop.f32.mrb[0].mxu0
        %v915 = vadd.f32 0.0, %v914
        %v916 = vpop.f32.mrb[0].mxu0
        %v917 = vadd.f32 0.0, %v916
        %v918 = vpop.f32.mrb[0].mxu0
        %v919 = vadd.f32 0.0, %v918
        %920 = vmatprep.mubr.bf16.mxu0 0
        %921 = vmatmul.mubr.bf16.gmra.mrb[0].mxu0 %v876
        %v922 = vpop.f32.mrb[0].mxu0
        %v923 = vadd.f32 0.0, %v922
        %v924 = vpop.f32.mrb[0].mxu0
        %v925 = vadd.f32 0.0, %v924
        %v926 = vpop.f32.mrb[0].mxu0
        %v927 = vadd.f32 0.0, %v926
        %v928 = vpop.f32.mrb[0].mxu0
        %v929 = vadd.f32 0.0, %v928
        %930 = vdwg.mxu0
        %v931 = vadd.f32 %v747, %v913
        %v932 = vadd.f32 %v749, %v915
        %v933 = vadd.f32 %v751, %v917
        %v934 = vadd.f32 %v753, %v919
        %v935 = vadd.f32 %v757, %v923
        %v936 = vadd.f32 %v759, %v925
        %v937 = vadd.f32 %v761, %v927
        %v938 = vadd.f32 %v763, %v929
        %s939 = scalar_lea.vmem [#allocation13], 32
        %v940 = vld [vmem:[%s939] sm:$0xff]
        %v941 = vld [vmem:[%s939 + $0x8] sm:$0xff]
        %v942 = vld [vmem:[%s939 + $0x10] sm:$0xff]
        %v943 = vld [vmem:[%s939 + $0x18] sm:$0xff]
        %vm944 = vcmp.ge.f32.partialorder %v931, 0.0
        %vm945 = vcmp.ge.f32.partialorder %v932, 0.0
        %vm946 = vcmp.ge.f32.partialorder %v933, 0.0
        %vm947 = vcmp.ge.f32.partialorder %v934, 0.0
        %vm948 = vcmp.ge.f32.partialorder %v935, 0.0
        %vm949 = vcmp.ge.f32.partialorder %v936, 0.0
        %vm950 = vcmp.ge.f32.partialorder %v937, 0.0
        %vm951 = vcmp.ge.f32.partialorder %v938, 0.0
        %953 = vset.pattern.permute.xlu0 0
        %954 = vperm.xlu0 %953, %v940
        %v955 = vpop.permute.xlu0 %954
        %958 = vset.pattern.permute.xlu0 0
        %959 = vperm.xlu0 %958, %v941
        %v960 = vpop.permute.xlu0 %959
        %963 = vset.pattern.permute.xlu0 0
        %964 = vperm.xlu0 %963, %v942
        %v965 = vpop.permute.xlu0 %964
        %968 = vset.pattern.permute.xlu0 0
        %969 = vperm.xlu0 %968, %v943
        %v970 = vpop.permute.xlu0 %969
        %v972 = vmul.f32 %v955, %v931
        %v973 = vmul.f32 %v955, %v932
        %v974 = vmul.f32 %v960, %v933
        %v975 = vmul.f32 %v960, %v934
        %v976 = vmul.f32 %v965, %v935
        %v977 = vmul.f32 %v965, %v936
        %v978 = vmul.f32 %v970, %v937
        %v979 = vmul.f32 %v970, %v938
        %v980 = vsel %vm944, %v931, %v972
        %v981 = vsel %vm945, %v932, %v973
        %v982 = vsel %vm946, %v933, %v974
        %v983 = vsel %vm947, %v934, %v975
        %v984 = vsel %vm948, %v935, %v976
        %v985 = vsel %vm949, %v936, %v977
        %v986 = vsel %vm950, %v937, %v978
        %v987 = vsel %vm951, %v938, %v979
        %v988 = vpack.c.bf16 %v982, %v980
        %v989 = vpack.c.bf16 %v983, %v981
        %v990 = vpack.c.bf16 %v986, %v984
        %v991 = vpack.c.bf16 %v987, %v985
        %s992 = scalar_lea.vmem [#allocation11], 16
        %v993 = vld [vmem:[%s992] sm:$0xf]
        %v994 = vld [vmem:[%s992 + $0x4] sm:$0xf]
        %v995 = vld [vmem:[%s992 + $0x8] sm:$0xf]
        %v996 = vld [vmem:[%s992 + $0xc] sm:$0xf]
        %1001 = vrot.lane.b32.xlu0 %v988, 2
        %v1002 = vpop.permute.xlu0 %1001
        %1003 = vrot.lane.b32.xlu0 %v989, 2
        %v1004 = vpop.permute.xlu0 %1003
        %1005 = vrot.lane.b32.xlu0 %v990, 2
        %v1006 = vpop.permute.xlu0 %1005
        %1007 = vrot.lane.b32.xlu0 %v991, 2
        %v1008 = vpop.permute.xlu0 %1007
        %vm1009 = vcmask 15360
        %v1010 = vsel %vm1009, %v1002, %v1004
        %v1011 = vsel %vm1009, %v1006, %v1008
        %vm1014 = vcmask 15360
        %v1016 = vsel %vm1014, 0, %v1002
        %v1019 = vsel %vm1014, 0, %v1006
        %1021 = vrot.lane.b32.xlu0 %v988, 126
        %v1022 = vpop.permute.xlu0 %1021
        %1023 = vrot.lane.b32.xlu0 %v989, 126
        %v1024 = vpop.permute.xlu0 %1023
        %1025 = vrot.lane.b32.xlu0 %v990, 126
        %v1026 = vpop.permute.xlu0 %1025
        %1027 = vrot.lane.b32.xlu0 %v991, 126
        %v1028 = vpop.permute.xlu0 %1027
        %vm1029 = vcmask 1031168
        %v1030 = vsel %vm1029, %v1022, %v1024
        %v1031 = vsel %vm1029, %v1026, %v1028
        %vm1034 = vcmask 1031168
        %v1036 = vsel %vm1034, %v1024, 0
        %v1039 = vsel %vm1034, %v1028, 0
        %v1045 = vunpack.c.l.b16 %v993
        %v1046 = vunpack.c.l.b16 %v994
        %v1047 = vunpack.c.l.b16 %v995
        %v1048 = vunpack.c.l.b16 %v996
        %v1049 = vpack.c.b16 %v1046, %v1045
        %v1050 = vpack.c.b16 %v1048, %v1047
        %v1052 = vsel %vm871, %v1049, 0
        %v1055 = vsel %vm871, %v1050, 0
        %1057 = vmatprep.subr.bf16.mxu0 %v1010
        %1058 = vmatpush1.bf16.msra.mxu0 %v1016
        %1059 = vmatprep.subr.bf16.mxu0 %v1011
        %1060 = vmatpush1.bf16.msra.mxu0 %v1019
        %1061 = vmatprep.subr.bf16.mxu0 %v989
        %1062 = vmatpush1.bf16.msra.mxu0 %v988
        %1063 = vmatprep.subr.bf16.mxu0 %v991
        %1064 = vmatpush1.bf16.msra.mxu0 %v990
        %1065 = vmatprep.subr.bf16.mxu0 %v1036
        %1066 = vmatpush1.bf16.msra.mxu0 %v1030
        %1067 = vmatprep.subr.bf16.mxu0 %v1039
        %1068 = vmatpush1.bf16.msra.mxu0 %v1031
        %1069 = vmatprep.subr.bf16.mxu0 %v710
        %1070 = vmatpush1.bf16.msra.mxu0 %v710
        %1071 = vmatprep.subr.bf16.mxu0 0
        %1072 = vmatpush1.bf16.msra.mxu0 0
        %1073 = vmatprep.subr.bf16.mxu0 0
        %1074 = vmatpush1.bf16.msra.mxu0 0
        %1075 = vmatprep.subr.bf16.mxu0 0
        %1076 = vmatpush1.bf16.msra.mxu0 0
        %1077 = vmatprep.subr.bf16.mxu0 0
        %1078 = vmatpush1.bf16.msra.mxu0 0
        %1079 = vmatprep.subr.bf16.mxu0 0
        %1080 = vmatpush1.bf16.msra.mxu0 0
        %1081 = vmatprep.subr.bf16.mxu0 0
        %1082 = vmatpush1.bf16.msra.mxu0 0
        %1083 = vmatprep.subr.bf16.mxu0 0
        %1084 = vmatpush1.bf16.msra.mxu0 0
        %1085 = vmatprep.subr.bf16.mxu0 0
        %1086 = vmatpush1.bf16.msra.mxu0 0
        %1087 = vmatprep.subr.bf16.mxu0 0
        %1088 = vmatpush1.bf16.msra.mxu0 0
        %1089 = vmatprep.mubr.bf16.mxu0 0
        %1090 = vmatmul.mubr.bf16.gmra.mrb[0].mxu0 %v1052
        %v1091 = vpop.f32.mrb[0].mxu0
        %v1092 = vadd.f32 0.0, %v1091
        %v1093 = vpop.f32.mrb[0].mxu0
        %v1094 = vadd.f32 0.0, %v1093
        %v1095 = vpop.f32.mrb[0].mxu0
        %v1096 = vadd.f32 0.0, %v1095
        %v1097 = vpop.f32.mrb[0].mxu0
        %v1098 = vadd.f32 0.0, %v1097
        %1099 = vmatprep.mubr.bf16.mxu0 0
        %1100 = vmatmul.mubr.bf16.gmra.mrb[0].mxu0 %v1055
        %v1101 = vpop.f32.mrb[0].mxu0
        %v1102 = vadd.f32 0.0, %v1101
        %v1103 = vpop.f32.mrb[0].mxu0
        %v1104 = vadd.f32 0.0, %v1103
        %v1105 = vpop.f32.mrb[0].mxu0
        %v1106 = vadd.f32 0.0, %v1105
        %v1107 = vpop.f32.mrb[0].mxu0
        %v1108 = vadd.f32 0.0, %v1107
        %1109 = vdwg.mxu0
        %v1110 = vadd.f32 %v931, %v1092
        %v1111 = vadd.f32 %v932, %v1094
        %v1112 = vadd.f32 %v933, %v1096
        %v1113 = vadd.f32 %v934, %v1098
        %v1114 = vadd.f32 %v935, %v1102
        %v1115 = vadd.f32 %v936, %v1104
        %v1116 = vadd.f32 %v937, %v1106
        %v1117 = vadd.f32 %v938, %v1108
        %s1118 = scalar_lea.vmem [#allocation13], 64
        %v1119 = vld [vmem:[%s1118] sm:$0xff]
        %v1120 = vld [vmem:[%s1118 + $0x8] sm:$0xff]
        %v1121 = vld [vmem:[%s1118 + $0x10] sm:$0xff]
        %v1122 = vld [vmem:[%s1118 + $0x18] sm:$0xff]
        %vm1123 = vcmp.ge.f32.partialorder %v1110, 0.0
        %vm1124 = vcmp.ge.f32.partialorder %v1111, 0.0
        %vm1125 = vcmp.ge.f32.partialorder %v1112, 0.0
        %vm1126 = vcmp.ge.f32.partialorder %v1113, 0.0
        %vm1127 = vcmp.ge.f32.partialorder %v1114, 0.0
        %vm1128 = vcmp.ge.f32.partialorder %v1115, 0.0
        %vm1129 = vcmp.ge.f32.partialorder %v1116, 0.0
        %vm1130 = vcmp.ge.f32.partialorder %v1117, 0.0
        %1132 = vset.pattern.permute.xlu0 0
        %1133 = vperm.xlu0 %1132, %v1119
        %v1134 = vpop.permute.xlu0 %1133
        %1137 = vset.pattern.permute.xlu0 0
        %1138 = vperm.xlu0 %1137, %v1120
        %v1139 = vpop.permute.xlu0 %1138
        %1142 = vset.pattern.permute.xlu0 0
        %1143 = vperm.xlu0 %1142, %v1121
        %v1144 = vpop.permute.xlu0 %1143
        %1147 = vset.pattern.permute.xlu0 0
        %1148 = vperm.xlu0 %1147, %v1122
        %v1149 = vpop.permute.xlu0 %1148
        %v1151 = vmul.f32 %v1134, %v1110
        %v1152 = vmul.f32 %v1134, %v1111
        %v1153 = vmul.f32 %v1139, %v1112
        %v1154 = vmul.f32 %v1139, %v1113
        %v1155 = vmul.f32 %v1144, %v1114
        %v1156 = vmul.f32 %v1144, %v1115
        %v1157 = vmul.f32 %v1149, %v1116
        %v1158 = vmul.f32 %v1149, %v1117
        %v1159 = vsel %vm1123, %v1110, %v1151
        %v1160 = vsel %vm1124, %v1111, %v1152
        %v1161 = vsel %vm1125, %v1112, %v1153
        %v1162 = vsel %vm1126, %v1113, %v1154
        %v1163 = vsel %vm1127, %v1114, %v1155
        %v1164 = vsel %vm1128, %v1115, %v1156
        %v1165 = vsel %vm1129, %v1116, %v1157
        %v1166 = vsel %vm1130, %v1117, %v1158
        %v1167 = vpack.c.bf16 %v1161, %v1159
        %v1168 = vpack.c.bf16 %v1162, %v1160
        %v1169 = vpack.c.bf16 %v1165, %v1163
        %v1170 = vpack.c.bf16 %v1166, %v1164
        %s1171 = scalar_lea.vmem [#allocation11], 32
        %v1172 = vld [vmem:[%s1171] sm:$0xf]
        %v1173 = vld [vmem:[%s1171 + $0x4] sm:$0xf]
        %v1174 = vld [vmem:[%s1171 + $0x8] sm:$0xf]
        %v1175 = vld [vmem:[%s1171 + $0xc] sm:$0xf]
        %1180 = vrot.lane.b32.xlu0 %v1167, 4
        %v1181 = vpop.permute.xlu0 %1180
        %1182 = vrot.lane.b32.xlu0 %v1168, 4
        %v1183 = vpop.permute.xlu0 %1182
        %1184 = vrot.lane.b32.xlu0 %v1169, 4
        %v1185 = vpop.permute.xlu0 %1184
        %1186 = vrot.lane.b32.xlu0 %v1170, 4
        %v1187 = vpop.permute.xlu0 %1186
        %vm1188 = vcmask 31744
        %v1189 = vsel %vm1188, %v1181, %v1183
        %v1190 = vsel %vm1188, %v1185, %v1187
        %vm1193 = vcmask 31744
        %v1195 = vsel %vm1193, 0, %v1181
        %v1198 = vsel %vm1193, 0, %v1185
        %1200 = vrot.lane.b32.xlu0 %v1167, 124
        %v1201 = vpop.permute.xlu0 %1200
        %1202 = vrot.lane.b32.xlu0 %v1168, 124
        %v1203 = vpop.permute.xlu0 %1202
        %1204 = vrot.lane.b32.xlu0 %v1169, 124
        %v1205 = vpop.permute.xlu0 %1204
        %1206 = vrot.lane.b32.xlu0 %v1170, 124
        %v1207 = vpop.permute.xlu0 %1206
        %vm1208 = vcmask 1014784
        %v1209 = vsel %vm1208, %v1201, %v1203
        %v1210 = vsel %vm1208, %v1205, %v1207
        %vm1213 = vcmask 1014784
        %v1215 = vsel %vm1213, %v1203, 0
        %v1218 = vsel %vm1213, %v1207, 0
        %v1224 = vunpack.c.l.b16 %v1172
        %v1225 = vunpack.c.l.b16 %v1173
        %v1226 = vunpack.c.l.b16 %v1174
        %v1227 = vunpack.c.l.b16 %v1175
        %v1228 = vpack.c.b16 %v1225, %v1224
        %v1229 = vpack.c.b16 %v1227, %v1226
        %v1231 = vsel %vm871, %v1228, 0
        %v1234 = vsel %vm871, %v1229, 0
        %1236 = vmatprep.subr.bf16.mxu0 %v1189
        %1237 = vmatpush1.bf16.msra.mxu0 %v1195
        %1238 = vmatprep.subr.bf16.mxu0 %v1190
        %1239 = vmatpush1.bf16.msra.mxu0 %v1198
        %1240 = vmatprep.subr.bf16.mxu0 %v1168
        %1241 = vmatpush1.bf16.msra.mxu0 %v1167
        %1242 = vmatprep.subr.bf16.mxu0 %v1170
        %1243 = vmatpush1.bf16.msra.mxu0 %v1169
        %1244 = vmatprep.subr.bf16.mxu0 %v1215
        %1245 = vmatpush1.bf16.msra.mxu0 %v1209
        %1246 = vmatprep.subr.bf16.mxu0 %v1218
        %1247 = vmatpush1.bf16.msra.mxu0 %v1210
        %1248 = vmatprep.subr.bf16.mxu0 %v710
        %1249 = vmatpush1.bf16.msra.mxu0 %v710
        %1250 = vmatprep.subr.bf16.mxu0 0
        %1251 = vmatpush1.bf16.msra.mxu0 0
        %1252 = vmatprep.subr.bf16.mxu0 0
        %1253 = vmatpush1.bf16.msra.mxu0 0
        %1254 = vmatprep.subr.bf16.mxu0 0
        %1255 = vmatpush1.bf16.msra.mxu0 0
        %1256 = vmatprep.subr.bf16.mxu0 0
        %1257 = vmatpush1.bf16.msra.mxu0 0
        %1258 = vmatprep.subr.bf16.mxu0 0
        %1259 = vmatpush1.bf16.msra.mxu0 0
        %1260 = vmatprep.subr.bf16.mxu0 0
        %1261 = vmatpush1.bf16.msra.mxu0 0
        %1262 = vmatprep.subr.bf16.mxu0 0
        %1263 = vmatpush1.bf16.msra.mxu0 0
        %1264 = vmatprep.subr.bf16.mxu0 0
        %1265 = vmatpush1.bf16.msra.mxu0 0
        %1266 = vmatprep.subr.bf16.mxu0 0
        %1267 = vmatpush1.bf16.msra.mxu0 0
        %1268 = vmatprep.mubr.bf16.mxu0 0
        %1269 = vmatmul.mubr.bf16.gmra.mrb[0].mxu0 %v1231
        %v1270 = vpop.f32.mrb[0].mxu0
        %v1271 = vadd.f32 0.0, %v1270
        %v1272 = vpop.f32.mrb[0].mxu0
        %v1273 = vadd.f32 0.0, %v1272
        %v1274 = vpop.f32.mrb[0].mxu0
        %v1275 = vadd.f32 0.0, %v1274
        %v1276 = vpop.f32.mrb[0].mxu0
        %v1277 = vadd.f32 0.0, %v1276
        %1278 = vmatprep.mubr.bf16.mxu0 0
        %1279 = vmatmul.mubr.bf16.gmra.mrb[0].mxu0 %v1234
        %v1280 = vpop.f32.mrb[0].mxu0
        %v1281 = vadd.f32 0.0, %v1280
        %v1282 = vpop.f32.mrb[0].mxu0
        %v1283 = vadd.f32 0.0, %v1282
        %v1284 = vpop.f32.mrb[0].mxu0
        %v1285 = vadd.f32 0.0, %v1284
        %v1286 = vpop.f32.mrb[0].mxu0
        %v1287 = vadd.f32 0.0, %v1286
        %1288 = vdwg.mxu0
        %v1289 = vadd.f32 %v1110, %v1271
        %v1290 = vadd.f32 %v1111, %v1273
        %v1291 = vadd.f32 %v1112, %v1275
        %v1292 = vadd.f32 %v1113, %v1277
        %v1293 = vadd.f32 %v1114, %v1281
        %v1294 = vadd.f32 %v1115, %v1283
        %v1295 = vadd.f32 %v1116, %v1285
        %v1296 = vadd.f32 %v1117, %v1287
        %1297 = vst [vmem:[%s414] sm:$0xff] %v1289
        %1298 = vst [vmem:[%s414 + $0x8] sm:$0xff] %v1290
        %1299 = vst [vmem:[%s414 + $0x10] sm:$0xff] %v1291
        %1300 = vst [vmem:[%s414 + $0x18] sm:$0xff] %v1292
        %1301 = vst [vmem:[%s414 + $0x20] sm:$0xff] %v1293
        %1302 = vst [vmem:[%s414 + $0x28] sm:$0xff] %v1294
        %1303 = vst [vmem:[%s414 + $0x30] sm:$0xff] %v1295
        %1304 = vst [vmem:[%s414 + $0x38] sm:$0xff] %v1296
        %s1305 = sand.u32 %s208, 1
        %s1306 = scalar_lea.sflag [#allocation4], %s1305
        %s1307 = sand.u32 %s208, 1
        %s1308 = smul.addr %s1307, 64
        %s1309 = scalar_lea.vmem [#allocation14], %s1308
        // Predicated region
        $region77: #{_forward.1} parent=47 // pred_check
          %p1310 = pneg %p218
        $region78: #{_forward.1} parent=47 // pred_check_branch
          %1312 = sbr.rel (%p1310) target = $region80
        $region79: #{_forward.1} parent=47 // pred_region
          %s1313 = smul.u32 2, %s34
          %s1315 = ssub.s32 1024, 1024
          %1316 = vsyncadd %s1306, %s1315
          %s1317 = smul.addr %s33, 8
          %s1318 = sadd.s32 %s1313, %s1317
          %s1319 = smul.addr %s1318, 128
          %s1320 = scalar_lea.hbm %s7, %s1319
          %s1321 = sshll.u32 %s1309, 4
          %s1322 = int_to_ptr.vmem [resolvable:$true] %s1321
          %1327 = dma.vmem_to_hbm [thread:$0]  %s1322, 1024, %s1320, %s1306, 256, 256, 16
        $region80: #{_forward.1} parent=47 // pred_fallthru
          _
      $region48: #{_forward.1} parent=5 // pred_fallthru
        _
      %p1328 = scmp.le.s32.totalorder 2, %s24
      // Predicated region
      $region81: #{_forward.1} parent=5 // pred_check
        %p1329 = pneg %p1328
      $region82: #{_forward.1} parent=5 // pred_check_branch
        %1331 = sbr.rel (%p1329) target = $region84
      $region83: #{_forward.1} parent=5 // pred_region
        %s1332 = ssub.s32 %s24, 2
        // Predicated region
        $region85: #{_forward.1} parent=83 // pred_check
          %p1333 = pneg %p224
        $region86: #{_forward.1} parent=83 // pred_check_branch
          %1335 = sbr.rel (%p1333) target = $region88
        $region87: #{_forward.1} parent=83 // pred_region
          %s1336 = sand.u32 %s209, 1
          %s1337 = scalar_lea.sflag [#allocation4], %s1336
          %s1338 = sand.u32 %s209, 1
          %s1339 = smul.addr %s1338, 64
          %s1340 = scalar_lea.vmem [#allocation14], %s1339
          %1341 = dma.done %s1337, 1024
        $region88: #{_forward.1} parent=83 // pred_fallthru
          _
      $region84: #{_forward.1} parent=5 // pred_fallthru
        _
    $region6: #{_forward.1} parent=1 // loop_footer
      %s28 = sadd.s32 1, %s24
    $region7: #{_forward.1} parent=1 // loop_footer_branch
      %23 = sbr.rel target = $region3
    $region8: #{_forward.1} parent=1 // loop_exit
      _
    %1342 = vsyncpa [#allocation3], 1
    %s1343 = scalar_lea.sflag [#allocation3], 1
    %1344 = vsyncpa %s1343, 1
    %1345 = vsyncpa [#allocation6], 1
    %s1346 = scalar_lea.sflag [#allocation6], 1
    %1347 = vsyncpa %s1346, 1
    %1348 = vsyncpa [#allocation9], 1
    %1349 = vsyncpa [#allocation12], 1
    %1350 = vsyncpa [#allocation4], 1
    %s1351 = scalar_lea.sflag [#allocation4], 1
    %1352 = vsyncpa %s1351, 1

</llo_original>
